<compile_context>
chip_gen: v5e
topology: v5e:2x2
jax: 0.10.0
libtpu: 0.0.40
codegen_flags: <defaults>
</compile_context>

<pallas_src>
import jax
import jax.numpy as jnp
from jax import lax
from jax.experimental import pallas as pl
from jax.experimental.pallas import tpu as pltpu

_MIB = 1024 * 1024


# ------------------------------ generation config ------------------------------

def _tpu_config():
    """Generation-aware tiling / VMEM configuration."""
    vmem_cap = 64 * _MIB  # conservative (v7x-sized) default if the query fails
    try:
        info = pltpu.get_tpu_info()
        vmem_cap = int(getattr(info, "vmem_capacity_bytes", vmem_cap))
    except Exception:
        pass
    big_vmem = vmem_cap >= 128 * _MIB  # v5e / v6e
    return {
        # 96 MiB on the 128-MiB parts, ~48 MiB on v7x (64 MiB physical).
        "vmem_limit": int(min(96 * _MIB, (vmem_cap * 3) // 4)),
        "tm_cap": 1024,
        "tn_cap": 1024,
        "tk_cap": 2048 if big_vmem else 1024,
        "small_n_max": 1024 if big_vmem else 512,
    }


def _round_up(x, m):
    return ((x + m - 1) // m) * m


# ----------------------------- small path (row slabs) ---------------------------

def _small_kernel(a_ref, b_ref, out_ref):
    c = jnp.dot(a_ref[...], b_ref[...],
                preferred_element_type=jnp.float32,
                precision=lax.Precision.HIGHEST)
    ci = c.astype(jnp.int32)                   # trunc toward zero (matches torch)
    col = jnp.sum(ci, axis=0, keepdims=True)   # sublane reduce first (VPU)
    s = jnp.sum(col)                           # single cross-lane reduce (XLU)
    out_ref[...] = jnp.full(out_ref.shape, s, dtype=jnp.int32)


def _pick_slab(m):
    """Row-slab size: divisor of m, multiple of 8, <=256; prefer >=2 slabs for overlap."""
    def best_div(cap):
        best, t = 0, 8
        while t <= cap:
            if m % t == 0:
                best = t
            t += 8
        return best
    s = best_div(min(256, m // 2))
    if s == 0:
        s = best_div(min(256, m))
    return s if s else m


def _fused_small(x2, cfg):
    m = x2.shape[0]
    slab = _pick_slab(m)
    grid = m // slab
    partials = pl.pallas_call(
        _small_kernel,
        out_shape=jax.ShapeDtypeStruct((grid, 8, 128), jnp.int32),
        grid_spec=pltpu.PrefetchScalarGridSpec(
            num_scalar_prefetch=0,
            grid=(grid,),
            in_specs=[
                pl.BlockSpec((slab, m), lambda i: (i, 0)),   # streamed row-slabs of A
                pl.BlockSpec((m, m), lambda i: (0, 0)),      # full x2 resident as B
            ],
            out_specs=pl.BlockSpec((1, 8, 128), lambda i: (i, 0, 0)),
        ),
        compiler_params=pltpu.CompilerParams(
            dimension_semantics=("parallel",),
            vmem_limit_bytes=cfg["vmem_limit"]),
        cost_estimate=pl.CostEstimate(
            flops=2 * m * m * m, transcendentals=0,
            bytes_accessed=4 * 2 * m * m + 4 * grid * 8 * 128),
    )(x2, x2)
    return jnp.sum(partials[:, 0, 0])


# ------------------------------- tiled path (large N) ---------------------------

def _pick_tile(dim, cap, granule=256):
    """Largest multiple of `granule` dividing `dim` and <= cap (MXU-friendly on v6e/v7x)."""
    best, t = 0, granule
    lim = min(cap, dim)
    while t <= lim:
        if dim % t == 0:
            best = t
        t += granule
    return best if best else dim


def _tiled_kernel(a_ref, b_ref, out_ref, acc_ref):
    k = pl.program_id(2)

    @pl.when(k == 0)
    def _():
        acc_ref[...] = jnp.zeros_like(acc_ref)

    acc_ref[...] += jnp.dot(a_ref[...], b_ref[...],
                            preferred_element_type=jnp.float32,
                            precision=lax.Precision.HIGHEST)

    # Last K step: cast to int32 in row strips (no full (tm,tn) int32 temp), reduce
    # sublanes first, then one cross-lane reduce; write per-(i,j) partial lane-dense.
    @pl.when(k == pl.num_programs(2) - 1)
    def _():
        tm, tn = acc_ref.shape
        strip = 256 if tm % 256 == 0 else tm
        n_strips = tm // strip

        def body(si, carry):
            r = pl.multiple_of(si * strip, strip)
            ci = acc_ref[pl.ds(r, strip), :].astype(jnp.int32)
            return carry + jnp.sum(ci, axis=0, keepdims=True)   # sublane (VPU) reduce

        col = lax.fori_loop(0, n_strips, body,
                            jnp.zeros((1, tn), jnp.int32), unroll=True)
        s = jnp.sum(col)                                         # one cross-lane reduce
        out_ref[...] = jnp.full(out_ref.shape, s, dtype=jnp.int32)


def _fused_tiled(x2, cfg, tile_caps=None):
    m, k = x2.shape
    assert m == k
    tm_cap, tn_cap, tk_cap = tile_caps or (cfg["tm_cap"], cfg["tn_cap"], cfg["tk_cap"])

    # Zero-pad to a multiple of 256: padded products are 0 and int32(0.0) == 0, so the
    # final reduced sum is unchanged.
    mp = _round_up(m, 256)
    if mp != m:
        x2 = jnp.pad(x2, ((0, mp - m), (0, mp - m)))

    tm = _pick_tile(mp, tm_cap)
    tn = _pick_tile(mp, tn_cap)
    tk = _pick_tile(mp, tk_cap)
    gi, gj, gk = mp // tm, mp // tn, mp // tk

    partials = pl.pallas_call(
        _tiled_kernel,
        out_shape=jax.ShapeDtypeStruct((gi, gj, 8, 128), jnp.int32),
        grid_spec=pltpu.PrefetchScalarGridSpec(
            num_scalar_prefetch=0,
            grid=(gi, gj, gk),
            in_specs=[
                pl.BlockSpec((tm, tk), lambda i, j, kk: (i, kk)),
                pl.BlockSpec((tk, tn), lambda i, j, kk: (kk, j)),
            ],
            out_specs=pl.BlockSpec((1, 1, 8, 128), lambda i, j, kk: (i, j, 0, 0)),
            scratch_shapes=[pltpu.VMEM((tm, tn), jnp.float32)],
        ),
        compiler_params=pltpu.CompilerParams(
            dimension_semantics=("parallel", "parallel", "arbitrary"),
            vmem_limit_bytes=cfg["vmem_limit"]),
        cost_estimate=pl.CostEstimate(
            flops=2 * mp * mp * mp, transcendentals=0,
            bytes_accessed=4 * (mp * mp * gj + mp * mp * gi) + 4 * gi * gj * 8 * 128),
    )(x2, x2)
    # Element [i, j, 0, 0] holds the int32 partial sum of output tile (i, j).
    return jnp.sum(partials[:, :, 0, 0])


# ---------------------------------- wrapper --------------------------------------

def model_forward(x1, x2, *, force_tiled=False, tile_caps=None):
    # torch.addmm(x1, x2, x2, beta=0, alpha=1): beta=0 => x1 contributes nothing.
    del x1
    m, k = x2.shape
    assert m == k, "x2 @ x2 requires a square matrix"
    cfg = _tpu_config()
    if (not force_tiled) and m <= cfg["small_n_max"]:
        return _fused_small(x2, cfg)
    return _fused_tiled(x2, cfg, tile_caps=tile_caps)


if __name__ == "__main__":
    key = jax.random.PRNGKey(0)
    k1, k2, k3 = jax.random.split(key, 3)

    # x2 @ x2 requires a square x2 (the spec's (2048,1024) x2 makes the torch forward
    # itself fail); beta=0 makes x1 irrelevant, its 9-column shape kept for API parity.
    # Inputs are rounded to small integers so kernel and reference are bit-exact.
    n = 256
    x1 = jax.random.normal(k1, (n, 9), dtype=jnp.float32)
    x2 = jnp.round(jax.random.normal(k2, (n, n), dtype=jnp.float32) * 3.0)

    d = model_forward(x1, x2)                         # small (row-slab) path
    jax.block_until_ready(d)
    ref = jnp.sum(jnp.dot(x2, x2, precision="highest").astype(jnp.int32))
    assert d.dtype == jnp.int32
    assert int(d) == int(ref), (int(d), int(ref))

    # Tiled path with zero padding and a multi-tile grid (320 -> 512, 256 tiles, 2x2x2),
    # exercising the k accumulator, the strip epilogue and the per-(i,j) partials.
    n2 = 320
    x2b = jnp.round(jax.random.normal(k3, (n2, n2), dtype=jnp.float32) * 3.0)
    d2 = model_forward(None, x2b, force_tiled=True, tile_caps=(256, 256, 256))
    jax.block_until_ready(d2)
    ref2 = jnp.sum(jnp.dot(x2b, x2b, precision="highest").astype(jnp.int32))
    assert d2.dtype == jnp.int32
    assert int(d2) == int(ref2), (int(d2), int(ref2))

    print("KERNEL_OK")
</pallas_src>

<mosaic_0001>
module attributes {stable_mosaic.version = 11 : i64} {
  func.func @_small_kernel(%arg0: i32, %arg1: memref<128x256xf32, #tpu.memory_space<vmem>>, %arg2: memref<256x256xf32, #tpu.memory_space<vmem>>, %arg3: memref<1x8x128xi32, #tpu.memory_space<vmem>>) attributes {dimension_semantics = [#tpu.dimension_semantics<parallel>], iteration_bounds = array<i64: 2>, scalar_prefetch = 0 : i64, scratch_operands = 0 : i64, tpu.core_type = #tpu.core_type<tc>, window_params = [{transform_indices = @transform_0, window_bounds = array<i64: 128, 256>}, {pipeline_mode = #tpu.pipeline_mode<synchronous>, transform_indices = @transform_1, window_bounds = array<i64: 256, 256>}, {transform_indices = @transform_2, window_bounds = array<i64: 1, 8, 128>}]} {
    %c0 = arith.constant 0 : index
    %c0_0 = arith.constant 0 : index
    %0 = vector.load %arg1[%c0, %c0_0] : memref<128x256xf32, #tpu.memory_space<vmem>>, vector<128x256xf32>
    %c0_1 = arith.constant 0 : index
    %c0_2 = arith.constant 0 : index
    %1 = vector.load %arg2[%c0_1, %c0_2] : memref<256x256xf32, #tpu.memory_space<vmem>>, vector<256x256xf32>
    %cst = arith.constant dense<0.000000e+00> : vector<128x256xf32>
    %2 = tpu.matmul %0, %1, %cst {dimension_numbers = #tpu.dot_dimension_numbers<[1], [0], [0], [1], [0, 0, 1, 1], [], []>, precision = #tpu.contract_precision<fp32>} : vector<128x256xf32>, vector<256x256xf32>, vector<128x256xf32> -> vector<128x256xf32>
    %3 = arith.fptosi %2 : vector<128x256xf32> to vector<128x256xi32>
    %cst_3 = arith.constant dense<0> : vector<256xi32>
    %4 = vector.multi_reduction <add>, %3, %cst_3 [0] : vector<128x256xi32> to vector<256xi32>
    %5 = vector.shape_cast %4 : vector<256xi32> to vector<1x256xi32>
    %6 = vector.shape_cast %5 : vector<1x256xi32> to vector<1x1x256xi32>
    %cst_4 = arith.constant dense<0> : vector<1xi32>
    %7 = vector.multi_reduction <add>, %6, %cst_4 [1, 2] : vector<1x1x256xi32> to vector<1xi32>
    %8 = vector.shape_cast %7 : vector<1xi32> to vector<1x1x1xi32>
    %9 = vector.extract %8[0, 0, 0] : i32 from vector<1x1x1xi32>
    %10 = vector.broadcast %9 : i32 to vector<1x8x128xi32>
    %c0_5 = arith.constant 0 : index
    %c0_6 = arith.constant 0 : index
    %c0_7 = arith.constant 0 : index
    %11 = vector.load %arg3[%c0_5, %c0_6, %c0_7] : memref<1x8x128xi32, #tpu.memory_space<vmem>>, vector<1x8x128xi32>
    tpu.vector_store %arg3[%c0_5, %c0_6, %c0_7], %10 {strides = array<i32>} : memref<1x8x128xi32, #tpu.memory_space<vmem>>, vector<1x8x128xi32>,
    return
  }
  func.func @transform_0(%arg0: i32) -> (i32, i32) {
    %c0_i32 = arith.constant 0 : i32
    %c0_i32_0 = arith.constant 0 : i32
    return %arg0, %c0_i32 : i32, i32
  }
  func.func @transform_1(%arg0: i32) -> (i32, i32) {
    %c0_i32 = arith.constant 0 : i32
    %c0_i32_0 = arith.constant 0 : i32
    %c0_i32_1 = arith.constant 0 : i32
    return %c0_i32, %c0_i32_0 : i32, i32
  }
  func.func @transform_2(%arg0: i32) -> (i32, i32, i32) {
    %c0_i32 = arith.constant 0 : i32
    %c0_i32_0 = arith.constant 0 : i32
    %c0_i32_1 = arith.constant 0 : i32
    return %arg0, %c0_i32, %c0_i32_0 : i32, i32, i32
  }
}

</mosaic_0001>

<llo_original>
// kernel: tpu_custom_call.1
$region0: #{tpu_custom_call.1}
  #allocation0 [shape = 'u32[]', space=smem, size = 0x4, offset = 0x4, fixed_abs, tag = 'smem constant byte address 0x4 - core index']
  #allocation1 [shape = 'u32[72,128]{1,0:T(1,128)}', space=vmem, size = 0x9000, scoped, tag = 'internal scratch']
  %s0 = inlined_call_operand.hbm [shape: f32[256,256], index: 0, kind: input, shape index: {}]
  %s1 = inlined_call_operand.hbm [shape: f32[256,256], index: 1, kind: input, shape index: {}]
  %s2 = inlined_call_operand.hbm [shape: s32[2,8,128], index: 2, kind: output, shape index: {}]
  %s3 = sld [smem:[#allocation0]]
  $region49: #{tpu_custom_call.1} parent=0
    _
  %s5 = ssub.s32 1, %s3
  %s6 = scalar_select 0, %s5, %s3
  $region1: #{tpu_custom_call.1} parent=0
    #allocation2 [shape = 'u8[262144]{0}', space=vmem, size = 0x40000, scoped, tag = 'input window, operand 0']
    #allocation3 [shape = 's32[2]{0}', space=sflag, size = 0x8, scoped, tag = 'scoped memory for tpu_custom_call.1']
    #allocation4 [shape = 's32[2]{0}', space=sflag, size = 0x8, scoped, tag = 'scoped memory for tpu_custom_call.1']
    #allocation5 [shape = 'u8[262144]{0}', space=vmem, size = 0x40000, scoped, tag = 'input window, operand 1, single buffered']
    #allocation6 [shape = 's32[1]{0}', space=sflag, size = 0x4, scoped, tag = 'scoped memory for tpu_custom_call.1']
    #allocation7 [shape = 'u8[8192]{0}', space=vmem, size = 0x2000, scoped, tag = 'output window, operand 0']
    %7 = vsyncpa [#allocation3], 0
    %s8 = scalar_lea.sflag [#allocation3], 1
    %9 = vsyncpa %s8, 0
    %10 = vsyncpa [#allocation6], 0
    %11 = vsyncpa [#allocation4], 0
    %s12 = scalar_lea.sflag [#allocation4], 1
    %13 = vsyncpa %s12, 0
    loop: start=0, step=1, limit=4
    $region2: #{tpu_custom_call.1} parent=1 // loop_pre_header
      _
    $region3: #{tpu_custom_call.1} parent=1 // loop_header
      %s15 = sphi 0, %s19
      %p16 = scmp.ge.s32.totalorder %s15, 4
      %s25 = sphi 0, %s27
      %s28 = sphi 0, %s25
      %s29 = sphi 0, %s28
      %s45 = sphi 0, %s29
      %s49 = sphi 0, %s49
      %s51 = sphi 0, %s49
      %s52 = sphi 0, %s51
      %s66 = sphi 0, %s52
      %s72 = sphi 0, %s74
      %s75 = sphi 0, %s72
      %s76 = sphi 0, %s75
      %s92 = sphi 0, %s76
    $region4: #{tpu_custom_call.1} parent=1 // loop_header_branch
      %18 = sbr.rel (%p16) target = $region8
    $region5: #{tpu_custom_call.1} parent=1 // loop_body
      %s20 = ssub.s32 %s15, 1
      %s21 = ssub.s32 %s15, 2
      %s22 = sadd.s32 %s15, 1
      %s23 = ssub.s32 %s15, %s22
      %p24 = scmp.eq.s32.totalorder %s23, 0
      %s26 = sadd.s32 %s25, 1
      %s27 = scalar_select %p24, %s25, %s26
      %p30 = pneg %p24
      %p31 = scmp.eq.s32.totalorder %s15, 1
      %p32 = por %p30, %p31
      %p33 = scmp.ne.s32.totalorder %s25, %s28
      %p34 = scmp.eq.s32.totalorder %s15, 0
      %p35 = por %p33, %p34
      %p36 = scmp.ne.s32.totalorder %s25, %s28
      %p37 = scmp.eq.s32.totalorder %s20, 1
      %p38 = por %p36, %p37
      %p39 = scmp.ne.s32.totalorder %s28, %s29
      %p40 = scmp.eq.s32.totalorder %s20, 0
      %p41 = por %p39, %p40
      %p42 = scmp.ne.s32.totalorder %s28, %s29
      %p43 = scmp.eq.s32.totalorder %s21, 1
      %p44 = por %p42, %p43
      %p46 = scmp.ne.s32.totalorder %s29, %s45
      %p47 = scmp.eq.s32.totalorder %s21, 0
      %p48 = por %p46, %p47
      %s50 = sadd.s32 %s49, 1
      %p53 = scmp.eq.s32.totalorder %s15, 1
      %p54 = scmp.ne.s32.totalorder %s49, %s51
      %p55 = scmp.eq.s32.totalorder %s15, 0
      %p56 = por %p54, %p55
      %p57 = scmp.ne.s32.totalorder %s49, %s51
      %p58 = scmp.eq.s32.totalorder %s20, 1
      %p59 = por %p57, %p58
      %p60 = scmp.ne.s32.totalorder %s51, %s52
      %p61 = scmp.eq.s32.totalorder %s20, 0
      %p62 = por %p60, %p61
      %p63 = scmp.ne.s32.totalorder %s51, %s52
      %p64 = scmp.eq.s32.totalorder %s21, 1
      %p65 = por %p63, %p64
      %p67 = scmp.ne.s32.totalorder %s52, %s66
      %p68 = scmp.eq.s32.totalorder %s21, 0
      %p69 = por %p67, %p68
      %s70 = ssub.s32 %s15, %s22
      %p71 = scmp.eq.s32.totalorder %s70, 0
      %s73 = sadd.s32 %s72, 1
      %s74 = scalar_select %p71, %s72, %s73
      %p77 = pneg %p71
      %p78 = scmp.eq.s32.totalorder %s15, 1
      %p79 = por %p77, %p78
      %p80 = scmp.ne.s32.totalorder %s72, %s75
      %p81 = scmp.eq.s32.totalorder %s15, 0
      %p82 = por %p80, %p81
      %p83 = scmp.ne.s32.totalorder %s72, %s75
      %p84 = scmp.eq.s32.totalorder %s20, 1
      %p85 = por %p83, %p84
      %p86 = scmp.ne.s32.totalorder %s75, %s76
      %p87 = scmp.eq.s32.totalorder %s20, 0
      %p88 = por %p86, %p87
      %p89 = scmp.ne.s32.totalorder %s75, %s76
      %p90 = scmp.eq.s32.totalorder %s21, 1
      %p91 = por %p89, %p90
      %p93 = scmp.ne.s32.totalorder %s76, %s92
      %p94 = scmp.eq.s32.totalorder %s21, 0
      %p95 = por %p93, %p94
      %p96 = scmp.le.s32.totalorder 1, %s15
      %p97 = scmp.lt.s32.totalorder %s15, 3
      %p98 = pnand %p96, %p97
      %p99 = pneg %p98
      // Predicated region
      $region9: #{tpu_custom_call.1} parent=5 // pred_check
        _
      $region10: #{tpu_custom_call.1} parent=5 // pred_check_branch
        %101 = sbr.rel (%p98) target = $region12
      $region11: #{tpu_custom_call.1} parent=5 // pred_region
        %s102 = ssub.s32 %s15, 1
        // Predicated region
        $region13: #{tpu_custom_call.1} parent=11 // pred_check
          %p103 = pneg %p62
        $region14: #{tpu_custom_call.1} parent=11 // pred_check_branch
          %105 = sbr.rel (%p103) target = $region16
        $region15: #{tpu_custom_call.1} parent=11 // pred_region
          %107 = vsyncadd [#allocation6], 0
          %s108 = sshll.u32 %s1, 4
          %s109 = int_to_ptr.hbm [resolvable:$true] %s108
          %s110 = sshll.u32 [#allocation5], 4
          %s111 = int_to_ptr.vmem [resolvable:$true] %s110
          %116 = dma.hbm_to_vmem [thread:$0]  %s109, 8192, %s111, [#allocation6], 256, 256, 16
        $region16: #{tpu_custom_call.1} parent=11 // pred_fallthru
          _
      $region12: #{tpu_custom_call.1} parent=5 // pred_fallthru
        _
      %p117 = scmp.lt.s32.totalorder %s15, 2
      // Predicated region
      $region17: #{tpu_custom_call.1} parent=5 // pred_check
        %p118 = pneg %p117
      $region18: #{tpu_custom_call.1} parent=5 // pred_check_branch
        %120 = sbr.rel (%p118) target = $region20
      $region19: #{tpu_custom_call.1} parent=5 // pred_region
        // Predicated region
        $region21: #{tpu_custom_call.1} parent=19 // pred_check
          %p121 = pneg %p35
        $region22: #{tpu_custom_call.1} parent=19 // pred_check_branch
          %123 = sbr.rel (%p121) target = $region24
        $region23: #{tpu_custom_call.1} parent=19 // pred_region
          %s124 = sand.u32 %s25, 1
          %s125 = scalar_lea.sflag [#allocation3], %s124
          %s126 = sand.u32 %s25, 1
          %s127 = smul.addr %s126, 256
          %s128 = scalar_lea.vmem [#allocation2], %s127
          %s129 = smul.u32 16, %s15
          %131 = vsyncadd %s125, 0
          %s132 = smul.addr %s129, 2
          %s133 = smul.addr %s132, 8
          %s134 = scalar_lea.hbm %s0, %s133
          %s135 = sshll.u32 %s134, 4
          %s136 = int_to_ptr.hbm [resolvable:$true] %s135
          %s137 = sshll.u32 %s128, 4
          %s138 = int_to_ptr.vmem [resolvable:$true] %s137
          %143 = dma.hbm_to_vmem [thread:$0]  %s136, 4096, %s138, %s125, 256, 256, 16
        $region24: #{tpu_custom_call.1} parent=19 // pred_fallthru
          _
      $region20: #{tpu_custom_call.1} parent=5 // pred_fallthru
        _
      %p144 = scmp.le.s32.totalorder 1, %s15
      %p145 = scmp.lt.s32.totalorder %s15, 3
      %p146 = pnand %p144, %p145
      %p147 = pneg %p146
      // Predicated region
      $region25: #{tpu_custom_call.1} parent=5 // pred_check
        _
      $region26: #{tpu_custom_call.1} parent=5 // pred_check_branch
        %149 = sbr.rel (%p146) target = $region28
      $region27: #{tpu_custom_call.1} parent=5 // pred_region
        %s150 = ssub.s32 %s15, 1
        %s151 = sand.u32 %s28, 1
        %s152 = scalar_lea.sflag [#allocation3], %s151
        %s153 = sand.u32 %s28, 1
        %s154 = smul.addr %s153, 256
        %s155 = scalar_lea.vmem [#allocation2], %s154
        // Predicated region
        $region29: #{tpu_custom_call.1} parent=27 // pred_check
          %p156 = pneg %p41
        $region30: #{tpu_custom_call.1} parent=27 // pred_check_branch
          %158 = sbr.rel (%p156) target = $region32
        $region31: #{tpu_custom_call.1} parent=27 // pred_region
          %160 = dma.done %s152, 4096
        $region32: #{tpu_custom_call.1} parent=27 // pred_fallthru
          _
        // Predicated region
        $region33: #{tpu_custom_call.1} parent=27 // pred_check
          %p161 = pneg %p62
        $region34: #{tpu_custom_call.1} parent=27 // pred_check_branch
          %163 = sbr.rel (%p161) target = $region36
        $region35: #{tpu_custom_call.1} parent=27 // pred_region
          %165 = dma.done [#allocation6], 8192
        $region36: #{tpu_custom_call.1} parent=27 // pred_fallthru
          _
        %s166 = sand.u32 %s28, 1
        %s167 = scalar_lea.sflag [#allocation3], %s166
        %s168 = sand.u32 %s28, 1
        %s169 = smul.addr %s168, 256
        %s170 = scalar_lea.vmem [#allocation2], %s169
        %p171 = pneg %p41
        %p172 = pneg %p38
        %p173 = pneg %p62
        %p174 = pneg %p59
        %p175 = pneg %p88
        %p176 = pneg %p85
        %s177 = sand.u32 %s75, 1
        %s178 = scalar_lea.sflag [#allocation4], %s177
        %s179 = sand.u32 %s75, 1
        %s180 = smul.addr %s179, 8
        %s181 = scalar_lea.vmem [#allocation7], %s180
        %s182 = smul.u32 16, %s20
        %v183 = vld [vmem:[%s155] sm:$0xff]
        %v184 = vld [vmem:[%s155 + $0x8] sm:$0xff]
        %v185 = vld [vmem:[%s155 + $0x10] sm:$0xff]
        %v186 = vld [vmem:[%s155 + $0x18] sm:$0xff]
        %v187 = vld [vmem:[%s155 + $0x20] sm:$0xff]
        %v188 = vld [vmem:[%s155 + $0x28] sm:$0xff]
        %v189 = vld [vmem:[%s155 + $0x30] sm:$0xff]
        %v190 = vld [vmem:[%s155 + $0x38] sm:$0xff]
        %v191 = vld [vmem:[%s155 + $0x40] sm:$0xff]
        %v192 = vld [vmem:[%s155 + $0x48] sm:$0xff]
        %v193 = vld [vmem:[%s155 + $0x50] sm:$0xff]
        %v194 = vld [vmem:[%s155 + $0x58] sm:$0xff]
        %v195 = vld [vmem:[%s155 + $0x60] sm:$0xff]
        %v196 = vld [vmem:[%s155 + $0x68] sm:$0xff]
        %v197 = vld [vmem:[%s155 + $0x70] sm:$0xff]
        %v198 = vld [vmem:[%s155 + $0x78] sm:$0xff]
        %v199 = vld [vmem:[%s155 + $0x80] sm:$0xff]
        %v200 = vld [vmem:[%s155 + $0x88] sm:$0xff]
        %v201 = vld [vmem:[%s155 + $0x90] sm:$0xff]
        %v202 = vld [vmem:[%s155 + $0x98] sm:$0xff]
        %v203 = vld [vmem:[%s155 + $0xa0] sm:$0xff]
        %v204 = vld [vmem:[%s155 + $0xa8] sm:$0xff]
        %v205 = vld [vmem:[%s155 + $0xb0] sm:$0xff]
        %v206 = vld [vmem:[%s155 + $0xb8] sm:$0xff]
        %v207 = vld [vmem:[%s155 + $0xc0] sm:$0xff]
        %v208 = vld [vmem:[%s155 + $0xc8] sm:$0xff]
        %v209 = vld [vmem:[%s155 + $0xd0] sm:$0xff]
        %v210 = vld [vmem:[%s155 + $0xd8] sm:$0xff]
        %v211 = vld [vmem:[%s155 + $0xe0] sm:$0xff]
        %v212 = vld [vmem:[%s155 + $0xe8] sm:$0xff]
        %v213 = vld [vmem:[%s155 + $0xf0] sm:$0xff]
        %v214 = vld [vmem:[%s155 + $0xf8] sm:$0xff]
        %v215 = vld [vmem:[#allocation5] sm:$0xff]
        %v216 = vld [vmem:[#allocation5 + $0x8] sm:$0xff]
        %v217 = vld [vmem:[#allocation5 + $0x10] sm:$0xff]
        %v218 = vld [vmem:[#allocation5 + $0x18] sm:$0xff]
        %v219 = vld [vmem:[#allocation5 + $0x20] sm:$0xff]
        %v220 = vld [vmem:[#allocation5 + $0x28] sm:$0xff]
        %v221 = vld [vmem:[#allocation5 + $0x30] sm:$0xff]
        %v222 = vld [vmem:[#allocation5 + $0x38] sm:$0xff]
        %v223 = vld [vmem:[#allocation5 + $0x40] sm:$0xff]
        %v224 = vld [vmem:[#allocation5 + $0x48] sm:$0xff]
        %v225 = vld [vmem:[#allocation5 + $0x50] sm:$0xff]
        %v226 = vld [vmem:[#allocation5 + $0x58] sm:$0xff]
        %v227 = vld [vmem:[#allocation5 + $0x60] sm:$0xff]
        %v228 = vld [vmem:[#allocation5 + $0x68] sm:$0xff]
        %v229 = vld [vmem:[#allocation5 + $0x70] sm:$0xff]
        %v230 = vld [vmem:[#allocation5 + $0x78] sm:$0xff]
        %v231 = vld [vmem:[#allocation5 + $0x80] sm:$0xff]
        %v232 = vld [vmem:[#allocation5 + $0x88] sm:$0xff]
        %v233 = vld [vmem:[#allocation5 + $0x90] sm:$0xff]
        %v234 = vld [vmem:[#allocation5 + $0x98] sm:$0xff]
        %v235 = vld [vmem:[#allocation5 + $0xa0] sm:$0xff]
        %v236 = vld [vmem:[#allocation5 + $0xa8] sm:$0xff]
        %v237 = vld [vmem:[#allocation5 + $0xb0] sm:$0xff]
        %v238 = vld [vmem:[#allocation5 + $0xb8] sm:$0xff]
        %v239 = vld [vmem:[#allocation5 + $0xc0] sm:$0xff]
        %v240 = vld [vmem:[#allocation5 + $0xc8] sm:$0xff]
        %v241 = vld [vmem:[#allocation5 + $0xd0] sm:$0xff]
        %v242 = vld [vmem:[#allocation5 + $0xd8] sm:$0xff]
        %v243 = vld [vmem:[#allocation5 + $0xe0] sm:$0xff]
        %v244 = vld [vmem:[#allocation5 + $0xe8] sm:$0xff]
        %v245 = vld [vmem:[#allocation5 + $0xf0] sm:$0xff]
        %v246 = vld [vmem:[#allocation5 + $0xf8] sm:$0xff]
        %v247 = vld [vmem:[#allocation5 + $0x100] sm:$0xff]
        %v248 = vld [vmem:[#allocation5 + $0x108] sm:$0xff]
        %v249 = vld [vmem:[#allocation5 + $0x110] sm:$0xff]
        %v250 = vld [vmem:[#allocation5 + $0x118] sm:$0xff]
        %v251 = vld [vmem:[#allocation5 + $0x120] sm:$0xff]
        %v252 = vld [vmem:[#allocation5 + $0x128] sm:$0xff]
        %v253 = vld [vmem:[#allocation5 + $0x130] sm:$0xff]
        %v254 = vld [vmem:[#allocation5 + $0x138] sm:$0xff]
        %v255 = vld [vmem:[#allocation5 + $0x140] sm:$0xff]
        %v256 = vld [vmem:[#allocation5 + $0x148] sm:$0xff]
        %v257 = vld [vmem:[#allocation5 + $0x150] sm:$0xff]
        %v258 = vld [vmem:[#allocation5 + $0x158] sm:$0xff]
        %v259 = vld [vmem:[#allocation5 + $0x160] sm:$0xff]
        %v260 = vld [vmem:[#allocation5 + $0x168] sm:$0xff]
        %v261 = vld [vmem:[#allocation5 + $0x170] sm:$0xff]
        %v262 = vld [vmem:[#allocation5 + $0x178] sm:$0xff]
        %v263 = vld [vmem:[#allocation5 + $0x180] sm:$0xff]
        %v264 = vld [vmem:[#allocation5 + $0x188] sm:$0xff]
        %v265 = vld [vmem:[#allocation5 + $0x190] sm:$0xff]
        %v266 = vld [vmem:[#allocation5 + $0x198] sm:$0xff]
        %v267 = vld [vmem:[#allocation5 + $0x1a0] sm:$0xff]
        %v268 = vld [vmem:[#allocation5 + $0x1a8] sm:$0xff]
        %v269 = vld [vmem:[#allocation5 + $0x1b0] sm:$0xff]
        %v270 = vld [vmem:[#allocation5 + $0x1b8] sm:$0xff]
        %v271 = vld [vmem:[#allocation5 + $0x1c0] sm:$0xff]
        %v272 = vld [vmem:[#allocation5 + $0x1c8] sm:$0xff]
        %v273 = vld [vmem:[#allocation5 + $0x1d0] sm:$0xff]
        %v274 = vld [vmem:[#allocation5 + $0x1d8] sm:$0xff]
        %v275 = vld [vmem:[#allocation5 + $0x1e0] sm:$0xff]
        %v276 = vld [vmem:[#allocation5 + $0x1e8] sm:$0xff]
        %v277 = vld [vmem:[#allocation5 + $0x1f0] sm:$0xff]
        %v278 = vld [vmem:[#allocation5 + $0x1f8] sm:$0xff]
        %v279 = vand.u32 %v245, 4294901760
        %280 = vmatpush.msra.mxu0 %v279
        %v281 = vand.u32 %v243, 4294901760
        %282 = vmatpush.msra.mxu0 %v281
        %v283 = vand.u32 %v241, 4294901760
        %284 = vmatpush.msra.mxu0 %v283
        %v285 = vand.u32 %v239, 4294901760
        %286 = vmatpush.msra.mxu0 %v285
        %v287 = vand.u32 %v237, 4294901760
        %288 = vmatpush.msra.mxu0 %v287
        %v289 = vand.u32 %v235, 4294901760
        %290 = vmatpush.msra.mxu0 %v289
        %v291 = vand.u32 %v233, 4294901760
        %292 = vmatpush.msra.mxu0 %v291
        %v293 = vand.u32 %v231, 4294901760
        %294 = vmatpush.msra.mxu0 %v293
        %v295 = vand.u32 %v229, 4294901760
        %296 = vmatpush.msra.mxu0 %v295
        %v297 = vand.u32 %v227, 4294901760
        %298 = vmatpush.msra.mxu0 %v297
        %v299 = vand.u32 %v225, 4294901760
        %300 = vmatpush.msra.mxu0 %v299
        %v301 = vand.u32 %v223, 4294901760
        %302 = vmatpush.msra.mxu0 %v301
        %v303 = vand.u32 %v221, 4294901760
        %304 = vmatpush.msra.mxu0 %v303
        %v305 = vand.u32 %v219, 4294901760
        %306 = vmatpush.msra.mxu0 %v305
        %v307 = vand.u32 %v217, 4294901760
        %308 = vmatpush.msra.mxu0 %v307
        %v309 = vand.u32 %v215, 4294901760
        %310 = vmatpush.msra.mxu0 %v309
        %v311 = vand.u32 %v183, 4294901760
        %v312 = vsub.f32 %v183, %v311
        %v313 = vand.u32 %v312, 4294901760
        %v314 = vsub.f32 %v312, %v313
        %v315 = vand.u32 %v314, 4294901760
        %316 = vmatmul.f32.gmra.mxu0 %v315
        %v317 = vpop.f32.mrf.mxu0
        %v318 = vadd.f32 0.0, %v317
        %v319 = vand.u32 %v185, 4294901760
        %v320 = vsub.f32 %v185, %v319
        %v321 = vand.u32 %v320, 4294901760
        %v322 = vsub.f32 %v320, %v321
        %v323 = vand.u32 %v322, 4294901760
        %324 = vmatmul.f32.gmra.mxu0 %v323
        %v325 = vpop.f32.mrf.mxu0
        %v326 = vadd.f32 0.0, %v325
        %v327 = vand.u32 %v187, 4294901760
        %v328 = vsub.f32 %v187, %v327
        %v329 = vand.u32 %v328, 4294901760
        %v330 = vsub.f32 %v328, %v329
        %v331 = vand.u32 %v330, 4294901760
        %332 = vmatmul.f32.gmra.mxu0 %v331
        %v333 = vpop.f32.mrf.mxu0
        %v334 = vadd.f32 0.0, %v333
        %v335 = vand.u32 %v189, 4294901760
        %v336 = vsub.f32 %v189, %v335
        %v337 = vand.u32 %v336, 4294901760
        %v338 = vsub.f32 %v336, %v337
        %v339 = vand.u32 %v338, 4294901760
        %340 = vmatmul.f32.gmra.mxu0 %v339
        %v341 = vpop.f32.mrf.mxu0
        %v342 = vadd.f32 0.0, %v341
        %v343 = vand.u32 %v191, 4294901760
        %v344 = vsub.f32 %v191, %v343
        %v345 = vand.u32 %v344, 4294901760
        %v346 = vsub.f32 %v344, %v345
        %v347 = vand.u32 %v346, 4294901760
        %348 = vmatmul.f32.gmra.mxu0 %v347
        %v349 = vpop.f32.mrf.mxu0
        %v350 = vadd.f32 0.0, %v349
        %v351 = vand.u32 %v193, 4294901760
        %v352 = vsub.f32 %v193, %v351
        %v353 = vand.u32 %v352, 4294901760
        %v354 = vsub.f32 %v352, %v353
        %v355 = vand.u32 %v354, 4294901760
        %356 = vmatmul.f32.gmra.mxu0 %v355
        %v357 = vpop.f32.mrf.mxu0
        %v358 = vadd.f32 0.0, %v357
        %v359 = vand.u32 %v195, 4294901760
        %v360 = vsub.f32 %v195, %v359
        %v361 = vand.u32 %v360, 4294901760
        %v362 = vsub.f32 %v360, %v361
        %v363 = vand.u32 %v362, 4294901760
        %364 = vmatmul.f32.gmra.mxu0 %v363
        %v365 = vpop.f32.mrf.mxu0
        %v366 = vadd.f32 0.0, %v365
        %v367 = vand.u32 %v197, 4294901760
        %v368 = vsub.f32 %v197, %v367
        %v369 = vand.u32 %v368, 4294901760
        %v370 = vsub.f32 %v368, %v369
        %v371 = vand.u32 %v370, 4294901760
        %372 = vmatmul.f32.gmra.mxu0 %v371
        %v373 = vpop.f32.mrf.mxu0
        %v374 = vadd.f32 0.0, %v373
        %v375 = vand.u32 %v199, 4294901760
        %v376 = vsub.f32 %v199, %v375
        %v377 = vand.u32 %v376, 4294901760
        %v378 = vsub.f32 %v376, %v377
        %v379 = vand.u32 %v378, 4294901760
        %380 = vmatmul.f32.gmra.mxu0 %v379
        %v381 = vpop.f32.mrf.mxu0
        %v382 = vadd.f32 0.0, %v381
        %v383 = vand.u32 %v201, 4294901760
        %v384 = vsub.f32 %v201, %v383
        %v385 = vand.u32 %v384, 4294901760
        %v386 = vsub.f32 %v384, %v385
        %v387 = vand.u32 %v386, 4294901760
        %388 = vmatmul.f32.gmra.mxu0 %v387
        %v389 = vpop.f32.mrf.mxu0
        %v390 = vadd.f32 0.0, %v389
        %v391 = vand.u32 %v203, 4294901760
        %v392 = vsub.f32 %v203, %v391
        %v393 = vand.u32 %v392, 4294901760
        %v394 = vsub.f32 %v392, %v393
        %v395 = vand.u32 %v394, 4294901760
        %396 = vmatmul.f32.gmra.mxu0 %v395
        %v397 = vpop.f32.mrf.mxu0
        %v398 = vadd.f32 0.0, %v397
        %v399 = vand.u32 %v205, 4294901760
        %v400 = vsub.f32 %v205, %v399
        %v401 = vand.u32 %v400, 4294901760
        %v402 = vsub.f32 %v400, %v401
        %v403 = vand.u32 %v402, 4294901760
        %404 = vmatmul.f32.gmra.mxu0 %v403
        %v405 = vpop.f32.mrf.mxu0
        %v406 = vadd.f32 0.0, %v405
        %v407 = vand.u32 %v207, 4294901760
        %v408 = vsub.f32 %v207, %v407
        %v409 = vand.u32 %v408, 4294901760
        %v410 = vsub.f32 %v408, %v409
        %v411 = vand.u32 %v410, 4294901760
        %412 = vmatmul.f32.gmra.mxu0 %v411
        %v413 = vpop.f32.mrf.mxu0
        %v414 = vadd.f32 0.0, %v413
        %v415 = vand.u32 %v209, 4294901760
        %v416 = vsub.f32 %v209, %v415
        %v417 = vand.u32 %v416, 4294901760
        %v418 = vsub.f32 %v416, %v417
        %v419 = vand.u32 %v418, 4294901760
        %420 = vmatmul.f32.gmra.mxu0 %v419
        %v421 = vpop.f32.mrf.mxu0
        %v422 = vadd.f32 0.0, %v421
        %v423 = vand.u32 %v211, 4294901760
        %v424 = vsub.f32 %v211, %v423
        %v425 = vand.u32 %v424, 4294901760
        %v426 = vsub.f32 %v424, %v425
        %v427 = vand.u32 %v426, 4294901760
        %428 = vmatmul.f32.gmra.mxu0 %v427
        %v429 = vpop.f32.mrf.mxu0
        %v430 = vadd.f32 0.0, %v429
        %v431 = vand.u32 %v213, 4294901760
        %v432 = vsub.f32 %v213, %v431
        %v433 = vand.u32 %v432, 4294901760
        %v434 = vsub.f32 %v432, %v433
        %v435 = vand.u32 %v434, 4294901760
        %436 = vmatmul.f32.gmra.mxu0 %v435
        %v437 = vpop.f32.mrf.mxu0
        %v438 = vadd.f32 0.0, %v437
        %439 = vdwg.mxu0
        %v440 = vand.u32 %v245, 4294901760
        %v441 = vsub.f32 %v245, %v440
        %v442 = vand.u32 %v441, 4294901760
        %v443 = vsub.f32 %v441, %v442
        %v444 = vand.u32 %v443, 4294901760
        %445 = vmatpush.msra.mxu0 %v444
        %v446 = vand.u32 %v243, 4294901760
        %v447 = vsub.f32 %v243, %v446
        %v448 = vand.u32 %v447, 4294901760
        %v449 = vsub.f32 %v447, %v448
        %v450 = vand.u32 %v449, 4294901760
        %451 = vmatpush.msra.mxu0 %v450
        %v452 = vand.u32 %v241, 4294901760
        %v453 = vsub.f32 %v241, %v452
        %v454 = vand.u32 %v453, 4294901760
        %v455 = vsub.f32 %v453, %v454
        %v456 = vand.u32 %v455, 4294901760
        %457 = vmatpush.msra.mxu0 %v456
        %v458 = vand.u32 %v239, 4294901760
        %v459 = vsub.f32 %v239, %v458
        %v460 = vand.u32 %v459, 4294901760
        %v461 = vsub.f32 %v459, %v460
        %v462 = vand.u32 %v461, 4294901760
        %463 = vmatpush.msra.mxu0 %v462
        %v464 = vand.u32 %v237, 4294901760
        %v465 = vsub.f32 %v237, %v464
        %v466 = vand.u32 %v465, 4294901760
        %v467 = vsub.f32 %v465, %v466
        %v468 = vand.u32 %v467, 4294901760
        %469 = vmatpush.msra.mxu0 %v468
        %v470 = vand.u32 %v235, 4294901760
        %v471 = vsub.f32 %v235, %v470
        %v472 = vand.u32 %v471, 4294901760
        %v473 = vsub.f32 %v471, %v472
        %v474 = vand.u32 %v473, 4294901760
        %475 = vmatpush.msra.mxu0 %v474
        %v476 = vand.u32 %v233, 4294901760
        %v477 = vsub.f32 %v233, %v476
        %v478 = vand.u32 %v477, 4294901760
        %v479 = vsub.f32 %v477, %v478
        %v480 = vand.u32 %v479, 4294901760
        %481 = vmatpush.msra.mxu0 %v480
        %v482 = vand.u32 %v231, 4294901760
        %v483 = vsub.f32 %v231, %v482
        %v484 = vand.u32 %v483, 4294901760
        %v485 = vsub.f32 %v483, %v484
        %v486 = vand.u32 %v485, 4294901760
        %487 = vmatpush.msra.mxu0 %v486
        %v488 = vand.u32 %v229, 4294901760
        %v489 = vsub.f32 %v229, %v488
        %v490 = vand.u32 %v489, 4294901760
        %v491 = vsub.f32 %v489, %v490
        %v492 = vand.u32 %v491, 4294901760
        %493 = vmatpush.msra.mxu0 %v492
        %v494 = vand.u32 %v227, 4294901760
        %v495 = vsub.f32 %v227, %v494
        %v496 = vand.u32 %v495, 4294901760
        %v497 = vsub.f32 %v495, %v496
        %v498 = vand.u32 %v497, 4294901760
        %499 = vmatpush.msra.mxu0 %v498
        %v500 = vand.u32 %v225, 4294901760
        %v501 = vsub.f32 %v225, %v500
        %v502 = vand.u32 %v501, 4294901760
        %v503 = vsub.f32 %v501, %v502
        %v504 = vand.u32 %v503, 4294901760
        %505 = vmatpush.msra.mxu0 %v504
        %v506 = vand.u32 %v223, 4294901760
        %v507 = vsub.f32 %v223, %v506
        %v508 = vand.u32 %v507, 4294901760
        %v509 = vsub.f32 %v507, %v508
        %v510 = vand.u32 %v509, 4294901760
        %511 = vmatpush.msra.mxu0 %v510
        %v512 = vand.u32 %v221, 4294901760
        %v513 = vsub.f32 %v221, %v512
        %v514 = vand.u32 %v513, 4294901760
        %v515 = vsub.f32 %v513, %v514
        %v516 = vand.u32 %v515, 4294901760
        %517 = vmatpush.msra.mxu0 %v516
        %v518 = vand.u32 %v219, 4294901760
        %v519 = vsub.f32 %v219, %v518
        %v520 = vand.u32 %v519, 4294901760
        %v521 = vsub.f32 %v519, %v520
        %v522 = vand.u32 %v521, 4294901760
        %523 = vmatpush.msra.mxu0 %v522
        %v524 = vand.u32 %v217, 4294901760
        %v525 = vsub.f32 %v217, %v524
        %v526 = vand.u32 %v525, 4294901760
        %v527 = vsub.f32 %v525, %v526
        %v528 = vand.u32 %v527, 4294901760
        %529 = vmatpush.msra.mxu0 %v528
        %v530 = vand.u32 %v215, 4294901760
        %v531 = vsub.f32 %v215, %v530
        %v532 = vand.u32 %v531, 4294901760
        %v533 = vsub.f32 %v531, %v532
        %v534 = vand.u32 %v533, 4294901760
        %535 = vmatpush.msra.mxu0 %v534
        %v536 = vand.u32 %v183, 4294901760
        %537 = vmatmul.f32.gmra.mxu0 %v536
        %v538 = vpop.f32.mrf.mxu0
        %v539 = vadd.f32 %v318, %v538
        %v540 = vand.u32 %v185, 4294901760
        %541 = vmatmul.f32.gmra.mxu0 %v540
        %v542 = vpop.f32.mrf.mxu0
        %v543 = vadd.f32 %v326, %v542
        %v544 = vand.u32 %v187, 4294901760
        %545 = vmatmul.f32.gmra.mxu0 %v544
        %v546 = vpop.f32.mrf.mxu0
        %v547 = vadd.f32 %v334, %v546
        %v548 = vand.u32 %v189, 4294901760
        %549 = vmatmul.f32.gmra.mxu0 %v548
        %v550 = vpop.f32.mrf.mxu0
        %v551 = vadd.f32 %v342, %v550
        %v552 = vand.u32 %v191, 4294901760
        %553 = vmatmul.f32.gmra.mxu0 %v552
        %v554 = vpop.f32.mrf.mxu0
        %v555 = vadd.f32 %v350, %v554
        %v556 = vand.u32 %v193, 4294901760
        %557 = vmatmul.f32.gmra.mxu0 %v556
        %v558 = vpop.f32.mrf.mxu0
        %v559 = vadd.f32 %v358, %v558
        %v560 = vand.u32 %v195, 4294901760
        %561 = vmatmul.f32.gmra.mxu0 %v560
        %v562 = vpop.f32.mrf.mxu0
        %v563 = vadd.f32 %v366, %v562
        %v564 = vand.u32 %v197, 4294901760
        %565 = vmatmul.f32.gmra.mxu0 %v564
        %v566 = vpop.f32.mrf.mxu0
        %v567 = vadd.f32 %v374, %v566
        %v568 = vand.u32 %v199, 4294901760
        %569 = vmatmul.f32.gmra.mxu0 %v568
        %v570 = vpop.f32.mrf.mxu0
        %v571 = vadd.f32 %v382, %v570
        %v572 = vand.u32 %v201, 4294901760
        %573 = vmatmul.f32.gmra.mxu0 %v572
        %v574 = vpop.f32.mrf.mxu0
        %v575 = vadd.f32 %v390, %v574
        %v576 = vand.u32 %v203, 4294901760
        %577 = vmatmul.f32.gmra.mxu0 %v576
        %v578 = vpop.f32.mrf.mxu0
        %v579 = vadd.f32 %v398, %v578
        %v580 = vand.u32 %v205, 4294901760
        %581 = vmatmul.f32.gmra.mxu0 %v580
        %v582 = vpop.f32.mrf.mxu0
        %v583 = vadd.f32 %v406, %v582
        %v584 = vand.u32 %v207, 4294901760
        %585 = vmatmul.f32.gmra.mxu0 %v584
        %v586 = vpop.f32.mrf.mxu0
        %v587 = vadd.f32 %v414, %v586
        %v588 = vand.u32 %v209, 4294901760
        %589 = vmatmul.f32.gmra.mxu0 %v588
        %v590 = vpop.f32.mrf.mxu0
        %v591 = vadd.f32 %v422, %v590
        %v592 = vand.u32 %v211, 4294901760
        %593 = vmatmul.f32.gmra.mxu0 %v592
        %v594 = vpop.f32.mrf.mxu0
        %v595 = vadd.f32 %v430, %v594
        %v596 = vand.u32 %v213, 4294901760
        %597 = vmatmul.f32.gmra.mxu0 %v596
        %v598 = vpop.f32.mrf.mxu0
        %v599 = vadd.f32 %v438, %v598
        %600 = vdwg.mxu0
        %v601 = vand.u32 %v245, 4294901760
        %v602 = vsub.f32 %v245, %v601
        %603 = vmatpush.msra.mxu0 %v602
        %v604 = vand.u32 %v243, 4294901760
        %v605 = vsub.f32 %v243, %v604
        %606 = vmatpush.msra.mxu0 %v605
        %v607 = vand.u32 %v241, 4294901760
        %v608 = vsub.f32 %v241, %v607
        %609 = vmatpush.msra.mxu0 %v608
        %v610 = vand.u32 %v239, 4294901760
        %v611 = vsub.f32 %v239, %v610
        %612 = vmatpush.msra.mxu0 %v611
        %v613 = vand.u32 %v237, 4294901760
        %v614 = vsub.f32 %v237, %v613
        %615 = vmatpush.msra.mxu0 %v614
        %v616 = vand.u32 %v235, 4294901760
        %v617 = vsub.f32 %v235, %v616
        %618 = vmatpush.msra.mxu0 %v617
        %v619 = vand.u32 %v233, 4294901760
        %v620 = vsub.f32 %v233, %v619
        %621 = vmatpush.msra.mxu0 %v620
        %v622 = vand.u32 %v231, 4294901760
        %v623 = vsub.f32 %v231, %v622
        %624 = vmatpush.msra.mxu0 %v623
        %v625 = vand.u32 %v229, 4294901760
        %v626 = vsub.f32 %v229, %v625
        %627 = vmatpush.msra.mxu0 %v626
        %v628 = vand.u32 %v227, 4294901760
        %v629 = vsub.f32 %v227, %v628
        %630 = vmatpush.msra.mxu0 %v629
        %v631 = vand.u32 %v225, 4294901760
        %v632 = vsub.f32 %v225, %v631
        %633 = vmatpush.msra.mxu0 %v632
        %v634 = vand.u32 %v223, 4294901760
        %v635 = vsub.f32 %v223, %v634
        %636 = vmatpush.msra.mxu0 %v635
        %v637 = vand.u32 %v221, 4294901760
        %v638 = vsub.f32 %v221, %v637
        %639 = vmatpush.msra.mxu0 %v638
        %v640 = vand.u32 %v219, 4294901760
        %v641 = vsub.f32 %v219, %v640
        %642 = vmatpush.msra.mxu0 %v641
        %v643 = vand.u32 %v217, 4294901760
        %v644 = vsub.f32 %v217, %v643
        %645 = vmatpush.msra.mxu0 %v644
        %v646 = vand.u32 %v215, 4294901760
        %v647 = vsub.f32 %v215, %v646
        %648 = vmatpush.msra.mxu0 %v647
        %v649 = vand.u32 %v183, 4294901760
        %v650 = vsub.f32 %v183, %v649
        %651 = vmatmul.f32.gmra.mxu0 %v650
        %v652 = vpop.f32.mrf.mxu0
        %v653 = vadd.f32 %v539, %v652
        %v654 = vand.u32 %v185, 4294901760
        %v655 = vsub.f32 %v185, %v654
        %656 = vmatmul.f32.gmra.mxu0 %v655
        %v657 = vpop.f32.mrf.mxu0
        %v658 = vadd.f32 %v543, %v657
        %v659 = vand.u32 %v187, 4294901760
        %v660 = vsub.f32 %v187, %v659
        %661 = vmatmul.f32.gmra.mxu0 %v660
        %v662 = vpop.f32.mrf.mxu0
        %v663 = vadd.f32 %v547, %v662
        %v664 = vand.u32 %v189, 4294901760
        %v665 = vsub.f32 %v189, %v664
        %666 = vmatmul.f32.gmra.mxu0 %v665
        %v667 = vpop.f32.mrf.mxu0
        %v668 = vadd.f32 %v551, %v667
        %v669 = vand.u32 %v191, 4294901760
        %v670 = vsub.f32 %v191, %v669
        %671 = vmatmul.f32.gmra.mxu0 %v670
        %v672 = vpop.f32.mrf.mxu0
        %v673 = vadd.f32 %v555, %v672
        %v674 = vand.u32 %v193, 4294901760
        %v675 = vsub.f32 %v193, %v674
        %676 = vmatmul.f32.gmra.mxu0 %v675
        %v677 = vpop.f32.mrf.mxu0
        %v678 = vadd.f32 %v559, %v677
        %v679 = vand.u32 %v195, 4294901760
        %v680 = vsub.f32 %v195, %v679
        %681 = vmatmul.f32.gmra.mxu0 %v680
        %v682 = vpop.f32.mrf.mxu0
        %v683 = vadd.f32 %v563, %v682
        %v684 = vand.u32 %v197, 4294901760
        %v685 = vsub.f32 %v197, %v684
        %686 = vmatmul.f32.gmra.mxu0 %v685
        %v687 = vpop.f32.mrf.mxu0
        %v688 = vadd.f32 %v567, %v687
        %v689 = vand.u32 %v199, 4294901760
        %v690 = vsub.f32 %v199, %v689
        %691 = vmatmul.f32.gmra.mxu0 %v690
        %v692 = vpop.f32.mrf.mxu0
        %v693 = vadd.f32 %v571, %v692
        %v694 = vand.u32 %v201, 4294901760
        %v695 = vsub.f32 %v201, %v694
        %696 = vmatmul.f32.gmra.mxu0 %v695
        %v697 = vpop.f32.mrf.mxu0
        %v698 = vadd.f32 %v575, %v697
        %v699 = vand.u32 %v203, 4294901760
        %v700 = vsub.f32 %v203, %v699
        %701 = vmatmul.f32.gmra.mxu0 %v700
        %v702 = vpop.f32.mrf.mxu0
        %v703 = vadd.f32 %v579, %v702
        %v704 = vand.u32 %v205, 4294901760
        %v705 = vsub.f32 %v205, %v704
        %706 = vmatmul.f32.gmra.mxu0 %v705
        %v707 = vpop.f32.mrf.mxu0
        %v708 = vadd.f32 %v583, %v707
        %v709 = vand.u32 %v207, 4294901760
        %v710 = vsub.f32 %v207, %v709
        %711 = vmatmul.f32.gmra.mxu0 %v710
        %v712 = vpop.f32.mrf.mxu0
        %v713 = vadd.f32 %v587, %v712
        %v714 = vand.u32 %v209, 4294901760
        %v715 = vsub.f32 %v209, %v714
        %716 = vmatmul.f32.gmra.mxu0 %v715
        %v717 = vpop.f32.mrf.mxu0
        %v718 = vadd.f32 %v591, %v717
        %v719 = vand.u32 %v211, 4294901760
        %v720 = vsub.f32 %v211, %v719
        %721 = vmatmul.f32.gmra.mxu0 %v720
        %v722 = vpop.f32.mrf.mxu0
        %v723 = vadd.f32 %v595, %v722
        %v724 = vand.u32 %v213, 4294901760
        %v725 = vsub.f32 %v213, %v724
        %726 = vmatmul.f32.gmra.mxu0 %v725
        %v727 = vpop.f32.mrf.mxu0
        %v728 = vadd.f32 %v599, %v727
        %729 = vdwg.mxu0
        %v730 = vand.u32 %v245, 4294901760
        %731 = vmatpush.msra.mxu0 %v730
        %v732 = vand.u32 %v243, 4294901760
        %733 = vmatpush.msra.mxu0 %v732
        %v734 = vand.u32 %v241, 4294901760
        %735 = vmatpush.msra.mxu0 %v734
        %v736 = vand.u32 %v239, 4294901760
        %737 = vmatpush.msra.mxu0 %v736
        %v738 = vand.u32 %v237, 4294901760
        %739 = vmatpush.msra.mxu0 %v738
        %v740 = vand.u32 %v235, 4294901760
        %741 = vmatpush.msra.mxu0 %v740
        %v742 = vand.u32 %v233, 4294901760
        %743 = vmatpush.msra.mxu0 %v742
        %v744 = vand.u32 %v231, 4294901760
        %745 = vmatpush.msra.mxu0 %v744
        %v746 = vand.u32 %v229, 4294901760
        %747 = vmatpush.msra.mxu0 %v746
        %v748 = vand.u32 %v227, 4294901760
        %749 = vmatpush.msra.mxu0 %v748
        %v750 = vand.u32 %v225, 4294901760
        %751 = vmatpush.msra.mxu0 %v750
        %v752 = vand.u32 %v223, 4294901760
        %753 = vmatpush.msra.mxu0 %v752
        %v754 = vand.u32 %v221, 4294901760
        %755 = vmatpush.msra.mxu0 %v754
        %v756 = vand.u32 %v219, 4294901760
        %757 = vmatpush.msra.mxu0 %v756
        %v758 = vand.u32 %v217, 4294901760
        %759 = vmatpush.msra.mxu0 %v758
        %v760 = vand.u32 %v215, 4294901760
        %761 = vmatpush.msra.mxu0 %v760
        %v762 = vand.u32 %v183, 4294901760
        %v763 = vsub.f32 %v183, %v762
        %v764 = vand.u32 %v763, 4294901760
        %765 = vmatmul.f32.gmra.mxu0 %v764
        %v766 = vpop.f32.mrf.mxu0
        %v767 = vadd.f32 %v653, %v766
        %v768 = vand.u32 %v185, 4294901760
        %v769 = vsub.f32 %v185, %v768
        %v770 = vand.u32 %v769, 4294901760
        %771 = vmatmul.f32.gmra.mxu0 %v770
        %v772 = vpop.f32.mrf.mxu0
        %v773 = vadd.f32 %v658, %v772
        %v774 = vand.u32 %v187, 4294901760
        %v775 = vsub.f32 %v187, %v774
        %v776 = vand.u32 %v775, 4294901760
        %777 = vmatmul.f32.gmra.mxu0 %v776
        %v778 = vpop.f32.mrf.mxu0
        %v779 = vadd.f32 %v663, %v778
        %v780 = vand.u32 %v189, 4294901760
        %v781 = vsub.f32 %v189, %v780
        %v782 = vand.u32 %v781, 4294901760
        %783 = vmatmul.f32.gmra.mxu0 %v782
        %v784 = vpop.f32.mrf.mxu0
        %v785 = vadd.f32 %v668, %v784
        %v786 = vand.u32 %v191, 4294901760
        %v787 = vsub.f32 %v191, %v786
        %v788 = vand.u32 %v787, 4294901760
        %789 = vmatmul.f32.gmra.mxu0 %v788
        %v790 = vpop.f32.mrf.mxu0
        %v791 = vadd.f32 %v673, %v790
        %v792 = vand.u32 %v193, 4294901760
        %v793 = vsub.f32 %v193, %v792
        %v794 = vand.u32 %v793, 4294901760
        %795 = vmatmul.f32.gmra.mxu0 %v794
        %v796 = vpop.f32.mrf.mxu0
        %v797 = vadd.f32 %v678, %v796
        %v798 = vand.u32 %v195, 4294901760
        %v799 = vsub.f32 %v195, %v798
        %v800 = vand.u32 %v799, 4294901760
        %801 = vmatmul.f32.gmra.mxu0 %v800
        %v802 = vpop.f32.mrf.mxu0
        %v803 = vadd.f32 %v683, %v802
        %v804 = vand.u32 %v197, 4294901760
        %v805 = vsub.f32 %v197, %v804
        %v806 = vand.u32 %v805, 4294901760
        %807 = vmatmul.f32.gmra.mxu0 %v806
        %v808 = vpop.f32.mrf.mxu0
        %v809 = vadd.f32 %v688, %v808
        %v810 = vand.u32 %v199, 4294901760
        %v811 = vsub.f32 %v199, %v810
        %v812 = vand.u32 %v811, 4294901760
        %813 = vmatmul.f32.gmra.mxu0 %v812
        %v814 = vpop.f32.mrf.mxu0
        %v815 = vadd.f32 %v693, %v814
        %v816 = vand.u32 %v201, 4294901760
        %v817 = vsub.f32 %v201, %v816
        %v818 = vand.u32 %v817, 4294901760
        %819 = vmatmul.f32.gmra.mxu0 %v818
        %v820 = vpop.f32.mrf.mxu0
        %v821 = vadd.f32 %v698, %v820
        %v822 = vand.u32 %v203, 4294901760
        %v823 = vsub.f32 %v203, %v822
        %v824 = vand.u32 %v823, 4294901760
        %825 = vmatmul.f32.gmra.mxu0 %v824
        %v826 = vpop.f32.mrf.mxu0
        %v827 = vadd.f32 %v703, %v826
        %v828 = vand.u32 %v205, 4294901760
        %v829 = vsub.f32 %v205, %v828
        %v830 = vand.u32 %v829, 4294901760
        %831 = vmatmul.f32.gmra.mxu0 %v830
        %v832 = vpop.f32.mrf.mxu0
        %v833 = vadd.f32 %v708, %v832
        %v834 = vand.u32 %v207, 4294901760
        %v835 = vsub.f32 %v207, %v834
        %v836 = vand.u32 %v835, 4294901760
        %837 = vmatmul.f32.gmra.mxu0 %v836
        %v838 = vpop.f32.mrf.mxu0
        %v839 = vadd.f32 %v713, %v838
        %v840 = vand.u32 %v209, 4294901760
        %v841 = vsub.f32 %v209, %v840
        %v842 = vand.u32 %v841, 4294901760
        %843 = vmatmul.f32.gmra.mxu0 %v842
        %v844 = vpop.f32.mrf.mxu0
        %v845 = vadd.f32 %v718, %v844
        %v846 = vand.u32 %v211, 4294901760
        %v847 = vsub.f32 %v211, %v846
        %v848 = vand.u32 %v847, 4294901760
        %849 = vmatmul.f32.gmra.mxu0 %v848
        %v850 = vpop.f32.mrf.mxu0
        %v851 = vadd.f32 %v723, %v850
        %v852 = vand.u32 %v213, 4294901760
        %v853 = vsub.f32 %v213, %v852
        %v854 = vand.u32 %v853, 4294901760
        %855 = vmatmul.f32.gmra.mxu0 %v854
        %v856 = vpop.f32.mrf.mxu0
        %v857 = vadd.f32 %v728, %v856
        %858 = vdwg.mxu0
        %v859 = vand.u32 %v245, 4294901760
        %v860 = vsub.f32 %v245, %v859
        %v861 = vand.u32 %v860, 4294901760
        %862 = vmatpush.msra.mxu0 %v861
        %v863 = vand.u32 %v243, 4294901760
        %v864 = vsub.f32 %v243, %v863
        %v865 = vand.u32 %v864, 4294901760
        %866 = vmatpush.msra.mxu0 %v865
        %v867 = vand.u32 %v241, 4294901760
        %v868 = vsub.f32 %v241, %v867
        %v869 = vand.u32 %v868, 4294901760
        %870 = vmatpush.msra.mxu0 %v869
        %v871 = vand.u32 %v239, 4294901760
        %v872 = vsub.f32 %v239, %v871
        %v873 = vand.u32 %v872, 4294901760
        %874 = vmatpush.msra.mxu0 %v873
        %v875 = vand.u32 %v237, 4294901760
        %v876 = vsub.f32 %v237, %v875
        %v877 = vand.u32 %v876, 4294901760
        %878 = vmatpush.msra.mxu0 %v877
        %v879 = vand.u32 %v235, 4294901760
        %v880 = vsub.f32 %v235, %v879
        %v881 = vand.u32 %v880, 4294901760
        %882 = vmatpush.msra.mxu0 %v881
        %v883 = vand.u32 %v233, 4294901760
        %v884 = vsub.f32 %v233, %v883
        %v885 = vand.u32 %v884, 4294901760
        %886 = vmatpush.msra.mxu0 %v885
        %v887 = vand.u32 %v231, 4294901760
        %v888 = vsub.f32 %v231, %v887
        %v889 = vand.u32 %v888, 4294901760
        %890 = vmatpush.msra.mxu0 %v889
        %v891 = vand.u32 %v229, 4294901760
        %v892 = vsub.f32 %v229, %v891
        %v893 = vand.u32 %v892, 4294901760
        %894 = vmatpush.msra.mxu0 %v893
        %v895 = vand.u32 %v227, 4294901760
        %v896 = vsub.f32 %v227, %v895
        %v897 = vand.u32 %v896, 4294901760
        %898 = vmatpush.msra.mxu0 %v897
        %v899 = vand.u32 %v225, 4294901760
        %v900 = vsub.f32 %v225, %v899
        %v901 = vand.u32 %v900, 4294901760
        %902 = vmatpush.msra.mxu0 %v901
        %v903 = vand.u32 %v223, 4294901760
        %v904 = vsub.f32 %v223, %v903
        %v905 = vand.u32 %v904, 4294901760
        %906 = vmatpush.msra.mxu0 %v905
        %v907 = vand.u32 %v221, 4294901760
        %v908 = vsub.f32 %v221, %v907
        %v909 = vand.u32 %v908, 4294901760
        %910 = vmatpush.msra.mxu0 %v909
        %v911 = vand.u32 %v219, 4294901760
        %v912 = vsub.f32 %v219, %v911
        %v913 = vand.u32 %v912, 4294901760
        %914 = vmatpush.msra.mxu0 %v913
        %v915 = vand.u32 %v217, 4294901760
        %v916 = vsub.f32 %v217, %v915
        %v917 = vand.u32 %v916, 4294901760
        %918 = vmatpush.msra.mxu0 %v917
        %v919 = vand.u32 %v215, 4294901760
        %v920 = vsub.f32 %v215, %v919
        %v921 = vand.u32 %v920, 4294901760
        %922 = vmatpush.msra.mxu0 %v921
        %v923 = vand.u32 %v183, 4294901760
        %924 = vmatmul.f32.gmra.mxu0 %v923
        %v925 = vpop.f32.mrf.mxu0
        %v926 = vadd.f32 %v767, %v925
        %v927 = vand.u32 %v185, 4294901760
        %928 = vmatmul.f32.gmra.mxu0 %v927
        %v929 = vpop.f32.mrf.mxu0
        %v930 = vadd.f32 %v773, %v929
        %v931 = vand.u32 %v187, 4294901760
        %932 = vmatmul.f32.gmra.mxu0 %v931
        %v933 = vpop.f32.mrf.mxu0
        %v934 = vadd.f32 %v779, %v933
        %v935 = vand.u32 %v189, 4294901760
        %936 = vmatmul.f32.gmra.mxu0 %v935
        %v937 = vpop.f32.mrf.mxu0
        %v938 = vadd.f32 %v785, %v937
        %v939 = vand.u32 %v191, 4294901760
        %940 = vmatmul.f32.gmra.mxu0 %v939
        %v941 = vpop.f32.mrf.mxu0
        %v942 = vadd.f32 %v791, %v941
        %v943 = vand.u32 %v193, 4294901760
        %944 = vmatmul.f32.gmra.mxu0 %v943
        %v945 = vpop.f32.mrf.mxu0
        %v946 = vadd.f32 %v797, %v945
        %v947 = vand.u32 %v195, 4294901760
        %948 = vmatmul.f32.gmra.mxu0 %v947
        %v949 = vpop.f32.mrf.mxu0
        %v950 = vadd.f32 %v803, %v949
        %v951 = vand.u32 %v197, 4294901760
        %952 = vmatmul.f32.gmra.mxu0 %v951
        %v953 = vpop.f32.mrf.mxu0
        %v954 = vadd.f32 %v809, %v953
        %v955 = vand.u32 %v199, 4294901760
        %956 = vmatmul.f32.gmra.mxu0 %v955
        %v957 = vpop.f32.mrf.mxu0
        %v958 = vadd.f32 %v815, %v957
        %v959 = vand.u32 %v201, 4294901760
        %960 = vmatmul.f32.gmra.mxu0 %v959
        %v961 = vpop.f32.mrf.mxu0
        %v962 = vadd.f32 %v821, %v961
        %v963 = vand.u32 %v203, 4294901760
        %964 = vmatmul.f32.gmra.mxu0 %v963
        %v965 = vpop.f32.mrf.mxu0
        %v966 = vadd.f32 %v827, %v965
        %v967 = vand.u32 %v205, 4294901760
        %968 = vmatmul.f32.gmra.mxu0 %v967
        %v969 = vpop.f32.mrf.mxu0
        %v970 = vadd.f32 %v833, %v969
        %v971 = vand.u32 %v207, 4294901760
        %972 = vmatmul.f32.gmra.mxu0 %v971
        %v973 = vpop.f32.mrf.mxu0
        %v974 = vadd.f32 %v839, %v973
        %v975 = vand.u32 %v209, 4294901760
        %976 = vmatmul.f32.gmra.mxu0 %v975
        %v977 = vpop.f32.mrf.mxu0
        %v978 = vadd.f32 %v845, %v977
        %v979 = vand.u32 %v211, 4294901760
        %980 = vmatmul.f32.gmra.mxu0 %v979
        %v981 = vpop.f32.mrf.mxu0
        %v982 = vadd.f32 %v851, %v981
        %v983 = vand.u32 %v213, 4294901760
        %984 = vmatmul.f32.gmra.mxu0 %v983
        %v985 = vpop.f32.mrf.mxu0
        %v986 = vadd.f32 %v857, %v985
        %987 = vdwg.mxu0
        %v988 = vand.u32 %v245, 4294901760
        %989 = vmatpush.msra.mxu0 %v988
        %v990 = vand.u32 %v243, 4294901760
        %991 = vmatpush.msra.mxu0 %v990
        %v992 = vand.u32 %v241, 4294901760
        %993 = vmatpush.msra.mxu0 %v992
        %v994 = vand.u32 %v239, 4294901760
        %995 = vmatpush.msra.mxu0 %v994
        %v996 = vand.u32 %v237, 4294901760
        %997 = vmatpush.msra.mxu0 %v996
        %v998 = vand.u32 %v235, 4294901760
        %999 = vmatpush.msra.mxu0 %v998
        %v1000 = vand.u32 %v233, 4294901760
        %1001 = vmatpush.msra.mxu0 %v1000
        %v1002 = vand.u32 %v231, 4294901760
        %1003 = vmatpush.msra.mxu0 %v1002
        %v1004 = vand.u32 %v229, 4294901760
        %1005 = vmatpush.msra.mxu0 %v1004
        %v1006 = vand.u32 %v227, 4294901760
        %1007 = vmatpush.msra.mxu0 %v1006
        %v1008 = vand.u32 %v225, 4294901760
        %1009 = vmatpush.msra.mxu0 %v1008
        %v1010 = vand.u32 %v223, 4294901760
        %1011 = vmatpush.msra.mxu0 %v1010
        %v1012 = vand.u32 %v221, 4294901760
        %1013 = vmatpush.msra.mxu0 %v1012
        %v1014 = vand.u32 %v219, 4294901760
        %1015 = vmatpush.msra.mxu0 %v1014
        %v1016 = vand.u32 %v217, 4294901760
        %1017 = vmatpush.msra.mxu0 %v1016
        %v1018 = vand.u32 %v215, 4294901760
        %1019 = vmatpush.msra.mxu0 %v1018
        %v1020 = vand.u32 %v183, 4294901760
        %1021 = vmatmul.f32.gmra.mxu0 %v1020
        %v1022 = vpop.f32.mrf.mxu0
        %v1023 = vadd.f32 %v926, %v1022
        %v1024 = vand.u32 %v185, 4294901760
        %1025 = vmatmul.f32.gmra.mxu0 %v1024
        %v1026 = vpop.f32.mrf.mxu0
        %v1027 = vadd.f32 %v930, %v1026
        %v1028 = vand.u32 %v187, 4294901760
        %1029 = vmatmul.f32.gmra.mxu0 %v1028
        %v1030 = vpop.f32.mrf.mxu0
        %v1031 = vadd.f32 %v934, %v1030
        %v1032 = vand.u32 %v189, 4294901760
        %1033 = vmatmul.f32.gmra.mxu0 %v1032
        %v1034 = vpop.f32.mrf.mxu0
        %v1035 = vadd.f32 %v938, %v1034
        %v1036 = vand.u32 %v191, 4294901760
        %1037 = vmatmul.f32.gmra.mxu0 %v1036
        %v1038 = vpop.f32.mrf.mxu0
        %v1039 = vadd.f32 %v942, %v1038
        %v1040 = vand.u32 %v193, 4294901760
        %1041 = vmatmul.f32.gmra.mxu0 %v1040
        %v1042 = vpop.f32.mrf.mxu0
        %v1043 = vadd.f32 %v946, %v1042
        %v1044 = vand.u32 %v195, 4294901760
        %1045 = vmatmul.f32.gmra.mxu0 %v1044
        %v1046 = vpop.f32.mrf.mxu0
        %v1047 = vadd.f32 %v950, %v1046
        %v1048 = vand.u32 %v197, 4294901760
        %1049 = vmatmul.f32.gmra.mxu0 %v1048
        %v1050 = vpop.f32.mrf.mxu0
        %v1051 = vadd.f32 %v954, %v1050
        %v1052 = vand.u32 %v199, 4294901760
        %1053 = vmatmul.f32.gmra.mxu0 %v1052
        %v1054 = vpop.f32.mrf.mxu0
        %v1055 = vadd.f32 %v958, %v1054
        %v1056 = vand.u32 %v201, 4294901760
        %1057 = vmatmul.f32.gmra.mxu0 %v1056
        %v1058 = vpop.f32.mrf.mxu0
        %v1059 = vadd.f32 %v962, %v1058
        %v1060 = vand.u32 %v203, 4294901760
        %1061 = vmatmul.f32.gmra.mxu0 %v1060
        %v1062 = vpop.f32.mrf.mxu0
        %v1063 = vadd.f32 %v966, %v1062
        %v1064 = vand.u32 %v205, 4294901760
        %1065 = vmatmul.f32.gmra.mxu0 %v1064
        %v1066 = vpop.f32.mrf.mxu0
        %v1067 = vadd.f32 %v970, %v1066
        %v1068 = vand.u32 %v207, 4294901760
        %1069 = vmatmul.f32.gmra.mxu0 %v1068
        %v1070 = vpop.f32.mrf.mxu0
        %v1071 = vadd.f32 %v974, %v1070
        %v1072 = vand.u32 %v209, 4294901760
        %1073 = vmatmul.f32.gmra.mxu0 %v1072
        %v1074 = vpop.f32.mrf.mxu0
        %v1075 = vadd.f32 %v978, %v1074
        %v1076 = vand.u32 %v211, 4294901760
        %1077 = vmatmul.f32.gmra.mxu0 %v1076
        %v1078 = vpop.f32.mrf.mxu0
        %v1079 = vadd.f32 %v982, %v1078
        %v1080 = vand.u32 %v213, 4294901760
        %1081 = vmatmul.f32.gmra.mxu0 %v1080
        %v1082 = vpop.f32.mrf.mxu0
        %v1083 = vadd.f32 %v986, %v1082
        %1084 = vdwg.mxu0
        %v1085 = vand.u32 %v277, 4294901760
        %1086 = vmatpush.msra.mxu0 %v1085
        %v1087 = vand.u32 %v275, 4294901760
        %1088 = vmatpush.msra.mxu0 %v1087
        %v1089 = vand.u32 %v273, 4294901760
        %1090 = vmatpush.msra.mxu0 %v1089
        %v1091 = vand.u32 %v271, 4294901760
        %1092 = vmatpush.msra.mxu0 %v1091
        %v1093 = vand.u32 %v269, 4294901760
        %1094 = vmatpush.msra.mxu0 %v1093
        %v1095 = vand.u32 %v267, 4294901760
        %1096 = vmatpush.msra.mxu0 %v1095
        %v1097 = vand.u32 %v265, 4294901760
        %1098 = vmatpush.msra.mxu0 %v1097
        %v1099 = vand.u32 %v263, 4294901760
        %1100 = vmatpush.msra.mxu0 %v1099
        %v1101 = vand.u32 %v261, 4294901760
        %1102 = vmatpush.msra.mxu0 %v1101
        %v1103 = vand.u32 %v259, 4294901760
        %1104 = vmatpush.msra.mxu0 %v1103
        %v1105 = vand.u32 %v257, 4294901760
        %1106 = vmatpush.msra.mxu0 %v1105
        %v1107 = vand.u32 %v255, 4294901760
        %1108 = vmatpush.msra.mxu0 %v1107
        %v1109 = vand.u32 %v253, 4294901760
        %1110 = vmatpush.msra.mxu0 %v1109
        %v1111 = vand.u32 %v251, 4294901760
        %1112 = vmatpush.msra.mxu0 %v1111
        %v1113 = vand.u32 %v249, 4294901760
        %1114 = vmatpush.msra.mxu0 %v1113
        %v1115 = vand.u32 %v247, 4294901760
        %1116 = vmatpush.msra.mxu0 %v1115
        %v1117 = vand.u32 %v184, 4294901760
        %v1118 = vsub.f32 %v184, %v1117
        %v1119 = vand.u32 %v1118, 4294901760
        %v1120 = vsub.f32 %v1118, %v1119
        %v1121 = vand.u32 %v1120, 4294901760
        %1122 = vmatmul.f32.gmra.mxu0 %v1121
        %v1123 = vpop.f32.mrf.mxu0
        %v1124 = vadd.f32 %v1023, %v1123
        %v1125 = vand.u32 %v186, 4294901760
        %v1126 = vsub.f32 %v186, %v1125
        %v1127 = vand.u32 %v1126, 4294901760
        %v1128 = vsub.f32 %v1126, %v1127
        %v1129 = vand.u32 %v1128, 4294901760
        %1130 = vmatmul.f32.gmra.mxu0 %v1129
        %v1131 = vpop.f32.mrf.mxu0
        %v1132 = vadd.f32 %v1027, %v1131
        %v1133 = vand.u32 %v188, 4294901760
        %v1134 = vsub.f32 %v188, %v1133
        %v1135 = vand.u32 %v1134, 4294901760
        %v1136 = vsub.f32 %v1134, %v1135
        %v1137 = vand.u32 %v1136, 4294901760
        %1138 = vmatmul.f32.gmra.mxu0 %v1137
        %v1139 = vpop.f32.mrf.mxu0
        %v1140 = vadd.f32 %v1031, %v1139
        %v1141 = vand.u32 %v190, 4294901760
        %v1142 = vsub.f32 %v190, %v1141
        %v1143 = vand.u32 %v1142, 4294901760
        %v1144 = vsub.f32 %v1142, %v1143
        %v1145 = vand.u32 %v1144, 4294901760
        %1146 = vmatmul.f32.gmra.mxu0 %v1145
        %v1147 = vpop.f32.mrf.mxu0
        %v1148 = vadd.f32 %v1035, %v1147
        %v1149 = vand.u32 %v192, 4294901760
        %v1150 = vsub.f32 %v192, %v1149
        %v1151 = vand.u32 %v1150, 4294901760
        %v1152 = vsub.f32 %v1150, %v1151
        %v1153 = vand.u32 %v1152, 4294901760
        %1154 = vmatmul.f32.gmra.mxu0 %v1153
        %v1155 = vpop.f32.mrf.mxu0
        %v1156 = vadd.f32 %v1039, %v1155
        %v1157 = vand.u32 %v194, 4294901760
        %v1158 = vsub.f32 %v194, %v1157
        %v1159 = vand.u32 %v1158, 4294901760
        %v1160 = vsub.f32 %v1158, %v1159
        %v1161 = vand.u32 %v1160, 4294901760
        %1162 = vmatmul.f32.gmra.mxu0 %v1161
        %v1163 = vpop.f32.mrf.mxu0
        %v1164 = vadd.f32 %v1043, %v1163
        %v1165 = vand.u32 %v196, 4294901760
        %v1166 = vsub.f32 %v196, %v1165
        %v1167 = vand.u32 %v1166, 4294901760
        %v1168 = vsub.f32 %v1166, %v1167
        %v1169 = vand.u32 %v1168, 4294901760
        %1170 = vmatmul.f32.gmra.mxu0 %v1169
        %v1171 = vpop.f32.mrf.mxu0
        %v1172 = vadd.f32 %v1047, %v1171
        %v1173 = vand.u32 %v198, 4294901760
        %v1174 = vsub.f32 %v198, %v1173
        %v1175 = vand.u32 %v1174, 4294901760
        %v1176 = vsub.f32 %v1174, %v1175
        %v1177 = vand.u32 %v1176, 4294901760
        %1178 = vmatmul.f32.gmra.mxu0 %v1177
        %v1179 = vpop.f32.mrf.mxu0
        %v1180 = vadd.f32 %v1051, %v1179
        %v1181 = vand.u32 %v200, 4294901760
        %v1182 = vsub.f32 %v200, %v1181
        %v1183 = vand.u32 %v1182, 4294901760
        %v1184 = vsub.f32 %v1182, %v1183
        %v1185 = vand.u32 %v1184, 4294901760
        %1186 = vmatmul.f32.gmra.mxu0 %v1185
        %v1187 = vpop.f32.mrf.mxu0
        %v1188 = vadd.f32 %v1055, %v1187
        %v1189 = vand.u32 %v202, 4294901760
        %v1190 = vsub.f32 %v202, %v1189
        %v1191 = vand.u32 %v1190, 4294901760
        %v1192 = vsub.f32 %v1190, %v1191
        %v1193 = vand.u32 %v1192, 4294901760
        %1194 = vmatmul.f32.gmra.mxu0 %v1193
        %v1195 = vpop.f32.mrf.mxu0
        %v1196 = vadd.f32 %v1059, %v1195
        %v1197 = vand.u32 %v204, 4294901760
        %v1198 = vsub.f32 %v204, %v1197
        %v1199 = vand.u32 %v1198, 4294901760
        %v1200 = vsub.f32 %v1198, %v1199
        %v1201 = vand.u32 %v1200, 4294901760
        %1202 = vmatmul.f32.gmra.mxu0 %v1201
        %v1203 = vpop.f32.mrf.mxu0
        %v1204 = vadd.f32 %v1063, %v1203
        %v1205 = vand.u32 %v206, 4294901760
        %v1206 = vsub.f32 %v206, %v1205
        %v1207 = vand.u32 %v1206, 4294901760
        %v1208 = vsub.f32 %v1206, %v1207
        %v1209 = vand.u32 %v1208, 4294901760
        %1210 = vmatmul.f32.gmra.mxu0 %v1209
        %v1211 = vpop.f32.mrf.mxu0
        %v1212 = vadd.f32 %v1067, %v1211
        %v1213 = vand.u32 %v208, 4294901760
        %v1214 = vsub.f32 %v208, %v1213
        %v1215 = vand.u32 %v1214, 4294901760
        %v1216 = vsub.f32 %v1214, %v1215
        %v1217 = vand.u32 %v1216, 4294901760
        %1218 = vmatmul.f32.gmra.mxu0 %v1217
        %v1219 = vpop.f32.mrf.mxu0
        %v1220 = vadd.f32 %v1071, %v1219
        %v1221 = vand.u32 %v210, 4294901760
        %v1222 = vsub.f32 %v210, %v1221
        %v1223 = vand.u32 %v1222, 4294901760
        %v1224 = vsub.f32 %v1222, %v1223
        %v1225 = vand.u32 %v1224, 4294901760
        %1226 = vmatmul.f32.gmra.mxu0 %v1225
        %v1227 = vpop.f32.mrf.mxu0
        %v1228 = vadd.f32 %v1075, %v1227
        %v1229 = vand.u32 %v212, 4294901760
        %v1230 = vsub.f32 %v212, %v1229
        %v1231 = vand.u32 %v1230, 4294901760
        %v1232 = vsub.f32 %v1230, %v1231
        %v1233 = vand.u32 %v1232, 4294901760
        %1234 = vmatmul.f32.gmra.mxu0 %v1233
        %v1235 = vpop.f32.mrf.mxu0
        %v1236 = vadd.f32 %v1079, %v1235
        %v1237 = vand.u32 %v214, 4294901760
        %v1238 = vsub.f32 %v214, %v1237
        %v1239 = vand.u32 %v1238, 4294901760
        %v1240 = vsub.f32 %v1238, %v1239
        %v1241 = vand.u32 %v1240, 4294901760
        %1242 = vmatmul.f32.gmra.mxu0 %v1241
        %v1243 = vpop.f32.mrf.mxu0
        %v1244 = vadd.f32 %v1083, %v1243
        %1245 = vdwg.mxu0
        %v1246 = vand.u32 %v277, 4294901760
        %v1247 = vsub.f32 %v277, %v1246
        %v1248 = vand.u32 %v1247, 4294901760
        %v1249 = vsub.f32 %v1247, %v1248
        %v1250 = vand.u32 %v1249, 4294901760
        %1251 = vmatpush.msra.mxu0 %v1250
        %v1252 = vand.u32 %v275, 4294901760
        %v1253 = vsub.f32 %v275, %v1252
        %v1254 = vand.u32 %v1253, 4294901760
        %v1255 = vsub.f32 %v1253, %v1254
        %v1256 = vand.u32 %v1255, 4294901760
        %1257 = vmatpush.msra.mxu0 %v1256
        %v1258 = vand.u32 %v273, 4294901760
        %v1259 = vsub.f32 %v273, %v1258
        %v1260 = vand.u32 %v1259, 4294901760
        %v1261 = vsub.f32 %v1259, %v1260
        %v1262 = vand.u32 %v1261, 4294901760
        %1263 = vmatpush.msra.mxu0 %v1262
        %v1264 = vand.u32 %v271, 4294901760
        %v1265 = vsub.f32 %v271, %v1264
        %v1266 = vand.u32 %v1265, 4294901760
        %v1267 = vsub.f32 %v1265, %v1266
        %v1268 = vand.u32 %v1267, 4294901760
        %1269 = vmatpush.msra.mxu0 %v1268
        %v1270 = vand.u32 %v269, 4294901760
        %v1271 = vsub.f32 %v269, %v1270
        %v1272 = vand.u32 %v1271, 4294901760
        %v1273 = vsub.f32 %v1271, %v1272
        %v1274 = vand.u32 %v1273, 4294901760
        %1275 = vmatpush.msra.mxu0 %v1274
        %v1276 = vand.u32 %v267, 4294901760
        %v1277 = vsub.f32 %v267, %v1276
        %v1278 = vand.u32 %v1277, 4294901760
        %v1279 = vsub.f32 %v1277, %v1278
        %v1280 = vand.u32 %v1279, 4294901760
        %1281 = vmatpush.msra.mxu0 %v1280
        %v1282 = vand.u32 %v265, 4294901760
        %v1283 = vsub.f32 %v265, %v1282
        %v1284 = vand.u32 %v1283, 4294901760
        %v1285 = vsub.f32 %v1283, %v1284
        %v1286 = vand.u32 %v1285, 4294901760
        %1287 = vmatpush.msra.mxu0 %v1286
        %v1288 = vand.u32 %v263, 4294901760
        %v1289 = vsub.f32 %v263, %v1288
        %v1290 = vand.u32 %v1289, 4294901760
        %v1291 = vsub.f32 %v1289, %v1290
        %v1292 = vand.u32 %v1291, 4294901760
        %1293 = vmatpush.msra.mxu0 %v1292
        %v1294 = vand.u32 %v261, 4294901760
        %v1295 = vsub.f32 %v261, %v1294
        %v1296 = vand.u32 %v1295, 4294901760
        %v1297 = vsub.f32 %v1295, %v1296
        %v1298 = vand.u32 %v1297, 4294901760
        %1299 = vmatpush.msra.mxu0 %v1298
        %v1300 = vand.u32 %v259, 4294901760
        %v1301 = vsub.f32 %v259, %v1300
        %v1302 = vand.u32 %v1301, 4294901760
        %v1303 = vsub.f32 %v1301, %v1302
        %v1304 = vand.u32 %v1303, 4294901760
        %1305 = vmatpush.msra.mxu0 %v1304
        %v1306 = vand.u32 %v257, 4294901760
        %v1307 = vsub.f32 %v257, %v1306
        %v1308 = vand.u32 %v1307, 4294901760
        %v1309 = vsub.f32 %v1307, %v1308
        %v1310 = vand.u32 %v1309, 4294901760
        %1311 = vmatpush.msra.mxu0 %v1310
        %v1312 = vand.u32 %v255, 4294901760
        %v1313 = vsub.f32 %v255, %v1312
        %v1314 = vand.u32 %v1313, 4294901760
        %v1315 = vsub.f32 %v1313, %v1314
        %v1316 = vand.u32 %v1315, 4294901760
        %1317 = vmatpush.msra.mxu0 %v1316
        %v1318 = vand.u32 %v253, 4294901760
        %v1319 = vsub.f32 %v253, %v1318
        %v1320 = vand.u32 %v1319, 4294901760
        %v1321 = vsub.f32 %v1319, %v1320
        %v1322 = vand.u32 %v1321, 4294901760
        %1323 = vmatpush.msra.mxu0 %v1322
        %v1324 = vand.u32 %v251, 4294901760
        %v1325 = vsub.f32 %v251, %v1324
        %v1326 = vand.u32 %v1325, 4294901760
        %v1327 = vsub.f32 %v1325, %v1326
        %v1328 = vand.u32 %v1327, 4294901760
        %1329 = vmatpush.msra.mxu0 %v1328
        %v1330 = vand.u32 %v249, 4294901760
        %v1331 = vsub.f32 %v249, %v1330
        %v1332 = vand.u32 %v1331, 4294901760
        %v1333 = vsub.f32 %v1331, %v1332
        %v1334 = vand.u32 %v1333, 4294901760
        %1335 = vmatpush.msra.mxu0 %v1334
        %v1336 = vand.u32 %v247, 4294901760
        %v1337 = vsub.f32 %v247, %v1336
        %v1338 = vand.u32 %v1337, 4294901760
        %v1339 = vsub.f32 %v1337, %v1338
        %v1340 = vand.u32 %v1339, 4294901760
        %1341 = vmatpush.msra.mxu0 %v1340
        %v1342 = vand.u32 %v184, 4294901760
        %1343 = vmatmul.f32.gmra.mxu0 %v1342
        %v1344 = vpop.f32.mrf.mxu0
        %v1345 = vadd.f32 %v1124, %v1344
        %v1346 = vand.u32 %v186, 4294901760
        %1347 = vmatmul.f32.gmra.mxu0 %v1346
        %v1348 = vpop.f32.mrf.mxu0
        %v1349 = vadd.f32 %v1132, %v1348
        %v1350 = vand.u32 %v188, 4294901760
        %1351 = vmatmul.f32.gmra.mxu0 %v1350
        %v1352 = vpop.f32.mrf.mxu0
        %v1353 = vadd.f32 %v1140, %v1352
        %v1354 = vand.u32 %v190, 4294901760
        %1355 = vmatmul.f32.gmra.mxu0 %v1354
        %v1356 = vpop.f32.mrf.mxu0
        %v1357 = vadd.f32 %v1148, %v1356
        %v1358 = vand.u32 %v192, 4294901760
        %1359 = vmatmul.f32.gmra.mxu0 %v1358
        %v1360 = vpop.f32.mrf.mxu0
        %v1361 = vadd.f32 %v1156, %v1360
        %v1362 = vand.u32 %v194, 4294901760
        %1363 = vmatmul.f32.gmra.mxu0 %v1362
        %v1364 = vpop.f32.mrf.mxu0
        %v1365 = vadd.f32 %v1164, %v1364
        %v1366 = vand.u32 %v196, 4294901760
        %1367 = vmatmul.f32.gmra.mxu0 %v1366
        %v1368 = vpop.f32.mrf.mxu0
        %v1369 = vadd.f32 %v1172, %v1368
        %v1370 = vand.u32 %v198, 4294901760
        %1371 = vmatmul.f32.gmra.mxu0 %v1370
        %v1372 = vpop.f32.mrf.mxu0
        %v1373 = vadd.f32 %v1180, %v1372
        %v1374 = vand.u32 %v200, 4294901760
        %1375 = vmatmul.f32.gmra.mxu0 %v1374
        %v1376 = vpop.f32.mrf.mxu0
        %v1377 = vadd.f32 %v1188, %v1376
        %v1378 = vand.u32 %v202, 4294901760
        %1379 = vmatmul.f32.gmra.mxu0 %v1378
        %v1380 = vpop.f32.mrf.mxu0
        %v1381 = vadd.f32 %v1196, %v1380
        %v1382 = vand.u32 %v204, 4294901760
        %1383 = vmatmul.f32.gmra.mxu0 %v1382
        %v1384 = vpop.f32.mrf.mxu0
        %v1385 = vadd.f32 %v1204, %v1384
        %v1386 = vand.u32 %v206, 4294901760
        %1387 = vmatmul.f32.gmra.mxu0 %v1386
        %v1388 = vpop.f32.mrf.mxu0
        %v1389 = vadd.f32 %v1212, %v1388
        %v1390 = vand.u32 %v208, 4294901760
        %1391 = vmatmul.f32.gmra.mxu0 %v1390
        %v1392 = vpop.f32.mrf.mxu0
        %v1393 = vadd.f32 %v1220, %v1392
        %v1394 = vand.u32 %v210, 4294901760
        %1395 = vmatmul.f32.gmra.mxu0 %v1394
        %v1396 = vpop.f32.mrf.mxu0
        %v1397 = vadd.f32 %v1228, %v1396
        %v1398 = vand.u32 %v212, 4294901760
        %1399 = vmatmul.f32.gmra.mxu0 %v1398
        %v1400 = vpop.f32.mrf.mxu0
        %v1401 = vadd.f32 %v1236, %v1400
        %v1402 = vand.u32 %v214, 4294901760
        %1403 = vmatmul.f32.gmra.mxu0 %v1402
        %v1404 = vpop.f32.mrf.mxu0
        %v1405 = vadd.f32 %v1244, %v1404
        %1406 = vdwg.mxu0
        %v1407 = vand.u32 %v277, 4294901760
        %v1408 = vsub.f32 %v277, %v1407
        %1409 = vmatpush.msra.mxu0 %v1408
        %v1410 = vand.u32 %v275, 4294901760
        %v1411 = vsub.f32 %v275, %v1410
        %1412 = vmatpush.msra.mxu0 %v1411
        %v1413 = vand.u32 %v273, 4294901760
        %v1414 = vsub.f32 %v273, %v1413
        %1415 = vmatpush.msra.mxu0 %v1414
        %v1416 = vand.u32 %v271, 4294901760
        %v1417 = vsub.f32 %v271, %v1416
        %1418 = vmatpush.msra.mxu0 %v1417
        %v1419 = vand.u32 %v269, 4294901760
        %v1420 = vsub.f32 %v269, %v1419
        %1421 = vmatpush.msra.mxu0 %v1420
        %v1422 = vand.u32 %v267, 4294901760
        %v1423 = vsub.f32 %v267, %v1422
        %1424 = vmatpush.msra.mxu0 %v1423
        %v1425 = vand.u32 %v265, 4294901760
        %v1426 = vsub.f32 %v265, %v1425
        %1427 = vmatpush.msra.mxu0 %v1426
        %v1428 = vand.u32 %v263, 4294901760
        %v1429 = vsub.f32 %v263, %v1428
        %1430 = vmatpush.msra.mxu0 %v1429
        %v1431 = vand.u32 %v261, 4294901760
        %v1432 = vsub.f32 %v261, %v1431
        %1433 = vmatpush.msra.mxu0 %v1432
        %v1434 = vand.u32 %v259, 4294901760
        %v1435 = vsub.f32 %v259, %v1434
        %1436 = vmatpush.msra.mxu0 %v1435
        %v1437 = vand.u32 %v257, 4294901760
        %v1438 = vsub.f32 %v257, %v1437
        %1439 = vmatpush.msra.mxu0 %v1438
        %v1440 = vand.u32 %v255, 4294901760
        %v1441 = vsub.f32 %v255, %v1440
        %1442 = vmatpush.msra.mxu0 %v1441
        %v1443 = vand.u32 %v253, 4294901760
        %v1444 = vsub.f32 %v253, %v1443
        %1445 = vmatpush.msra.mxu0 %v1444
        %v1446 = vand.u32 %v251, 4294901760
        %v1447 = vsub.f32 %v251, %v1446
        %1448 = vmatpush.msra.mxu0 %v1447
        %v1449 = vand.u32 %v249, 4294901760
        %v1450 = vsub.f32 %v249, %v1449
        %1451 = vmatpush.msra.mxu0 %v1450
        %v1452 = vand.u32 %v247, 4294901760
        %v1453 = vsub.f32 %v247, %v1452
        %1454 = vmatpush.msra.mxu0 %v1453
        %v1455 = vand.u32 %v184, 4294901760
        %v1456 = vsub.f32 %v184, %v1455
        %1457 = vmatmul.f32.gmra.mxu0 %v1456
        %v1458 = vpop.f32.mrf.mxu0
        %v1459 = vadd.f32 %v1345, %v1458
        %v1460 = vand.u32 %v186, 4294901760
        %v1461 = vsub.f32 %v186, %v1460
        %1462 = vmatmul.f32.gmra.mxu0 %v1461
        %v1463 = vpop.f32.mrf.mxu0
        %v1464 = vadd.f32 %v1349, %v1463
        %v1465 = vand.u32 %v188, 4294901760
        %v1466 = vsub.f32 %v188, %v1465
        %1467 = vmatmul.f32.gmra.mxu0 %v1466
        %v1468 = vpop.f32.mrf.mxu0
        %v1469 = vadd.f32 %v1353, %v1468
        %v1470 = vand.u32 %v190, 4294901760
        %v1471 = vsub.f32 %v190, %v1470
        %1472 = vmatmul.f32.gmra.mxu0 %v1471
        %v1473 = vpop.f32.mrf.mxu0
        %v1474 = vadd.f32 %v1357, %v1473
        %v1475 = vand.u32 %v192, 4294901760
        %v1476 = vsub.f32 %v192, %v1475
        %1477 = vmatmul.f32.gmra.mxu0 %v1476
        %v1478 = vpop.f32.mrf.mxu0
        %v1479 = vadd.f32 %v1361, %v1478
        %v1480 = vand.u32 %v194, 4294901760
        %v1481 = vsub.f32 %v194, %v1480
        %1482 = vmatmul.f32.gmra.mxu0 %v1481
        %v1483 = vpop.f32.mrf.mxu0
        %v1484 = vadd.f32 %v1365, %v1483
        %v1485 = vand.u32 %v196, 4294901760
        %v1486 = vsub.f32 %v196, %v1485
        %1487 = vmatmul.f32.gmra.mxu0 %v1486
        %v1488 = vpop.f32.mrf.mxu0
        %v1489 = vadd.f32 %v1369, %v1488
        %v1490 = vand.u32 %v198, 4294901760
        %v1491 = vsub.f32 %v198, %v1490
        %1492 = vmatmul.f32.gmra.mxu0 %v1491
        %v1493 = vpop.f32.mrf.mxu0
        %v1494 = vadd.f32 %v1373, %v1493
        %v1495 = vand.u32 %v200, 4294901760
        %v1496 = vsub.f32 %v200, %v1495
        %1497 = vmatmul.f32.gmra.mxu0 %v1496
        %v1498 = vpop.f32.mrf.mxu0
        %v1499 = vadd.f32 %v1377, %v1498
        %v1500 = vand.u32 %v202, 4294901760
        %v1501 = vsub.f32 %v202, %v1500
        %1502 = vmatmul.f32.gmra.mxu0 %v1501
        %v1503 = vpop.f32.mrf.mxu0
        %v1504 = vadd.f32 %v1381, %v1503
        %v1505 = vand.u32 %v204, 4294901760
        %v1506 = vsub.f32 %v204, %v1505
        %1507 = vmatmul.f32.gmra.mxu0 %v1506
        %v1508 = vpop.f32.mrf.mxu0
        %v1509 = vadd.f32 %v1385, %v1508
        %v1510 = vand.u32 %v206, 4294901760
        %v1511 = vsub.f32 %v206, %v1510
        %1512 = vmatmul.f32.gmra.mxu0 %v1511
        %v1513 = vpop.f32.mrf.mxu0
        %v1514 = vadd.f32 %v1389, %v1513
        %v1515 = vand.u32 %v208, 4294901760
        %v1516 = vsub.f32 %v208, %v1515
        %1517 = vmatmul.f32.gmra.mxu0 %v1516
        %v1518 = vpop.f32.mrf.mxu0
        %v1519 = vadd.f32 %v1393, %v1518
        %v1520 = vand.u32 %v210, 4294901760
        %v1521 = vsub.f32 %v210, %v1520
        %1522 = vmatmul.f32.gmra.mxu0 %v1521
        %v1523 = vpop.f32.mrf.mxu0
        %v1524 = vadd.f32 %v1397, %v1523
        %v1525 = vand.u32 %v212, 4294901760
        %v1526 = vsub.f32 %v212, %v1525
        %1527 = vmatmul.f32.gmra.mxu0 %v1526
        %v1528 = vpop.f32.mrf.mxu0
        %v1529 = vadd.f32 %v1401, %v1528
        %v1530 = vand.u32 %v214, 4294901760
        %v1531 = vsub.f32 %v214, %v1530
        %1532 = vmatmul.f32.gmra.mxu0 %v1531
        %v1533 = vpop.f32.mrf.mxu0
        %v1534 = vadd.f32 %v1405, %v1533
        %1535 = vdwg.mxu0
        %v1536 = vand.u32 %v277, 4294901760
        %1537 = vmatpush.msra.mxu0 %v1536
        %v1538 = vand.u32 %v275, 4294901760
        %1539 = vmatpush.msra.mxu0 %v1538
        %v1540 = vand.u32 %v273, 4294901760
        %1541 = vmatpush.msra.mxu0 %v1540
        %v1542 = vand.u32 %v271, 4294901760
        %1543 = vmatpush.msra.mxu0 %v1542
        %v1544 = vand.u32 %v269, 4294901760
        %1545 = vmatpush.msra.mxu0 %v1544
        %v1546 = vand.u32 %v267, 4294901760
        %1547 = vmatpush.msra.mxu0 %v1546
        %v1548 = vand.u32 %v265, 4294901760
        %1549 = vmatpush.msra.mxu0 %v1548
        %v1550 = vand.u32 %v263, 4294901760
        %1551 = vmatpush.msra.mxu0 %v1550
        %v1552 = vand.u32 %v261, 4294901760
        %1553 = vmatpush.msra.mxu0 %v1552
        %v1554 = vand.u32 %v259, 4294901760
        %1555 = vmatpush.msra.mxu0 %v1554
        %v1556 = vand.u32 %v257, 4294901760
        %1557 = vmatpush.msra.mxu0 %v1556
        %v1558 = vand.u32 %v255, 4294901760
        %1559 = vmatpush.msra.mxu0 %v1558
        %v1560 = vand.u32 %v253, 4294901760
        %1561 = vmatpush.msra.mxu0 %v1560
        %v1562 = vand.u32 %v251, 4294901760
        %1563 = vmatpush.msra.mxu0 %v1562
        %v1564 = vand.u32 %v249, 4294901760
        %1565 = vmatpush.msra.mxu0 %v1564
        %v1566 = vand.u32 %v247, 4294901760
        %1567 = vmatpush.msra.mxu0 %v1566
        %v1568 = vand.u32 %v184, 4294901760
        %v1569 = vsub.f32 %v184, %v1568
        %v1570 = vand.u32 %v1569, 4294901760
        %1571 = vmatmul.f32.gmra.mxu0 %v1570
        %v1572 = vpop.f32.mrf.mxu0
        %v1573 = vadd.f32 %v1459, %v1572
        %v1574 = vand.u32 %v186, 4294901760
        %v1575 = vsub.f32 %v186, %v1574
        %v1576 = vand.u32 %v1575, 4294901760
        %1577 = vmatmul.f32.gmra.mxu0 %v1576
        %v1578 = vpop.f32.mrf.mxu0
        %v1579 = vadd.f32 %v1464, %v1578
        %v1580 = vand.u32 %v188, 4294901760
        %v1581 = vsub.f32 %v188, %v1580
        %v1582 = vand.u32 %v1581, 4294901760
        %1583 = vmatmul.f32.gmra.mxu0 %v1582
        %v1584 = vpop.f32.mrf.mxu0
        %v1585 = vadd.f32 %v1469, %v1584
        %v1586 = vand.u32 %v190, 4294901760
        %v1587 = vsub.f32 %v190, %v1586
        %v1588 = vand.u32 %v1587, 4294901760
        %1589 = vmatmul.f32.gmra.mxu0 %v1588
        %v1590 = vpop.f32.mrf.mxu0
        %v1591 = vadd.f32 %v1474, %v1590
        %v1592 = vand.u32 %v192, 4294901760
        %v1593 = vsub.f32 %v192, %v1592
        %v1594 = vand.u32 %v1593, 4294901760
        %1595 = vmatmul.f32.gmra.mxu0 %v1594
        %v1596 = vpop.f32.mrf.mxu0
        %v1597 = vadd.f32 %v1479, %v1596
        %v1598 = vand.u32 %v194, 4294901760
        %v1599 = vsub.f32 %v194, %v1598
        %v1600 = vand.u32 %v1599, 4294901760
        %1601 = vmatmul.f32.gmra.mxu0 %v1600
        %v1602 = vpop.f32.mrf.mxu0
        %v1603 = vadd.f32 %v1484, %v1602
        %v1604 = vand.u32 %v196, 4294901760
        %v1605 = vsub.f32 %v196, %v1604
        %v1606 = vand.u32 %v1605, 4294901760
        %1607 = vmatmul.f32.gmra.mxu0 %v1606
        %v1608 = vpop.f32.mrf.mxu0
        %v1609 = vadd.f32 %v1489, %v1608
        %v1610 = vand.u32 %v198, 4294901760
        %v1611 = vsub.f32 %v198, %v1610
        %v1612 = vand.u32 %v1611, 4294901760
        %1613 = vmatmul.f32.gmra.mxu0 %v1612
        %v1614 = vpop.f32.mrf.mxu0
        %v1615 = vadd.f32 %v1494, %v1614
        %v1616 = vand.u32 %v200, 4294901760
        %v1617 = vsub.f32 %v200, %v1616
        %v1618 = vand.u32 %v1617, 4294901760
        %1619 = vmatmul.f32.gmra.mxu0 %v1618
        %v1620 = vpop.f32.mrf.mxu0
        %v1621 = vadd.f32 %v1499, %v1620
        %v1622 = vand.u32 %v202, 4294901760
        %v1623 = vsub.f32 %v202, %v1622
        %v1624 = vand.u32 %v1623, 4294901760
        %1625 = vmatmul.f32.gmra.mxu0 %v1624
        %v1626 = vpop.f32.mrf.mxu0
        %v1627 = vadd.f32 %v1504, %v1626
        %v1628 = vand.u32 %v204, 4294901760
        %v1629 = vsub.f32 %v204, %v1628
        %v1630 = vand.u32 %v1629, 4294901760
        %1631 = vmatmul.f32.gmra.mxu0 %v1630
        %v1632 = vpop.f32.mrf.mxu0
        %v1633 = vadd.f32 %v1509, %v1632
        %v1634 = vand.u32 %v206, 4294901760
        %v1635 = vsub.f32 %v206, %v1634
        %v1636 = vand.u32 %v1635, 4294901760
        %1637 = vmatmul.f32.gmra.mxu0 %v1636
        %v1638 = vpop.f32.mrf.mxu0
        %v1639 = vadd.f32 %v1514, %v1638
        %v1640 = vand.u32 %v208, 4294901760
        %v1641 = vsub.f32 %v208, %v1640
        %v1642 = vand.u32 %v1641, 4294901760
        %1643 = vmatmul.f32.gmra.mxu0 %v1642
        %v1644 = vpop.f32.mrf.mxu0
        %v1645 = vadd.f32 %v1519, %v1644
        %v1646 = vand.u32 %v210, 4294901760
        %v1647 = vsub.f32 %v210, %v1646
        %v1648 = vand.u32 %v1647, 4294901760
        %1649 = vmatmul.f32.gmra.mxu0 %v1648
        %v1650 = vpop.f32.mrf.mxu0
        %v1651 = vadd.f32 %v1524, %v1650
        %v1652 = vand.u32 %v212, 4294901760
        %v1653 = vsub.f32 %v212, %v1652
        %v1654 = vand.u32 %v1653, 4294901760
        %1655 = vmatmul.f32.gmra.mxu0 %v1654
        %v1656 = vpop.f32.mrf.mxu0
        %v1657 = vadd.f32 %v1529, %v1656
        %v1658 = vand.u32 %v214, 4294901760
        %v1659 = vsub.f32 %v214, %v1658
        %v1660 = vand.u32 %v1659, 4294901760
        %1661 = vmatmul.f32.gmra.mxu0 %v1660
        %v1662 = vpop.f32.mrf.mxu0
        %v1663 = vadd.f32 %v1534, %v1662
        %1664 = vdwg.mxu0
        %v1665 = vand.u32 %v277, 4294901760
        %v1666 = vsub.f32 %v277, %v1665
        %v1667 = vand.u32 %v1666, 4294901760
        %1668 = vmatpush.msra.mxu0 %v1667
        %v1669 = vand.u32 %v275, 4294901760
        %v1670 = vsub.f32 %v275, %v1669
        %v1671 = vand.u32 %v1670, 4294901760
        %1672 = vmatpush.msra.mxu0 %v1671
        %v1673 = vand.u32 %v273, 4294901760
        %v1674 = vsub.f32 %v273, %v1673
        %v1675 = vand.u32 %v1674, 4294901760
        %1676 = vmatpush.msra.mxu0 %v1675
        %v1677 = vand.u32 %v271, 4294901760
        %v1678 = vsub.f32 %v271, %v1677
        %v1679 = vand.u32 %v1678, 4294901760
        %1680 = vmatpush.msra.mxu0 %v1679
        %v1681 = vand.u32 %v269, 4294901760
        %v1682 = vsub.f32 %v269, %v1681
        %v1683 = vand.u32 %v1682, 4294901760
        %1684 = vmatpush.msra.mxu0 %v1683
        %v1685 = vand.u32 %v267, 4294901760
        %v1686 = vsub.f32 %v267, %v1685
        %v1687 = vand.u32 %v1686, 4294901760
        %1688 = vmatpush.msra.mxu0 %v1687
        %v1689 = vand.u32 %v265, 4294901760
        %v1690 = vsub.f32 %v265, %v1689
        %v1691 = vand.u32 %v1690, 4294901760
        %1692 = vmatpush.msra.mxu0 %v1691
        %v1693 = vand.u32 %v263, 4294901760
        %v1694 = vsub.f32 %v263, %v1693
        %v1695 = vand.u32 %v1694, 4294901760
        %1696 = vmatpush.msra.mxu0 %v1695
        %v1697 = vand.u32 %v261, 4294901760
        %v1698 = vsub.f32 %v261, %v1697
        %v1699 = vand.u32 %v1698, 4294901760
        %1700 = vmatpush.msra.mxu0 %v1699
        %v1701 = vand.u32 %v259, 4294901760
        %v1702 = vsub.f32 %v259, %v1701
        %v1703 = vand.u32 %v1702, 4294901760
        %1704 = vmatpush.msra.mxu0 %v1703
        %v1705 = vand.u32 %v257, 4294901760
        %v1706 = vsub.f32 %v257, %v1705
        %v1707 = vand.u32 %v1706, 4294901760
        %1708 = vmatpush.msra.mxu0 %v1707
        %v1709 = vand.u32 %v255, 4294901760
        %v1710 = vsub.f32 %v255, %v1709
        %v1711 = vand.u32 %v1710, 4294901760
        %1712 = vmatpush.msra.mxu0 %v1711
        %v1713 = vand.u32 %v253, 4294901760
        %v1714 = vsub.f32 %v253, %v1713
        %v1715 = vand.u32 %v1714, 4294901760
        %1716 = vmatpush.msra.mxu0 %v1715
        %v1717 = vand.u32 %v251, 4294901760
        %v1718 = vsub.f32 %v251, %v1717
        %v1719 = vand.u32 %v1718, 4294901760
        %1720 = vmatpush.msra.mxu0 %v1719
        %v1721 = vand.u32 %v249, 4294901760
        %v1722 = vsub.f32 %v249, %v1721
        %v1723 = vand.u32 %v1722, 4294901760
        %1724 = vmatpush.msra.mxu0 %v1723
        %v1725 = vand.u32 %v247, 4294901760
        %v1726 = vsub.f32 %v247, %v1725
        %v1727 = vand.u32 %v1726, 4294901760
        %1728 = vmatpush.msra.mxu0 %v1727
        %v1729 = vand.u32 %v184, 4294901760
        %1730 = vmatmul.f32.gmra.mxu0 %v1729
        %v1731 = vpop.f32.mrf.mxu0
        %v1732 = vadd.f32 %v1573, %v1731
        %v1733 = vand.u32 %v186, 4294901760
        %1734 = vmatmul.f32.gmra.mxu0 %v1733
        %v1735 = vpop.f32.mrf.mxu0
        %v1736 = vadd.f32 %v1579, %v1735
        %v1737 = vand.u32 %v188, 4294901760
        %1738 = vmatmul.f32.gmra.mxu0 %v1737
        %v1739 = vpop.f32.mrf.mxu0
        %v1740 = vadd.f32 %v1585, %v1739
        %v1741 = vand.u32 %v190, 4294901760
        %1742 = vmatmul.f32.gmra.mxu0 %v1741
        %v1743 = vpop.f32.mrf.mxu0
        %v1744 = vadd.f32 %v1591, %v1743
        %v1745 = vand.u32 %v192, 4294901760
        %1746 = vmatmul.f32.gmra.mxu0 %v1745
        %v1747 = vpop.f32.mrf.mxu0
        %v1748 = vadd.f32 %v1597, %v1747
        %v1749 = vand.u32 %v194, 4294901760
        %1750 = vmatmul.f32.gmra.mxu0 %v1749
        %v1751 = vpop.f32.mrf.mxu0
        %v1752 = vadd.f32 %v1603, %v1751
        %v1753 = vand.u32 %v196, 4294901760
        %1754 = vmatmul.f32.gmra.mxu0 %v1753
        %v1755 = vpop.f32.mrf.mxu0
        %v1756 = vadd.f32 %v1609, %v1755
        %v1757 = vand.u32 %v198, 4294901760
        %1758 = vmatmul.f32.gmra.mxu0 %v1757
        %v1759 = vpop.f32.mrf.mxu0
        %v1760 = vadd.f32 %v1615, %v1759
        %v1761 = vand.u32 %v200, 4294901760
        %1762 = vmatmul.f32.gmra.mxu0 %v1761
        %v1763 = vpop.f32.mrf.mxu0
        %v1764 = vadd.f32 %v1621, %v1763
        %v1765 = vand.u32 %v202, 4294901760
        %1766 = vmatmul.f32.gmra.mxu0 %v1765
        %v1767 = vpop.f32.mrf.mxu0
        %v1768 = vadd.f32 %v1627, %v1767
        %v1769 = vand.u32 %v204, 4294901760
        %1770 = vmatmul.f32.gmra.mxu0 %v1769
        %v1771 = vpop.f32.mrf.mxu0
        %v1772 = vadd.f32 %v1633, %v1771
        %v1773 = vand.u32 %v206, 4294901760
        %1774 = vmatmul.f32.gmra.mxu0 %v1773
        %v1775 = vpop.f32.mrf.mxu0
        %v1776 = vadd.f32 %v1639, %v1775
        %v1777 = vand.u32 %v208, 4294901760
        %1778 = vmatmul.f32.gmra.mxu0 %v1777
        %v1779 = vpop.f32.mrf.mxu0
        %v1780 = vadd.f32 %v1645, %v1779
        %v1781 = vand.u32 %v210, 4294901760
        %1782 = vmatmul.f32.gmra.mxu0 %v1781
        %v1783 = vpop.f32.mrf.mxu0
        %v1784 = vadd.f32 %v1651, %v1783
        %v1785 = vand.u32 %v212, 4294901760
        %1786 = vmatmul.f32.gmra.mxu0 %v1785
        %v1787 = vpop.f32.mrf.mxu0
        %v1788 = vadd.f32 %v1657, %v1787
        %v1789 = vand.u32 %v214, 4294901760
        %1790 = vmatmul.f32.gmra.mxu0 %v1789
        %v1791 = vpop.f32.mrf.mxu0
        %v1792 = vadd.f32 %v1663, %v1791
        %1793 = vdwg.mxu0
        %v1794 = vand.u32 %v277, 4294901760
        %1795 = vmatpush.msra.mxu0 %v1794
        %v1796 = vand.u32 %v275, 4294901760
        %1797 = vmatpush.msra.mxu0 %v1796
        %v1798 = vand.u32 %v273, 4294901760
        %1799 = vmatpush.msra.mxu0 %v1798
        %v1800 = vand.u32 %v271, 4294901760
        %1801 = vmatpush.msra.mxu0 %v1800
        %v1802 = vand.u32 %v269, 4294901760
        %1803 = vmatpush.msra.mxu0 %v1802
        %v1804 = vand.u32 %v267, 4294901760
        %1805 = vmatpush.msra.mxu0 %v1804
        %v1806 = vand.u32 %v265, 4294901760
        %1807 = vmatpush.msra.mxu0 %v1806
        %v1808 = vand.u32 %v263, 4294901760
        %1809 = vmatpush.msra.mxu0 %v1808
        %v1810 = vand.u32 %v261, 4294901760
        %1811 = vmatpush.msra.mxu0 %v1810
        %v1812 = vand.u32 %v259, 4294901760
        %1813 = vmatpush.msra.mxu0 %v1812
        %v1814 = vand.u32 %v257, 4294901760
        %1815 = vmatpush.msra.mxu0 %v1814
        %v1816 = vand.u32 %v255, 4294901760
        %1817 = vmatpush.msra.mxu0 %v1816
        %v1818 = vand.u32 %v253, 4294901760
        %1819 = vmatpush.msra.mxu0 %v1818
        %v1820 = vand.u32 %v251, 4294901760
        %1821 = vmatpush.msra.mxu0 %v1820
        %v1822 = vand.u32 %v249, 4294901760
        %1823 = vmatpush.msra.mxu0 %v1822
        %v1824 = vand.u32 %v247, 4294901760
        %1825 = vmatpush.msra.mxu0 %v1824
        %v1826 = vand.u32 %v184, 4294901760
        %1827 = vmatmul.f32.gmra.mxu0 %v1826
        %v1828 = vpop.f32.mrf.mxu0
        %v1829 = vadd.f32 %v1732, %v1828
        %v1830 = vand.u32 %v186, 4294901760
        %1831 = vmatmul.f32.gmra.mxu0 %v1830
        %v1832 = vpop.f32.mrf.mxu0
        %v1833 = vadd.f32 %v1736, %v1832
        %v1834 = vand.u32 %v188, 4294901760
        %1835 = vmatmul.f32.gmra.mxu0 %v1834
        %v1836 = vpop.f32.mrf.mxu0
        %v1837 = vadd.f32 %v1740, %v1836
        %v1838 = vand.u32 %v190, 4294901760
        %1839 = vmatmul.f32.gmra.mxu0 %v1838
        %v1840 = vpop.f32.mrf.mxu0
        %v1841 = vadd.f32 %v1744, %v1840
        %v1842 = vand.u32 %v192, 4294901760
        %1843 = vmatmul.f32.gmra.mxu0 %v1842
        %v1844 = vpop.f32.mrf.mxu0
        %v1845 = vadd.f32 %v1748, %v1844
        %v1846 = vand.u32 %v194, 4294901760
        %1847 = vmatmul.f32.gmra.mxu0 %v1846
        %v1848 = vpop.f32.mrf.mxu0
        %v1849 = vadd.f32 %v1752, %v1848
        %v1850 = vand.u32 %v196, 4294901760
        %1851 = vmatmul.f32.gmra.mxu0 %v1850
        %v1852 = vpop.f32.mrf.mxu0
        %v1853 = vadd.f32 %v1756, %v1852
        %v1854 = vand.u32 %v198, 4294901760
        %1855 = vmatmul.f32.gmra.mxu0 %v1854
        %v1856 = vpop.f32.mrf.mxu0
        %v1857 = vadd.f32 %v1760, %v1856
        %v1858 = vand.u32 %v200, 4294901760
        %1859 = vmatmul.f32.gmra.mxu0 %v1858
        %v1860 = vpop.f32.mrf.mxu0
        %v1861 = vadd.f32 %v1764, %v1860
        %v1862 = vand.u32 %v202, 4294901760
        %1863 = vmatmul.f32.gmra.mxu0 %v1862
        %v1864 = vpop.f32.mrf.mxu0
        %v1865 = vadd.f32 %v1768, %v1864
        %v1866 = vand.u32 %v204, 4294901760
        %1867 = vmatmul.f32.gmra.mxu0 %v1866
        %v1868 = vpop.f32.mrf.mxu0
        %v1869 = vadd.f32 %v1772, %v1868
        %v1870 = vand.u32 %v206, 4294901760
        %1871 = vmatmul.f32.gmra.mxu0 %v1870
        %v1872 = vpop.f32.mrf.mxu0
        %v1873 = vadd.f32 %v1776, %v1872
        %v1874 = vand.u32 %v208, 4294901760
        %1875 = vmatmul.f32.gmra.mxu0 %v1874
        %v1876 = vpop.f32.mrf.mxu0
        %v1877 = vadd.f32 %v1780, %v1876
        %v1878 = vand.u32 %v210, 4294901760
        %1879 = vmatmul.f32.gmra.mxu0 %v1878
        %v1880 = vpop.f32.mrf.mxu0
        %v1881 = vadd.f32 %v1784, %v1880
        %v1882 = vand.u32 %v212, 4294901760
        %1883 = vmatmul.f32.gmra.mxu0 %v1882
        %v1884 = vpop.f32.mrf.mxu0
        %v1885 = vadd.f32 %v1788, %v1884
        %v1886 = vand.u32 %v214, 4294901760
        %1887 = vmatmul.f32.gmra.mxu0 %v1886
        %v1888 = vpop.f32.mrf.mxu0
        %v1889 = vadd.f32 %v1792, %v1888
        %1890 = vdwg.mxu0
        %v1891 = vand.u32 %v246, 4294901760
        %1892 = vmatpush.msra.mxu0 %v1891
        %v1893 = vand.u32 %v244, 4294901760
        %1894 = vmatpush.msra.mxu0 %v1893
        %v1895 = vand.u32 %v242, 4294901760
        %1896 = vmatpush.msra.mxu0 %v1895
        %v1897 = vand.u32 %v240, 4294901760
        %1898 = vmatpush.msra.mxu0 %v1897
        %v1899 = vand.u32 %v238, 4294901760
        %1900 = vmatpush.msra.mxu0 %v1899
        %v1901 = vand.u32 %v236, 4294901760
        %1902 = vmatpush.msra.mxu0 %v1901
        %v1903 = vand.u32 %v234, 4294901760
        %1904 = vmatpush.msra.mxu0 %v1903
        %v1905 = vand.u32 %v232, 4294901760
        %1906 = vmatpush.msra.mxu0 %v1905
        %v1907 = vand.u32 %v230, 4294901760
        %1908 = vmatpush.msra.mxu0 %v1907
        %v1909 = vand.u32 %v228, 4294901760
        %1910 = vmatpush.msra.mxu0 %v1909
        %v1911 = vand.u32 %v226, 4294901760
        %1912 = vmatpush.msra.mxu0 %v1911
        %v1913 = vand.u32 %v224, 4294901760
        %1914 = vmatpush.msra.mxu0 %v1913
        %v1915 = vand.u32 %v222, 4294901760
        %1916 = vmatpush.msra.mxu0 %v1915
        %v1917 = vand.u32 %v220, 4294901760
        %1918 = vmatpush.msra.mxu0 %v1917
        %v1919 = vand.u32 %v218, 4294901760
        %1920 = vmatpush.msra.mxu0 %v1919
        %v1921 = vand.u32 %v216, 4294901760
        %1922 = vmatpush.msra.mxu0 %v1921
        %v1923 = vand.u32 %v183, 4294901760
        %v1924 = vsub.f32 %v183, %v1923
        %v1925 = vand.u32 %v1924, 4294901760
        %v1926 = vsub.f32 %v1924, %v1925
        %v1927 = vand.u32 %v1926, 4294901760
        %1928 = vmatmul.f32.gmra.mxu0 %v1927
        %v1929 = vpop.f32.mrf.mxu0
        %v1930 = vadd.f32 0.0, %v1929
        %v1931 = vand.u32 %v185, 4294901760
        %v1932 = vsub.f32 %v185, %v1931
        %v1933 = vand.u32 %v1932, 4294901760
        %v1934 = vsub.f32 %v1932, %v1933
        %v1935 = vand.u32 %v1934, 4294901760
        %1936 = vmatmul.f32.gmra.mxu0 %v1935
        %v1937 = vpop.f32.mrf.mxu0
        %v1938 = vadd.f32 0.0, %v1937
        %v1939 = vand.u32 %v187, 4294901760
        %v1940 = vsub.f32 %v187, %v1939
        %v1941 = vand.u32 %v1940, 4294901760
        %v1942 = vsub.f32 %v1940, %v1941
        %v1943 = vand.u32 %v1942, 4294901760
        %1944 = vmatmul.f32.gmra.mxu0 %v1943
        %v1945 = vpop.f32.mrf.mxu0
        %v1946 = vadd.f32 0.0, %v1945
        %v1947 = vand.u32 %v189, 4294901760
        %v1948 = vsub.f32 %v189, %v1947
        %v1949 = vand.u32 %v1948, 4294901760
        %v1950 = vsub.f32 %v1948, %v1949
        %v1951 = vand.u32 %v1950, 4294901760
        %1952 = vmatmul.f32.gmra.mxu0 %v1951
        %v1953 = vpop.f32.mrf.mxu0
        %v1954 = vadd.f32 0.0, %v1953
        %v1955 = vand.u32 %v191, 4294901760
        %v1956 = vsub.f32 %v191, %v1955
        %v1957 = vand.u32 %v1956, 4294901760
        %v1958 = vsub.f32 %v1956, %v1957
        %v1959 = vand.u32 %v1958, 4294901760
        %1960 = vmatmul.f32.gmra.mxu0 %v1959
        %v1961 = vpop.f32.mrf.mxu0
        %v1962 = vadd.f32 0.0, %v1961
        %v1963 = vand.u32 %v193, 4294901760
        %v1964 = vsub.f32 %v193, %v1963
        %v1965 = vand.u32 %v1964, 4294901760
        %v1966 = vsub.f32 %v1964, %v1965
        %v1967 = vand.u32 %v1966, 4294901760
        %1968 = vmatmul.f32.gmra.mxu0 %v1967
        %v1969 = vpop.f32.mrf.mxu0
        %v1970 = vadd.f32 0.0, %v1969
        %v1971 = vand.u32 %v195, 4294901760
        %v1972 = vsub.f32 %v195, %v1971
        %v1973 = vand.u32 %v1972, 4294901760
        %v1974 = vsub.f32 %v1972, %v1973
        %v1975 = vand.u32 %v1974, 4294901760
        %1976 = vmatmul.f32.gmra.mxu0 %v1975
        %v1977 = vpop.f32.mrf.mxu0
        %v1978 = vadd.f32 0.0, %v1977
        %v1979 = vand.u32 %v197, 4294901760
        %v1980 = vsub.f32 %v197, %v1979
        %v1981 = vand.u32 %v1980, 4294901760
        %v1982 = vsub.f32 %v1980, %v1981
        %v1983 = vand.u32 %v1982, 4294901760
        %1984 = vmatmul.f32.gmra.mxu0 %v1983
        %v1985 = vpop.f32.mrf.mxu0
        %v1986 = vadd.f32 0.0, %v1985
        %v1987 = vand.u32 %v199, 4294901760
        %v1988 = vsub.f32 %v199, %v1987
        %v1989 = vand.u32 %v1988, 4294901760
        %v1990 = vsub.f32 %v1988, %v1989
        %v1991 = vand.u32 %v1990, 4294901760
        %1992 = vmatmul.f32.gmra.mxu0 %v1991
        %v1993 = vpop.f32.mrf.mxu0
        %v1994 = vadd.f32 0.0, %v1993
        %v1995 = vand.u32 %v201, 4294901760
        %v1996 = vsub.f32 %v201, %v1995
        %v1997 = vand.u32 %v1996, 4294901760
        %v1998 = vsub.f32 %v1996, %v1997
        %v1999 = vand.u32 %v1998, 4294901760
        %2000 = vmatmul.f32.gmra.mxu0 %v1999
        %v2001 = vpop.f32.mrf.mxu0
        %v2002 = vadd.f32 0.0, %v2001
        %v2003 = vand.u32 %v203, 4294901760
        %v2004 = vsub.f32 %v203, %v2003
        %v2005 = vand.u32 %v2004, 4294901760
        %v2006 = vsub.f32 %v2004, %v2005
        %v2007 = vand.u32 %v2006, 4294901760
        %2008 = vmatmul.f32.gmra.mxu0 %v2007
        %v2009 = vpop.f32.mrf.mxu0
        %v2010 = vadd.f32 0.0, %v2009
        %v2011 = vand.u32 %v205, 4294901760
        %v2012 = vsub.f32 %v205, %v2011
        %v2013 = vand.u32 %v2012, 4294901760
        %v2014 = vsub.f32 %v2012, %v2013
        %v2015 = vand.u32 %v2014, 4294901760
        %2016 = vmatmul.f32.gmra.mxu0 %v2015
        %v2017 = vpop.f32.mrf.mxu0
        %v2018 = vadd.f32 0.0, %v2017
        %v2019 = vand.u32 %v207, 4294901760
        %v2020 = vsub.f32 %v207, %v2019
        %v2021 = vand.u32 %v2020, 4294901760
        %v2022 = vsub.f32 %v2020, %v2021
        %v2023 = vand.u32 %v2022, 4294901760
        %2024 = vmatmul.f32.gmra.mxu0 %v2023
        %v2025 = vpop.f32.mrf.mxu0
        %v2026 = vadd.f32 0.0, %v2025
        %v2027 = vand.u32 %v209, 4294901760
        %v2028 = vsub.f32 %v209, %v2027
        %v2029 = vand.u32 %v2028, 4294901760
        %v2030 = vsub.f32 %v2028, %v2029
        %v2031 = vand.u32 %v2030, 4294901760
        %2032 = vmatmul.f32.gmra.mxu0 %v2031
        %v2033 = vpop.f32.mrf.mxu0
        %v2034 = vadd.f32 0.0, %v2033
        %v2035 = vand.u32 %v211, 4294901760
        %v2036 = vsub.f32 %v211, %v2035
        %v2037 = vand.u32 %v2036, 4294901760
        %v2038 = vsub.f32 %v2036, %v2037
        %v2039 = vand.u32 %v2038, 4294901760
        %2040 = vmatmul.f32.gmra.mxu0 %v2039
        %v2041 = vpop.f32.mrf.mxu0
        %v2042 = vadd.f32 0.0, %v2041
        %v2043 = vand.u32 %v213, 4294901760
        %v2044 = vsub.f32 %v213, %v2043
        %v2045 = vand.u32 %v2044, 4294901760
        %v2046 = vsub.f32 %v2044, %v2045
        %v2047 = vand.u32 %v2046, 4294901760
        %2048 = vmatmul.f32.gmra.mxu0 %v2047
        %v2049 = vpop.f32.mrf.mxu0
        %v2050 = vadd.f32 0.0, %v2049
        %2051 = vdwg.mxu0
        %v2052 = vand.u32 %v246, 4294901760
        %v2053 = vsub.f32 %v246, %v2052
        %v2054 = vand.u32 %v2053, 4294901760
        %v2055 = vsub.f32 %v2053, %v2054
        %v2056 = vand.u32 %v2055, 4294901760
        %2057 = vmatpush.msra.mxu0 %v2056
        %v2058 = vand.u32 %v244, 4294901760
        %v2059 = vsub.f32 %v244, %v2058
        %v2060 = vand.u32 %v2059, 4294901760
        %v2061 = vsub.f32 %v2059, %v2060
        %v2062 = vand.u32 %v2061, 4294901760
        %2063 = vmatpush.msra.mxu0 %v2062
        %v2064 = vand.u32 %v242, 4294901760
        %v2065 = vsub.f32 %v242, %v2064
        %v2066 = vand.u32 %v2065, 4294901760
        %v2067 = vsub.f32 %v2065, %v2066
        %v2068 = vand.u32 %v2067, 4294901760
        %2069 = vmatpush.msra.mxu0 %v2068
        %v2070 = vand.u32 %v240, 4294901760
        %v2071 = vsub.f32 %v240, %v2070
        %v2072 = vand.u32 %v2071, 4294901760
        %v2073 = vsub.f32 %v2071, %v2072
        %v2074 = vand.u32 %v2073, 4294901760
        %2075 = vmatpush.msra.mxu0 %v2074
        %v2076 = vand.u32 %v238, 4294901760
        %v2077 = vsub.f32 %v238, %v2076
        %v2078 = vand.u32 %v2077, 4294901760
        %v2079 = vsub.f32 %v2077, %v2078
        %v2080 = vand.u32 %v2079, 4294901760
        %2081 = vmatpush.msra.mxu0 %v2080
        %v2082 = vand.u32 %v236, 4294901760
        %v2083 = vsub.f32 %v236, %v2082
        %v2084 = vand.u32 %v2083, 4294901760
        %v2085 = vsub.f32 %v2083, %v2084
        %v2086 = vand.u32 %v2085, 4294901760
        %2087 = vmatpush.msra.mxu0 %v2086
        %v2088 = vand.u32 %v234, 4294901760
        %v2089 = vsub.f32 %v234, %v2088
        %v2090 = vand.u32 %v2089, 4294901760
        %v2091 = vsub.f32 %v2089, %v2090
        %v2092 = vand.u32 %v2091, 4294901760
        %2093 = vmatpush.msra.mxu0 %v2092
        %v2094 = vand.u32 %v232, 4294901760
        %v2095 = vsub.f32 %v232, %v2094
        %v2096 = vand.u32 %v2095, 4294901760
        %v2097 = vsub.f32 %v2095, %v2096
        %v2098 = vand.u32 %v2097, 4294901760
        %2099 = vmatpush.msra.mxu0 %v2098
        %v2100 = vand.u32 %v230, 4294901760
        %v2101 = vsub.f32 %v230, %v2100
        %v2102 = vand.u32 %v2101, 4294901760
        %v2103 = vsub.f32 %v2101, %v2102
        %v2104 = vand.u32 %v2103, 4294901760
        %2105 = vmatpush.msra.mxu0 %v2104
        %v2106 = vand.u32 %v228, 4294901760
        %v2107 = vsub.f32 %v228, %v2106
        %v2108 = vand.u32 %v2107, 4294901760
        %v2109 = vsub.f32 %v2107, %v2108
        %v2110 = vand.u32 %v2109, 4294901760
        %2111 = vmatpush.msra.mxu0 %v2110
        %v2112 = vand.u32 %v226, 4294901760
        %v2113 = vsub.f32 %v226, %v2112
        %v2114 = vand.u32 %v2113, 4294901760
        %v2115 = vsub.f32 %v2113, %v2114
        %v2116 = vand.u32 %v2115, 4294901760
        %2117 = vmatpush.msra.mxu0 %v2116
        %v2118 = vand.u32 %v224, 4294901760
        %v2119 = vsub.f32 %v224, %v2118
        %v2120 = vand.u32 %v2119, 4294901760
        %v2121 = vsub.f32 %v2119, %v2120
        %v2122 = vand.u32 %v2121, 4294901760
        %2123 = vmatpush.msra.mxu0 %v2122
        %v2124 = vand.u32 %v222, 4294901760
        %v2125 = vsub.f32 %v222, %v2124
        %v2126 = vand.u32 %v2125, 4294901760
        %v2127 = vsub.f32 %v2125, %v2126
        %v2128 = vand.u32 %v2127, 4294901760
        %2129 = vmatpush.msra.mxu0 %v2128
        %v2130 = vand.u32 %v220, 4294901760
        %v2131 = vsub.f32 %v220, %v2130
        %v2132 = vand.u32 %v2131, 4294901760
        %v2133 = vsub.f32 %v2131, %v2132
        %v2134 = vand.u32 %v2133, 4294901760
        %2135 = vmatpush.msra.mxu0 %v2134
        %v2136 = vand.u32 %v218, 4294901760
        %v2137 = vsub.f32 %v218, %v2136
        %v2138 = vand.u32 %v2137, 4294901760
        %v2139 = vsub.f32 %v2137, %v2138
        %v2140 = vand.u32 %v2139, 4294901760
        %2141 = vmatpush.msra.mxu0 %v2140
        %v2142 = vand.u32 %v216, 4294901760
        %v2143 = vsub.f32 %v216, %v2142
        %v2144 = vand.u32 %v2143, 4294901760
        %v2145 = vsub.f32 %v2143, %v2144
        %v2146 = vand.u32 %v2145, 4294901760
        %2147 = vmatpush.msra.mxu0 %v2146
        %v2148 = vand.u32 %v183, 4294901760
        %2149 = vmatmul.f32.gmra.mxu0 %v2148
        %v2150 = vpop.f32.mrf.mxu0
        %v2151 = vadd.f32 %v1930, %v2150
        %v2152 = vand.u32 %v185, 4294901760
        %2153 = vmatmul.f32.gmra.mxu0 %v2152
        %v2154 = vpop.f32.mrf.mxu0
        %v2155 = vadd.f32 %v1938, %v2154
        %v2156 = vand.u32 %v187, 4294901760
        %2157 = vmatmul.f32.gmra.mxu0 %v2156
        %v2158 = vpop.f32.mrf.mxu0
        %v2159 = vadd.f32 %v1946, %v2158
        %v2160 = vand.u32 %v189, 4294901760
        %2161 = vmatmul.f32.gmra.mxu0 %v2160
        %v2162 = vpop.f32.mrf.mxu0
        %v2163 = vadd.f32 %v1954, %v2162
        %v2164 = vand.u32 %v191, 4294901760
        %2165 = vmatmul.f32.gmra.mxu0 %v2164
        %v2166 = vpop.f32.mrf.mxu0
        %v2167 = vadd.f32 %v1962, %v2166
        %v2168 = vand.u32 %v193, 4294901760
        %2169 = vmatmul.f32.gmra.mxu0 %v2168
        %v2170 = vpop.f32.mrf.mxu0
        %v2171 = vadd.f32 %v1970, %v2170
        %v2172 = vand.u32 %v195, 4294901760
        %2173 = vmatmul.f32.gmra.mxu0 %v2172
        %v2174 = vpop.f32.mrf.mxu0
        %v2175 = vadd.f32 %v1978, %v2174
        %v2176 = vand.u32 %v197, 4294901760
        %2177 = vmatmul.f32.gmra.mxu0 %v2176
        %v2178 = vpop.f32.mrf.mxu0
        %v2179 = vadd.f32 %v1986, %v2178
        %v2180 = vand.u32 %v199, 4294901760
        %2181 = vmatmul.f32.gmra.mxu0 %v2180
        %v2182 = vpop.f32.mrf.mxu0
        %v2183 = vadd.f32 %v1994, %v2182
        %v2184 = vand.u32 %v201, 4294901760
        %2185 = vmatmul.f32.gmra.mxu0 %v2184
        %v2186 = vpop.f32.mrf.mxu0
        %v2187 = vadd.f32 %v2002, %v2186
        %v2188 = vand.u32 %v203, 4294901760
        %2189 = vmatmul.f32.gmra.mxu0 %v2188
        %v2190 = vpop.f32.mrf.mxu0
        %v2191 = vadd.f32 %v2010, %v2190
        %v2192 = vand.u32 %v205, 4294901760
        %2193 = vmatmul.f32.gmra.mxu0 %v2192
        %v2194 = vpop.f32.mrf.mxu0
        %v2195 = vadd.f32 %v2018, %v2194
        %v2196 = vand.u32 %v207, 4294901760
        %2197 = vmatmul.f32.gmra.mxu0 %v2196
        %v2198 = vpop.f32.mrf.mxu0
        %v2199 = vadd.f32 %v2026, %v2198
        %v2200 = vand.u32 %v209, 4294901760
        %2201 = vmatmul.f32.gmra.mxu0 %v2200
        %v2202 = vpop.f32.mrf.mxu0
        %v2203 = vadd.f32 %v2034, %v2202
        %v2204 = vand.u32 %v211, 4294901760
        %2205 = vmatmul.f32.gmra.mxu0 %v2204
        %v2206 = vpop.f32.mrf.mxu0
        %v2207 = vadd.f32 %v2042, %v2206
        %v2208 = vand.u32 %v213, 4294901760
        %2209 = vmatmul.f32.gmra.mxu0 %v2208
        %v2210 = vpop.f32.mrf.mxu0
        %v2211 = vadd.f32 %v2050, %v2210
        %2212 = vdwg.mxu0
        %v2213 = vand.u32 %v246, 4294901760
        %v2214 = vsub.f32 %v246, %v2213
        %2215 = vmatpush.msra.mxu0 %v2214
        %v2216 = vand.u32 %v244, 4294901760
        %v2217 = vsub.f32 %v244, %v2216
        %2218 = vmatpush.msra.mxu0 %v2217
        %v2219 = vand.u32 %v242, 4294901760
        %v2220 = vsub.f32 %v242, %v2219
        %2221 = vmatpush.msra.mxu0 %v2220
        %v2222 = vand.u32 %v240, 4294901760
        %v2223 = vsub.f32 %v240, %v2222
        %2224 = vmatpush.msra.mxu0 %v2223
        %v2225 = vand.u32 %v238, 4294901760
        %v2226 = vsub.f32 %v238, %v2225
        %2227 = vmatpush.msra.mxu0 %v2226
        %v2228 = vand.u32 %v236, 4294901760
        %v2229 = vsub.f32 %v236, %v2228
        %2230 = vmatpush.msra.mxu0 %v2229
        %v2231 = vand.u32 %v234, 4294901760
        %v2232 = vsub.f32 %v234, %v2231
        %2233 = vmatpush.msra.mxu0 %v2232
        %v2234 = vand.u32 %v232, 4294901760
        %v2235 = vsub.f32 %v232, %v2234
        %2236 = vmatpush.msra.mxu0 %v2235
        %v2237 = vand.u32 %v230, 4294901760
        %v2238 = vsub.f32 %v230, %v2237
        %2239 = vmatpush.msra.mxu0 %v2238
        %v2240 = vand.u32 %v228, 4294901760
        %v2241 = vsub.f32 %v228, %v2240
        %2242 = vmatpush.msra.mxu0 %v2241
        %v2243 = vand.u32 %v226, 4294901760
        %v2244 = vsub.f32 %v226, %v2243
        %2245 = vmatpush.msra.mxu0 %v2244
        %v2246 = vand.u32 %v224, 4294901760
        %v2247 = vsub.f32 %v224, %v2246
        %2248 = vmatpush.msra.mxu0 %v2247
        %v2249 = vand.u32 %v222, 4294901760
        %v2250 = vsub.f32 %v222, %v2249
        %2251 = vmatpush.msra.mxu0 %v2250
        %v2252 = vand.u32 %v220, 4294901760
        %v2253 = vsub.f32 %v220, %v2252
        %2254 = vmatpush.msra.mxu0 %v2253
        %v2255 = vand.u32 %v218, 4294901760
        %v2256 = vsub.f32 %v218, %v2255
        %2257 = vmatpush.msra.mxu0 %v2256
        %v2258 = vand.u32 %v216, 4294901760
        %v2259 = vsub.f32 %v216, %v2258
        %2260 = vmatpush.msra.mxu0 %v2259
        %v2261 = vand.u32 %v183, 4294901760
        %v2262 = vsub.f32 %v183, %v2261
        %2263 = vmatmul.f32.gmra.mxu0 %v2262
        %v2264 = vpop.f32.mrf.mxu0
        %v2265 = vadd.f32 %v2151, %v2264
        %v2266 = vand.u32 %v185, 4294901760
        %v2267 = vsub.f32 %v185, %v2266
        %2268 = vmatmul.f32.gmra.mxu0 %v2267
        %v2269 = vpop.f32.mrf.mxu0
        %v2270 = vadd.f32 %v2155, %v2269
        %v2271 = vand.u32 %v187, 4294901760
        %v2272 = vsub.f32 %v187, %v2271
        %2273 = vmatmul.f32.gmra.mxu0 %v2272
        %v2274 = vpop.f32.mrf.mxu0
        %v2275 = vadd.f32 %v2159, %v2274
        %v2276 = vand.u32 %v189, 4294901760
        %v2277 = vsub.f32 %v189, %v2276
        %2278 = vmatmul.f32.gmra.mxu0 %v2277
        %v2279 = vpop.f32.mrf.mxu0
        %v2280 = vadd.f32 %v2163, %v2279
        %v2281 = vand.u32 %v191, 4294901760
        %v2282 = vsub.f32 %v191, %v2281
        %2283 = vmatmul.f32.gmra.mxu0 %v2282
        %v2284 = vpop.f32.mrf.mxu0
        %v2285 = vadd.f32 %v2167, %v2284
        %v2286 = vand.u32 %v193, 4294901760
        %v2287 = vsub.f32 %v193, %v2286
        %2288 = vmatmul.f32.gmra.mxu0 %v2287
        %v2289 = vpop.f32.mrf.mxu0
        %v2290 = vadd.f32 %v2171, %v2289
        %v2291 = vand.u32 %v195, 4294901760
        %v2292 = vsub.f32 %v195, %v2291
        %2293 = vmatmul.f32.gmra.mxu0 %v2292
        %v2294 = vpop.f32.mrf.mxu0
        %v2295 = vadd.f32 %v2175, %v2294
        %v2296 = vand.u32 %v197, 4294901760
        %v2297 = vsub.f32 %v197, %v2296
        %2298 = vmatmul.f32.gmra.mxu0 %v2297
        %v2299 = vpop.f32.mrf.mxu0
        %v2300 = vadd.f32 %v2179, %v2299
        %v2301 = vand.u32 %v199, 4294901760
        %v2302 = vsub.f32 %v199, %v2301
        %2303 = vmatmul.f32.gmra.mxu0 %v2302
        %v2304 = vpop.f32.mrf.mxu0
        %v2305 = vadd.f32 %v2183, %v2304
        %v2306 = vand.u32 %v201, 4294901760
        %v2307 = vsub.f32 %v201, %v2306
        %2308 = vmatmul.f32.gmra.mxu0 %v2307
        %v2309 = vpop.f32.mrf.mxu0
        %v2310 = vadd.f32 %v2187, %v2309
        %v2311 = vand.u32 %v203, 4294901760
        %v2312 = vsub.f32 %v203, %v2311
        %2313 = vmatmul.f32.gmra.mxu0 %v2312
        %v2314 = vpop.f32.mrf.mxu0
        %v2315 = vadd.f32 %v2191, %v2314
        %v2316 = vand.u32 %v205, 4294901760
        %v2317 = vsub.f32 %v205, %v2316
        %2318 = vmatmul.f32.gmra.mxu0 %v2317
        %v2319 = vpop.f32.mrf.mxu0
        %v2320 = vadd.f32 %v2195, %v2319
        %v2321 = vand.u32 %v207, 4294901760
        %v2322 = vsub.f32 %v207, %v2321
        %2323 = vmatmul.f32.gmra.mxu0 %v2322
        %v2324 = vpop.f32.mrf.mxu0
        %v2325 = vadd.f32 %v2199, %v2324
        %v2326 = vand.u32 %v209, 4294901760
        %v2327 = vsub.f32 %v209, %v2326
        %2328 = vmatmul.f32.gmra.mxu0 %v2327
        %v2329 = vpop.f32.mrf.mxu0
        %v2330 = vadd.f32 %v2203, %v2329
        %v2331 = vand.u32 %v211, 4294901760
        %v2332 = vsub.f32 %v211, %v2331
        %2333 = vmatmul.f32.gmra.mxu0 %v2332
        %v2334 = vpop.f32.mrf.mxu0
        %v2335 = vadd.f32 %v2207, %v2334
        %v2336 = vand.u32 %v213, 4294901760
        %v2337 = vsub.f32 %v213, %v2336
        %2338 = vmatmul.f32.gmra.mxu0 %v2337
        %v2339 = vpop.f32.mrf.mxu0
        %v2340 = vadd.f32 %v2211, %v2339
        %2341 = vdwg.mxu0
        %v2342 = vand.u32 %v246, 4294901760
        %2343 = vmatpush.msra.mxu0 %v2342
        %v2344 = vand.u32 %v244, 4294901760
        %2345 = vmatpush.msra.mxu0 %v2344
        %v2346 = vand.u32 %v242, 4294901760
        %2347 = vmatpush.msra.mxu0 %v2346
        %v2348 = vand.u32 %v240, 4294901760
        %2349 = vmatpush.msra.mxu0 %v2348
        %v2350 = vand.u32 %v238, 4294901760
        %2351 = vmatpush.msra.mxu0 %v2350
        %v2352 = vand.u32 %v236, 4294901760
        %2353 = vmatpush.msra.mxu0 %v2352
        %v2354 = vand.u32 %v234, 4294901760
        %2355 = vmatpush.msra.mxu0 %v2354
        %v2356 = vand.u32 %v232, 4294901760
        %2357 = vmatpush.msra.mxu0 %v2356
        %v2358 = vand.u32 %v230, 4294901760
        %2359 = vmatpush.msra.mxu0 %v2358
        %v2360 = vand.u32 %v228, 4294901760
        %2361 = vmatpush.msra.mxu0 %v2360
        %v2362 = vand.u32 %v226, 4294901760
        %2363 = vmatpush.msra.mxu0 %v2362
        %v2364 = vand.u32 %v224, 4294901760
        %2365 = vmatpush.msra.mxu0 %v2364
        %v2366 = vand.u32 %v222, 4294901760
        %2367 = vmatpush.msra.mxu0 %v2366
        %v2368 = vand.u32 %v220, 4294901760
        %2369 = vmatpush.msra.mxu0 %v2368
        %v2370 = vand.u32 %v218, 4294901760
        %2371 = vmatpush.msra.mxu0 %v2370
        %v2372 = vand.u32 %v216, 4294901760
        %2373 = vmatpush.msra.mxu0 %v2372
        %v2374 = vand.u32 %v183, 4294901760
        %v2375 = vsub.f32 %v183, %v2374
        %v2376 = vand.u32 %v2375, 4294901760
        %2377 = vmatmul.f32.gmra.mxu0 %v2376
        %v2378 = vpop.f32.mrf.mxu0
        %v2379 = vadd.f32 %v2265, %v2378
        %v2380 = vand.u32 %v185, 4294901760
        %v2381 = vsub.f32 %v185, %v2380
        %v2382 = vand.u32 %v2381, 4294901760
        %2383 = vmatmul.f32.gmra.mxu0 %v2382
        %v2384 = vpop.f32.mrf.mxu0
        %v2385 = vadd.f32 %v2270, %v2384
        %v2386 = vand.u32 %v187, 4294901760
        %v2387 = vsub.f32 %v187, %v2386
        %v2388 = vand.u32 %v2387, 4294901760
        %2389 = vmatmul.f32.gmra.mxu0 %v2388
        %v2390 = vpop.f32.mrf.mxu0
        %v2391 = vadd.f32 %v2275, %v2390
        %v2392 = vand.u32 %v189, 4294901760
        %v2393 = vsub.f32 %v189, %v2392
        %v2394 = vand.u32 %v2393, 4294901760
        %2395 = vmatmul.f32.gmra.mxu0 %v2394
        %v2396 = vpop.f32.mrf.mxu0
        %v2397 = vadd.f32 %v2280, %v2396
        %v2398 = vand.u32 %v191, 4294901760
        %v2399 = vsub.f32 %v191, %v2398
        %v2400 = vand.u32 %v2399, 4294901760
        %2401 = vmatmul.f32.gmra.mxu0 %v2400
        %v2402 = vpop.f32.mrf.mxu0
        %v2403 = vadd.f32 %v2285, %v2402
        %v2404 = vand.u32 %v193, 4294901760
        %v2405 = vsub.f32 %v193, %v2404
        %v2406 = vand.u32 %v2405, 4294901760
        %2407 = vmatmul.f32.gmra.mxu0 %v2406
        %v2408 = vpop.f32.mrf.mxu0
        %v2409 = vadd.f32 %v2290, %v2408
        %v2410 = vand.u32 %v195, 4294901760
        %v2411 = vsub.f32 %v195, %v2410
        %v2412 = vand.u32 %v2411, 4294901760
        %2413 = vmatmul.f32.gmra.mxu0 %v2412
        %v2414 = vpop.f32.mrf.mxu0
        %v2415 = vadd.f32 %v2295, %v2414
        %v2416 = vand.u32 %v197, 4294901760
        %v2417 = vsub.f32 %v197, %v2416
        %v2418 = vand.u32 %v2417, 4294901760
        %2419 = vmatmul.f32.gmra.mxu0 %v2418
        %v2420 = vpop.f32.mrf.mxu0
        %v2421 = vadd.f32 %v2300, %v2420
        %v2422 = vand.u32 %v199, 4294901760
        %v2423 = vsub.f32 %v199, %v2422
        %v2424 = vand.u32 %v2423, 4294901760
        %2425 = vmatmul.f32.gmra.mxu0 %v2424
        %v2426 = vpop.f32.mrf.mxu0
        %v2427 = vadd.f32 %v2305, %v2426
        %v2428 = vand.u32 %v201, 4294901760
        %v2429 = vsub.f32 %v201, %v2428
        %v2430 = vand.u32 %v2429, 4294901760
        %2431 = vmatmul.f32.gmra.mxu0 %v2430
        %v2432 = vpop.f32.mrf.mxu0
        %v2433 = vadd.f32 %v2310, %v2432
        %v2434 = vand.u32 %v203, 4294901760
        %v2435 = vsub.f32 %v203, %v2434
        %v2436 = vand.u32 %v2435, 4294901760
        %2437 = vmatmul.f32.gmra.mxu0 %v2436
        %v2438 = vpop.f32.mrf.mxu0
        %v2439 = vadd.f32 %v2315, %v2438
        %v2440 = vand.u32 %v205, 4294901760
        %v2441 = vsub.f32 %v205, %v2440
        %v2442 = vand.u32 %v2441, 4294901760
        %2443 = vmatmul.f32.gmra.mxu0 %v2442
        %v2444 = vpop.f32.mrf.mxu0
        %v2445 = vadd.f32 %v2320, %v2444
        %v2446 = vand.u32 %v207, 4294901760
        %v2447 = vsub.f32 %v207, %v2446
        %v2448 = vand.u32 %v2447, 4294901760
        %2449 = vmatmul.f32.gmra.mxu0 %v2448
        %v2450 = vpop.f32.mrf.mxu0
        %v2451 = vadd.f32 %v2325, %v2450
        %v2452 = vand.u32 %v209, 4294901760
        %v2453 = vsub.f32 %v209, %v2452
        %v2454 = vand.u32 %v2453, 4294901760
        %2455 = vmatmul.f32.gmra.mxu0 %v2454
        %v2456 = vpop.f32.mrf.mxu0
        %v2457 = vadd.f32 %v2330, %v2456
        %v2458 = vand.u32 %v211, 4294901760
        %v2459 = vsub.f32 %v211, %v2458
        %v2460 = vand.u32 %v2459, 4294901760
        %2461 = vmatmul.f32.gmra.mxu0 %v2460
        %v2462 = vpop.f32.mrf.mxu0
        %v2463 = vadd.f32 %v2335, %v2462
        %v2464 = vand.u32 %v213, 4294901760
        %v2465 = vsub.f32 %v213, %v2464
        %v2466 = vand.u32 %v2465, 4294901760
        %2467 = vmatmul.f32.gmra.mxu0 %v2466
        %v2468 = vpop.f32.mrf.mxu0
        %v2469 = vadd.f32 %v2340, %v2468
        %2470 = vdwg.mxu0
        %v2471 = vand.u32 %v246, 4294901760
        %v2472 = vsub.f32 %v246, %v2471
        %v2473 = vand.u32 %v2472, 4294901760
        %2474 = vmatpush.msra.mxu0 %v2473
        %v2475 = vand.u32 %v244, 4294901760
        %v2476 = vsub.f32 %v244, %v2475
        %v2477 = vand.u32 %v2476, 4294901760
        %2478 = vmatpush.msra.mxu0 %v2477
        %v2479 = vand.u32 %v242, 4294901760
        %v2480 = vsub.f32 %v242, %v2479
        %v2481 = vand.u32 %v2480, 4294901760
        %2482 = vmatpush.msra.mxu0 %v2481
        %v2483 = vand.u32 %v240, 4294901760
        %v2484 = vsub.f32 %v240, %v2483
        %v2485 = vand.u32 %v2484, 4294901760
        %2486 = vmatpush.msra.mxu0 %v2485
        %v2487 = vand.u32 %v238, 4294901760
        %v2488 = vsub.f32 %v238, %v2487
        %v2489 = vand.u32 %v2488, 4294901760
        %2490 = vmatpush.msra.mxu0 %v2489
        %v2491 = vand.u32 %v236, 4294901760
        %v2492 = vsub.f32 %v236, %v2491
        %v2493 = vand.u32 %v2492, 4294901760
        %2494 = vmatpush.msra.mxu0 %v2493
        %v2495 = vand.u32 %v234, 4294901760
        %v2496 = vsub.f32 %v234, %v2495
        %v2497 = vand.u32 %v2496, 4294901760
        %2498 = vmatpush.msra.mxu0 %v2497
        %v2499 = vand.u32 %v232, 4294901760
        %v2500 = vsub.f32 %v232, %v2499
        %v2501 = vand.u32 %v2500, 4294901760
        %2502 = vmatpush.msra.mxu0 %v2501
        %v2503 = vand.u32 %v230, 4294901760
        %v2504 = vsub.f32 %v230, %v2503
        %v2505 = vand.u32 %v2504, 4294901760
        %2506 = vmatpush.msra.mxu0 %v2505
        %v2507 = vand.u32 %v228, 4294901760
        %v2508 = vsub.f32 %v228, %v2507
        %v2509 = vand.u32 %v2508, 4294901760
        %2510 = vmatpush.msra.mxu0 %v2509
        %v2511 = vand.u32 %v226, 4294901760
        %v2512 = vsub.f32 %v226, %v2511
        %v2513 = vand.u32 %v2512, 4294901760
        %2514 = vmatpush.msra.mxu0 %v2513
        %v2515 = vand.u32 %v224, 4294901760
        %v2516 = vsub.f32 %v224, %v2515
        %v2517 = vand.u32 %v2516, 4294901760
        %2518 = vmatpush.msra.mxu0 %v2517
        %v2519 = vand.u32 %v222, 4294901760
        %v2520 = vsub.f32 %v222, %v2519
        %v2521 = vand.u32 %v2520, 4294901760
        %2522 = vmatpush.msra.mxu0 %v2521
        %v2523 = vand.u32 %v220, 4294901760
        %v2524 = vsub.f32 %v220, %v2523
        %v2525 = vand.u32 %v2524, 4294901760
        %2526 = vmatpush.msra.mxu0 %v2525
        %v2527 = vand.u32 %v218, 4294901760
        %v2528 = vsub.f32 %v218, %v2527
        %v2529 = vand.u32 %v2528, 4294901760
        %2530 = vmatpush.msra.mxu0 %v2529
        %v2531 = vand.u32 %v216, 4294901760
        %v2532 = vsub.f32 %v216, %v2531
        %v2533 = vand.u32 %v2532, 4294901760
        %2534 = vmatpush.msra.mxu0 %v2533
        %v2535 = vand.u32 %v183, 4294901760
        %2536 = vmatmul.f32.gmra.mxu0 %v2535
        %v2537 = vpop.f32.mrf.mxu0
        %v2538 = vadd.f32 %v2379, %v2537
        %v2539 = vand.u32 %v185, 4294901760
        %2540 = vmatmul.f32.gmra.mxu0 %v2539
        %v2541 = vpop.f32.mrf.mxu0
        %v2542 = vadd.f32 %v2385, %v2541
        %v2543 = vand.u32 %v187, 4294901760
        %2544 = vmatmul.f32.gmra.mxu0 %v2543
        %v2545 = vpop.f32.mrf.mxu0
        %v2546 = vadd.f32 %v2391, %v2545
        %v2547 = vand.u32 %v189, 4294901760
        %2548 = vmatmul.f32.gmra.mxu0 %v2547
        %v2549 = vpop.f32.mrf.mxu0
        %v2550 = vadd.f32 %v2397, %v2549
        %v2551 = vand.u32 %v191, 4294901760
        %2552 = vmatmul.f32.gmra.mxu0 %v2551
        %v2553 = vpop.f32.mrf.mxu0
        %v2554 = vadd.f32 %v2403, %v2553
        %v2555 = vand.u32 %v193, 4294901760
        %2556 = vmatmul.f32.gmra.mxu0 %v2555
        %v2557 = vpop.f32.mrf.mxu0
        %v2558 = vadd.f32 %v2409, %v2557
        %v2559 = vand.u32 %v195, 4294901760
        %2560 = vmatmul.f32.gmra.mxu0 %v2559
        %v2561 = vpop.f32.mrf.mxu0
        %v2562 = vadd.f32 %v2415, %v2561
        %v2563 = vand.u32 %v197, 4294901760
        %2564 = vmatmul.f32.gmra.mxu0 %v2563
        %v2565 = vpop.f32.mrf.mxu0
        %v2566 = vadd.f32 %v2421, %v2565
        %v2567 = vand.u32 %v199, 4294901760
        %2568 = vmatmul.f32.gmra.mxu0 %v2567
        %v2569 = vpop.f32.mrf.mxu0
        %v2570 = vadd.f32 %v2427, %v2569
        %v2571 = vand.u32 %v201, 4294901760
        %2572 = vmatmul.f32.gmra.mxu0 %v2571
        %v2573 = vpop.f32.mrf.mxu0
        %v2574 = vadd.f32 %v2433, %v2573
        %v2575 = vand.u32 %v203, 4294901760
        %2576 = vmatmul.f32.gmra.mxu0 %v2575
        %v2577 = vpop.f32.mrf.mxu0
        %v2578 = vadd.f32 %v2439, %v2577
        %v2579 = vand.u32 %v205, 4294901760
        %2580 = vmatmul.f32.gmra.mxu0 %v2579
        %v2581 = vpop.f32.mrf.mxu0
        %v2582 = vadd.f32 %v2445, %v2581
        %v2583 = vand.u32 %v207, 4294901760
        %2584 = vmatmul.f32.gmra.mxu0 %v2583
        %v2585 = vpop.f32.mrf.mxu0
        %v2586 = vadd.f32 %v2451, %v2585
        %v2587 = vand.u32 %v209, 4294901760
        %2588 = vmatmul.f32.gmra.mxu0 %v2587
        %v2589 = vpop.f32.mrf.mxu0
        %v2590 = vadd.f32 %v2457, %v2589
        %v2591 = vand.u32 %v211, 4294901760
        %2592 = vmatmul.f32.gmra.mxu0 %v2591
        %v2593 = vpop.f32.mrf.mxu0
        %v2594 = vadd.f32 %v2463, %v2593
        %v2595 = vand.u32 %v213, 4294901760
        %2596 = vmatmul.f32.gmra.mxu0 %v2595
        %v2597 = vpop.f32.mrf.mxu0
        %v2598 = vadd.f32 %v2469, %v2597
        %2599 = vdwg.mxu0
        %v2600 = vand.u32 %v246, 4294901760
        %2601 = vmatpush.msra.mxu0 %v2600
        %v2602 = vand.u32 %v244, 4294901760
        %2603 = vmatpush.msra.mxu0 %v2602
        %v2604 = vand.u32 %v242, 4294901760
        %2605 = vmatpush.msra.mxu0 %v2604
        %v2606 = vand.u32 %v240, 4294901760
        %2607 = vmatpush.msra.mxu0 %v2606
        %v2608 = vand.u32 %v238, 4294901760
        %2609 = vmatpush.msra.mxu0 %v2608
        %v2610 = vand.u32 %v236, 4294901760
        %2611 = vmatpush.msra.mxu0 %v2610
        %v2612 = vand.u32 %v234, 4294901760
        %2613 = vmatpush.msra.mxu0 %v2612
        %v2614 = vand.u32 %v232, 4294901760
        %2615 = vmatpush.msra.mxu0 %v2614
        %v2616 = vand.u32 %v230, 4294901760
        %2617 = vmatpush.msra.mxu0 %v2616
        %v2618 = vand.u32 %v228, 4294901760
        %2619 = vmatpush.msra.mxu0 %v2618
        %v2620 = vand.u32 %v226, 4294901760
        %2621 = vmatpush.msra.mxu0 %v2620
        %v2622 = vand.u32 %v224, 4294901760
        %2623 = vmatpush.msra.mxu0 %v2622
        %v2624 = vand.u32 %v222, 4294901760
        %2625 = vmatpush.msra.mxu0 %v2624
        %v2626 = vand.u32 %v220, 4294901760
        %2627 = vmatpush.msra.mxu0 %v2626
        %v2628 = vand.u32 %v218, 4294901760
        %2629 = vmatpush.msra.mxu0 %v2628
        %v2630 = vand.u32 %v216, 4294901760
        %2631 = vmatpush.msra.mxu0 %v2630
        %v2632 = vand.u32 %v183, 4294901760
        %2633 = vmatmul.f32.gmra.mxu0 %v2632
        %v2634 = vpop.f32.mrf.mxu0
        %v2635 = vadd.f32 %v2538, %v2634
        %v2636 = vand.u32 %v185, 4294901760
        %2637 = vmatmul.f32.gmra.mxu0 %v2636
        %v2638 = vpop.f32.mrf.mxu0
        %v2639 = vadd.f32 %v2542, %v2638
        %v2640 = vand.u32 %v187, 4294901760
        %2641 = vmatmul.f32.gmra.mxu0 %v2640
        %v2642 = vpop.f32.mrf.mxu0
        %v2643 = vadd.f32 %v2546, %v2642
        %v2644 = vand.u32 %v189, 4294901760
        %2645 = vmatmul.f32.gmra.mxu0 %v2644
        %v2646 = vpop.f32.mrf.mxu0
        %v2647 = vadd.f32 %v2550, %v2646
        %v2648 = vand.u32 %v191, 4294901760
        %2649 = vmatmul.f32.gmra.mxu0 %v2648
        %v2650 = vpop.f32.mrf.mxu0
        %v2651 = vadd.f32 %v2554, %v2650
        %v2652 = vand.u32 %v193, 4294901760
        %2653 = vmatmul.f32.gmra.mxu0 %v2652
        %v2654 = vpop.f32.mrf.mxu0
        %v2655 = vadd.f32 %v2558, %v2654
        %v2656 = vand.u32 %v195, 4294901760
        %2657 = vmatmul.f32.gmra.mxu0 %v2656
        %v2658 = vpop.f32.mrf.mxu0
        %v2659 = vadd.f32 %v2562, %v2658
        %v2660 = vand.u32 %v197, 4294901760
        %2661 = vmatmul.f32.gmra.mxu0 %v2660
        %v2662 = vpop.f32.mrf.mxu0
        %v2663 = vadd.f32 %v2566, %v2662
        %v2664 = vand.u32 %v199, 4294901760
        %2665 = vmatmul.f32.gmra.mxu0 %v2664
        %v2666 = vpop.f32.mrf.mxu0
        %v2667 = vadd.f32 %v2570, %v2666
        %v2668 = vand.u32 %v201, 4294901760
        %2669 = vmatmul.f32.gmra.mxu0 %v2668
        %v2670 = vpop.f32.mrf.mxu0
        %v2671 = vadd.f32 %v2574, %v2670
        %v2672 = vand.u32 %v203, 4294901760
        %2673 = vmatmul.f32.gmra.mxu0 %v2672
        %v2674 = vpop.f32.mrf.mxu0
        %v2675 = vadd.f32 %v2578, %v2674
        %v2676 = vand.u32 %v205, 4294901760
        %2677 = vmatmul.f32.gmra.mxu0 %v2676
        %v2678 = vpop.f32.mrf.mxu0
        %v2679 = vadd.f32 %v2582, %v2678
        %v2680 = vand.u32 %v207, 4294901760
        %2681 = vmatmul.f32.gmra.mxu0 %v2680
        %v2682 = vpop.f32.mrf.mxu0
        %v2683 = vadd.f32 %v2586, %v2682
        %v2684 = vand.u32 %v209, 4294901760
        %2685 = vmatmul.f32.gmra.mxu0 %v2684
        %v2686 = vpop.f32.mrf.mxu0
        %v2687 = vadd.f32 %v2590, %v2686
        %v2688 = vand.u32 %v211, 4294901760
        %2689 = vmatmul.f32.gmra.mxu0 %v2688
        %v2690 = vpop.f32.mrf.mxu0
        %v2691 = vadd.f32 %v2594, %v2690
        %v2692 = vand.u32 %v213, 4294901760
        %2693 = vmatmul.f32.gmra.mxu0 %v2692
        %v2694 = vpop.f32.mrf.mxu0
        %v2695 = vadd.f32 %v2598, %v2694
        %2696 = vdwg.mxu0
        %v2697 = vand.u32 %v278, 4294901760
        %2698 = vmatpush.msra.mxu0 %v2697
        %v2699 = vand.u32 %v276, 4294901760
        %2700 = vmatpush.msra.mxu0 %v2699
        %v2701 = vand.u32 %v274, 4294901760
        %2702 = vmatpush.msra.mxu0 %v2701
        %v2703 = vand.u32 %v272, 4294901760
        %2704 = vmatpush.msra.mxu0 %v2703
        %v2705 = vand.u32 %v270, 4294901760
        %2706 = vmatpush.msra.mxu0 %v2705
        %v2707 = vand.u32 %v268, 4294901760
        %2708 = vmatpush.msra.mxu0 %v2707
        %v2709 = vand.u32 %v266, 4294901760
        %2710 = vmatpush.msra.mxu0 %v2709
        %v2711 = vand.u32 %v264, 4294901760
        %2712 = vmatpush.msra.mxu0 %v2711
        %v2713 = vand.u32 %v262, 4294901760
        %2714 = vmatpush.msra.mxu0 %v2713
        %v2715 = vand.u32 %v260, 4294901760
        %2716 = vmatpush.msra.mxu0 %v2715
        %v2717 = vand.u32 %v258, 4294901760
        %2718 = vmatpush.msra.mxu0 %v2717
        %v2719 = vand.u32 %v256, 4294901760
        %2720 = vmatpush.msra.mxu0 %v2719
        %v2721 = vand.u32 %v254, 4294901760
        %2722 = vmatpush.msra.mxu0 %v2721
        %v2723 = vand.u32 %v252, 4294901760
        %2724 = vmatpush.msra.mxu0 %v2723
        %v2725 = vand.u32 %v250, 4294901760
        %2726 = vmatpush.msra.mxu0 %v2725
        %v2727 = vand.u32 %v248, 4294901760
        %2728 = vmatpush.msra.mxu0 %v2727
        %v2729 = vand.u32 %v184, 4294901760
        %v2730 = vsub.f32 %v184, %v2729
        %v2731 = vand.u32 %v2730, 4294901760
        %v2732 = vsub.f32 %v2730, %v2731
        %v2733 = vand.u32 %v2732, 4294901760
        %2734 = vmatmul.f32.gmra.mxu0 %v2733
        %v2735 = vpop.f32.mrf.mxu0
        %v2736 = vadd.f32 %v2635, %v2735
        %v2737 = vand.u32 %v186, 4294901760
        %v2738 = vsub.f32 %v186, %v2737
        %v2739 = vand.u32 %v2738, 4294901760
        %v2740 = vsub.f32 %v2738, %v2739
        %v2741 = vand.u32 %v2740, 4294901760
        %2742 = vmatmul.f32.gmra.mxu0 %v2741
        %v2743 = vpop.f32.mrf.mxu0
        %v2744 = vadd.f32 %v2639, %v2743
        %v2745 = vand.u32 %v188, 4294901760
        %v2746 = vsub.f32 %v188, %v2745
        %v2747 = vand.u32 %v2746, 4294901760
        %v2748 = vsub.f32 %v2746, %v2747
        %v2749 = vand.u32 %v2748, 4294901760
        %2750 = vmatmul.f32.gmra.mxu0 %v2749
        %v2751 = vpop.f32.mrf.mxu0
        %v2752 = vadd.f32 %v2643, %v2751
        %v2753 = vand.u32 %v190, 4294901760
        %v2754 = vsub.f32 %v190, %v2753
        %v2755 = vand.u32 %v2754, 4294901760
        %v2756 = vsub.f32 %v2754, %v2755
        %v2757 = vand.u32 %v2756, 4294901760
        %2758 = vmatmul.f32.gmra.mxu0 %v2757
        %v2759 = vpop.f32.mrf.mxu0
        %v2760 = vadd.f32 %v2647, %v2759
        %v2761 = vand.u32 %v192, 4294901760
        %v2762 = vsub.f32 %v192, %v2761
        %v2763 = vand.u32 %v2762, 4294901760
        %v2764 = vsub.f32 %v2762, %v2763
        %v2765 = vand.u32 %v2764, 4294901760
        %2766 = vmatmul.f32.gmra.mxu0 %v2765
        %v2767 = vpop.f32.mrf.mxu0
        %v2768 = vadd.f32 %v2651, %v2767
        %v2769 = vand.u32 %v194, 4294901760
        %v2770 = vsub.f32 %v194, %v2769
        %v2771 = vand.u32 %v2770, 4294901760
        %v2772 = vsub.f32 %v2770, %v2771
        %v2773 = vand.u32 %v2772, 4294901760
        %2774 = vmatmul.f32.gmra.mxu0 %v2773
        %v2775 = vpop.f32.mrf.mxu0
        %v2776 = vadd.f32 %v2655, %v2775
        %v2777 = vand.u32 %v196, 4294901760
        %v2778 = vsub.f32 %v196, %v2777
        %v2779 = vand.u32 %v2778, 4294901760
        %v2780 = vsub.f32 %v2778, %v2779
        %v2781 = vand.u32 %v2780, 4294901760
        %2782 = vmatmul.f32.gmra.mxu0 %v2781
        %v2783 = vpop.f32.mrf.mxu0
        %v2784 = vadd.f32 %v2659, %v2783
        %v2785 = vand.u32 %v198, 4294901760
        %v2786 = vsub.f32 %v198, %v2785
        %v2787 = vand.u32 %v2786, 4294901760
        %v2788 = vsub.f32 %v2786, %v2787
        %v2789 = vand.u32 %v2788, 4294901760
        %2790 = vmatmul.f32.gmra.mxu0 %v2789
        %v2791 = vpop.f32.mrf.mxu0
        %v2792 = vadd.f32 %v2663, %v2791
        %v2793 = vand.u32 %v200, 4294901760
        %v2794 = vsub.f32 %v200, %v2793
        %v2795 = vand.u32 %v2794, 4294901760
        %v2796 = vsub.f32 %v2794, %v2795
        %v2797 = vand.u32 %v2796, 4294901760
        %2798 = vmatmul.f32.gmra.mxu0 %v2797
        %v2799 = vpop.f32.mrf.mxu0
        %v2800 = vadd.f32 %v2667, %v2799
        %v2801 = vand.u32 %v202, 4294901760
        %v2802 = vsub.f32 %v202, %v2801
        %v2803 = vand.u32 %v2802, 4294901760
        %v2804 = vsub.f32 %v2802, %v2803
        %v2805 = vand.u32 %v2804, 4294901760
        %2806 = vmatmul.f32.gmra.mxu0 %v2805
        %v2807 = vpop.f32.mrf.mxu0
        %v2808 = vadd.f32 %v2671, %v2807
        %v2809 = vand.u32 %v204, 4294901760
        %v2810 = vsub.f32 %v204, %v2809
        %v2811 = vand.u32 %v2810, 4294901760
        %v2812 = vsub.f32 %v2810, %v2811
        %v2813 = vand.u32 %v2812, 4294901760
        %2814 = vmatmul.f32.gmra.mxu0 %v2813
        %v2815 = vpop.f32.mrf.mxu0
        %v2816 = vadd.f32 %v2675, %v2815
        %v2817 = vand.u32 %v206, 4294901760
        %v2818 = vsub.f32 %v206, %v2817
        %v2819 = vand.u32 %v2818, 4294901760
        %v2820 = vsub.f32 %v2818, %v2819
        %v2821 = vand.u32 %v2820, 4294901760
        %2822 = vmatmul.f32.gmra.mxu0 %v2821
        %v2823 = vpop.f32.mrf.mxu0
        %v2824 = vadd.f32 %v2679, %v2823
        %v2825 = vand.u32 %v208, 4294901760
        %v2826 = vsub.f32 %v208, %v2825
        %v2827 = vand.u32 %v2826, 4294901760
        %v2828 = vsub.f32 %v2826, %v2827
        %v2829 = vand.u32 %v2828, 4294901760
        %2830 = vmatmul.f32.gmra.mxu0 %v2829
        %v2831 = vpop.f32.mrf.mxu0
        %v2832 = vadd.f32 %v2683, %v2831
        %v2833 = vand.u32 %v210, 4294901760
        %v2834 = vsub.f32 %v210, %v2833
        %v2835 = vand.u32 %v2834, 4294901760
        %v2836 = vsub.f32 %v2834, %v2835
        %v2837 = vand.u32 %v2836, 4294901760
        %2838 = vmatmul.f32.gmra.mxu0 %v2837
        %v2839 = vpop.f32.mrf.mxu0
        %v2840 = vadd.f32 %v2687, %v2839
        %v2841 = vand.u32 %v212, 4294901760
        %v2842 = vsub.f32 %v212, %v2841
        %v2843 = vand.u32 %v2842, 4294901760
        %v2844 = vsub.f32 %v2842, %v2843
        %v2845 = vand.u32 %v2844, 4294901760
        %2846 = vmatmul.f32.gmra.mxu0 %v2845
        %v2847 = vpop.f32.mrf.mxu0
        %v2848 = vadd.f32 %v2691, %v2847
        %v2849 = vand.u32 %v214, 4294901760
        %v2850 = vsub.f32 %v214, %v2849
        %v2851 = vand.u32 %v2850, 4294901760
        %v2852 = vsub.f32 %v2850, %v2851
        %v2853 = vand.u32 %v2852, 4294901760
        %2854 = vmatmul.f32.gmra.mxu0 %v2853
        %v2855 = vpop.f32.mrf.mxu0
        %v2856 = vadd.f32 %v2695, %v2855
        %2857 = vdwg.mxu0
        %v2858 = vand.u32 %v278, 4294901760
        %v2859 = vsub.f32 %v278, %v2858
        %v2860 = vand.u32 %v2859, 4294901760
        %v2861 = vsub.f32 %v2859, %v2860
        %v2862 = vand.u32 %v2861, 4294901760
        %2863 = vmatpush.msra.mxu0 %v2862
        %v2864 = vand.u32 %v276, 4294901760
        %v2865 = vsub.f32 %v276, %v2864
        %v2866 = vand.u32 %v2865, 4294901760
        %v2867 = vsub.f32 %v2865, %v2866
        %v2868 = vand.u32 %v2867, 4294901760
        %2869 = vmatpush.msra.mxu0 %v2868
        %v2870 = vand.u32 %v274, 4294901760
        %v2871 = vsub.f32 %v274, %v2870
        %v2872 = vand.u32 %v2871, 4294901760
        %v2873 = vsub.f32 %v2871, %v2872
        %v2874 = vand.u32 %v2873, 4294901760
        %2875 = vmatpush.msra.mxu0 %v2874
        %v2876 = vand.u32 %v272, 4294901760
        %v2877 = vsub.f32 %v272, %v2876
        %v2878 = vand.u32 %v2877, 4294901760
        %v2879 = vsub.f32 %v2877, %v2878
        %v2880 = vand.u32 %v2879, 4294901760
        %2881 = vmatpush.msra.mxu0 %v2880
        %v2882 = vand.u32 %v270, 4294901760
        %v2883 = vsub.f32 %v270, %v2882
        %v2884 = vand.u32 %v2883, 4294901760
        %v2885 = vsub.f32 %v2883, %v2884
        %v2886 = vand.u32 %v2885, 4294901760
        %2887 = vmatpush.msra.mxu0 %v2886
        %v2888 = vand.u32 %v268, 4294901760
        %v2889 = vsub.f32 %v268, %v2888
        %v2890 = vand.u32 %v2889, 4294901760
        %v2891 = vsub.f32 %v2889, %v2890
        %v2892 = vand.u32 %v2891, 4294901760
        %2893 = vmatpush.msra.mxu0 %v2892
        %v2894 = vand.u32 %v266, 4294901760
        %v2895 = vsub.f32 %v266, %v2894
        %v2896 = vand.u32 %v2895, 4294901760
        %v2897 = vsub.f32 %v2895, %v2896
        %v2898 = vand.u32 %v2897, 4294901760
        %2899 = vmatpush.msra.mxu0 %v2898
        %v2900 = vand.u32 %v264, 4294901760
        %v2901 = vsub.f32 %v264, %v2900
        %v2902 = vand.u32 %v2901, 4294901760
        %v2903 = vsub.f32 %v2901, %v2902
        %v2904 = vand.u32 %v2903, 4294901760
        %2905 = vmatpush.msra.mxu0 %v2904
        %v2906 = vand.u32 %v262, 4294901760
        %v2907 = vsub.f32 %v262, %v2906
        %v2908 = vand.u32 %v2907, 4294901760
        %v2909 = vsub.f32 %v2907, %v2908
        %v2910 = vand.u32 %v2909, 4294901760
        %2911 = vmatpush.msra.mxu0 %v2910
        %v2912 = vand.u32 %v260, 4294901760
        %v2913 = vsub.f32 %v260, %v2912
        %v2914 = vand.u32 %v2913, 4294901760
        %v2915 = vsub.f32 %v2913, %v2914
        %v2916 = vand.u32 %v2915, 4294901760
        %2917 = vmatpush.msra.mxu0 %v2916
        %v2918 = vand.u32 %v258, 4294901760
        %v2919 = vsub.f32 %v258, %v2918
        %v2920 = vand.u32 %v2919, 4294901760
        %v2921 = vsub.f32 %v2919, %v2920
        %v2922 = vand.u32 %v2921, 4294901760
        %2923 = vmatpush.msra.mxu0 %v2922
        %v2924 = vand.u32 %v256, 4294901760
        %v2925 = vsub.f32 %v256, %v2924
        %v2926 = vand.u32 %v2925, 4294901760
        %v2927 = vsub.f32 %v2925, %v2926
        %v2928 = vand.u32 %v2927, 4294901760
        %2929 = vmatpush.msra.mxu0 %v2928
        %v2930 = vand.u32 %v254, 4294901760
        %v2931 = vsub.f32 %v254, %v2930
        %v2932 = vand.u32 %v2931, 4294901760
        %v2933 = vsub.f32 %v2931, %v2932
        %v2934 = vand.u32 %v2933, 4294901760
        %2935 = vmatpush.msra.mxu0 %v2934
        %v2936 = vand.u32 %v252, 4294901760
        %v2937 = vsub.f32 %v252, %v2936
        %v2938 = vand.u32 %v2937, 4294901760
        %v2939 = vsub.f32 %v2937, %v2938
        %v2940 = vand.u32 %v2939, 4294901760
        %2941 = vmatpush.msra.mxu0 %v2940
        %v2942 = vand.u32 %v250, 4294901760
        %v2943 = vsub.f32 %v250, %v2942
        %v2944 = vand.u32 %v2943, 4294901760
        %v2945 = vsub.f32 %v2943, %v2944
        %v2946 = vand.u32 %v2945, 4294901760
        %2947 = vmatpush.msra.mxu0 %v2946
        %v2948 = vand.u32 %v248, 4294901760
        %v2949 = vsub.f32 %v248, %v2948
        %v2950 = vand.u32 %v2949, 4294901760
        %v2951 = vsub.f32 %v2949, %v2950
        %v2952 = vand.u32 %v2951, 4294901760
        %2953 = vmatpush.msra.mxu0 %v2952
        %v2954 = vand.u32 %v184, 4294901760
        %2955 = vmatmul.f32.gmra.mxu0 %v2954
        %v2956 = vpop.f32.mrf.mxu0
        %v2957 = vadd.f32 %v2736, %v2956
        %v2958 = vand.u32 %v186, 4294901760
        %2959 = vmatmul.f32.gmra.mxu0 %v2958
        %v2960 = vpop.f32.mrf.mxu0
        %v2961 = vadd.f32 %v2744, %v2960
        %v2962 = vand.u32 %v188, 4294901760
        %2963 = vmatmul.f32.gmra.mxu0 %v2962
        %v2964 = vpop.f32.mrf.mxu0
        %v2965 = vadd.f32 %v2752, %v2964
        %v2966 = vand.u32 %v190, 4294901760
        %2967 = vmatmul.f32.gmra.mxu0 %v2966
        %v2968 = vpop.f32.mrf.mxu0
        %v2969 = vadd.f32 %v2760, %v2968
        %v2970 = vand.u32 %v192, 4294901760
        %2971 = vmatmul.f32.gmra.mxu0 %v2970
        %v2972 = vpop.f32.mrf.mxu0
        %v2973 = vadd.f32 %v2768, %v2972
        %v2974 = vand.u32 %v194, 4294901760
        %2975 = vmatmul.f32.gmra.mxu0 %v2974
        %v2976 = vpop.f32.mrf.mxu0
        %v2977 = vadd.f32 %v2776, %v2976
        %v2978 = vand.u32 %v196, 4294901760
        %2979 = vmatmul.f32.gmra.mxu0 %v2978
        %v2980 = vpop.f32.mrf.mxu0
        %v2981 = vadd.f32 %v2784, %v2980
        %v2982 = vand.u32 %v198, 4294901760
        %2983 = vmatmul.f32.gmra.mxu0 %v2982
        %v2984 = vpop.f32.mrf.mxu0
        %v2985 = vadd.f32 %v2792, %v2984
        %v2986 = vand.u32 %v200, 4294901760
        %2987 = vmatmul.f32.gmra.mxu0 %v2986
        %v2988 = vpop.f32.mrf.mxu0
        %v2989 = vadd.f32 %v2800, %v2988
        %v2990 = vand.u32 %v202, 4294901760
        %2991 = vmatmul.f32.gmra.mxu0 %v2990
        %v2992 = vpop.f32.mrf.mxu0
        %v2993 = vadd.f32 %v2808, %v2992
        %v2994 = vand.u32 %v204, 4294901760
        %2995 = vmatmul.f32.gmra.mxu0 %v2994
        %v2996 = vpop.f32.mrf.mxu0
        %v2997 = vadd.f32 %v2816, %v2996
        %v2998 = vand.u32 %v206, 4294901760
        %2999 = vmatmul.f32.gmra.mxu0 %v2998
        %v3000 = vpop.f32.mrf.mxu0
        %v3001 = vadd.f32 %v2824, %v3000
        %v3002 = vand.u32 %v208, 4294901760
        %3003 = vmatmul.f32.gmra.mxu0 %v3002
        %v3004 = vpop.f32.mrf.mxu0
        %v3005 = vadd.f32 %v2832, %v3004
        %v3006 = vand.u32 %v210, 4294901760
        %3007 = vmatmul.f32.gmra.mxu0 %v3006
        %v3008 = vpop.f32.mrf.mxu0
        %v3009 = vadd.f32 %v2840, %v3008
        %v3010 = vand.u32 %v212, 4294901760
        %3011 = vmatmul.f32.gmra.mxu0 %v3010
        %v3012 = vpop.f32.mrf.mxu0
        %v3013 = vadd.f32 %v2848, %v3012
        %v3014 = vand.u32 %v214, 4294901760
        %3015 = vmatmul.f32.gmra.mxu0 %v3014
        %v3016 = vpop.f32.mrf.mxu0
        %v3017 = vadd.f32 %v2856, %v3016
        %3018 = vdwg.mxu0
        %v3019 = vand.u32 %v278, 4294901760
        %v3020 = vsub.f32 %v278, %v3019
        %3021 = vmatpush.msra.mxu0 %v3020
        %v3022 = vand.u32 %v276, 4294901760
        %v3023 = vsub.f32 %v276, %v3022
        %3024 = vmatpush.msra.mxu0 %v3023
        %v3025 = vand.u32 %v274, 4294901760
        %v3026 = vsub.f32 %v274, %v3025
        %3027 = vmatpush.msra.mxu0 %v3026
        %v3028 = vand.u32 %v272, 4294901760
        %v3029 = vsub.f32 %v272, %v3028
        %3030 = vmatpush.msra.mxu0 %v3029
        %v3031 = vand.u32 %v270, 4294901760
        %v3032 = vsub.f32 %v270, %v3031
        %3033 = vmatpush.msra.mxu0 %v3032
        %v3034 = vand.u32 %v268, 4294901760
        %v3035 = vsub.f32 %v268, %v3034
        %3036 = vmatpush.msra.mxu0 %v3035
        %v3037 = vand.u32 %v266, 4294901760
        %v3038 = vsub.f32 %v266, %v3037
        %3039 = vmatpush.msra.mxu0 %v3038
        %v3040 = vand.u32 %v264, 4294901760
        %v3041 = vsub.f32 %v264, %v3040
        %3042 = vmatpush.msra.mxu0 %v3041
        %v3043 = vand.u32 %v262, 4294901760
        %v3044 = vsub.f32 %v262, %v3043
        %3045 = vmatpush.msra.mxu0 %v3044
        %v3046 = vand.u32 %v260, 4294901760
        %v3047 = vsub.f32 %v260, %v3046
        %3048 = vmatpush.msra.mxu0 %v3047
        %v3049 = vand.u32 %v258, 4294901760
        %v3050 = vsub.f32 %v258, %v3049
        %3051 = vmatpush.msra.mxu0 %v3050
        %v3052 = vand.u32 %v256, 4294901760
        %v3053 = vsub.f32 %v256, %v3052
        %3054 = vmatpush.msra.mxu0 %v3053
        %v3055 = vand.u32 %v254, 4294901760
        %v3056 = vsub.f32 %v254, %v3055
        %3057 = vmatpush.msra.mxu0 %v3056
        %v3058 = vand.u32 %v252, 4294901760
        %v3059 = vsub.f32 %v252, %v3058
        %3060 = vmatpush.msra.mxu0 %v3059
        %v3061 = vand.u32 %v250, 4294901760
        %v3062 = vsub.f32 %v250, %v3061
        %3063 = vmatpush.msra.mxu0 %v3062
        %v3064 = vand.u32 %v248, 4294901760
        %v3065 = vsub.f32 %v248, %v3064
        %3066 = vmatpush.msra.mxu0 %v3065
        %v3067 = vand.u32 %v184, 4294901760
        %v3068 = vsub.f32 %v184, %v3067
        %3069 = vmatmul.f32.gmra.mxu0 %v3068
        %v3070 = vpop.f32.mrf.mxu0
        %v3071 = vadd.f32 %v2957, %v3070
        %v3072 = vand.u32 %v186, 4294901760
        %v3073 = vsub.f32 %v186, %v3072
        %3074 = vmatmul.f32.gmra.mxu0 %v3073
        %v3075 = vpop.f32.mrf.mxu0
        %v3076 = vadd.f32 %v2961, %v3075
        %v3077 = vand.u32 %v188, 4294901760
        %v3078 = vsub.f32 %v188, %v3077
        %3079 = vmatmul.f32.gmra.mxu0 %v3078
        %v3080 = vpop.f32.mrf.mxu0
        %v3081 = vadd.f32 %v2965, %v3080
        %v3082 = vand.u32 %v190, 4294901760
        %v3083 = vsub.f32 %v190, %v3082
        %3084 = vmatmul.f32.gmra.mxu0 %v3083
        %v3085 = vpop.f32.mrf.mxu0
        %v3086 = vadd.f32 %v2969, %v3085
        %v3087 = vand.u32 %v192, 4294901760
        %v3088 = vsub.f32 %v192, %v3087
        %3089 = vmatmul.f32.gmra.mxu0 %v3088
        %v3090 = vpop.f32.mrf.mxu0
        %v3091 = vadd.f32 %v2973, %v3090
        %v3092 = vand.u32 %v194, 4294901760
        %v3093 = vsub.f32 %v194, %v3092
        %3094 = vmatmul.f32.gmra.mxu0 %v3093
        %v3095 = vpop.f32.mrf.mxu0
        %v3096 = vadd.f32 %v2977, %v3095
        %v3097 = vand.u32 %v196, 4294901760
        %v3098 = vsub.f32 %v196, %v3097
        %3099 = vmatmul.f32.gmra.mxu0 %v3098
        %v3100 = vpop.f32.mrf.mxu0
        %v3101 = vadd.f32 %v2981, %v3100
        %v3102 = vand.u32 %v198, 4294901760
        %v3103 = vsub.f32 %v198, %v3102
        %3104 = vmatmul.f32.gmra.mxu0 %v3103
        %v3105 = vpop.f32.mrf.mxu0
        %v3106 = vadd.f32 %v2985, %v3105
        %v3107 = vand.u32 %v200, 4294901760
        %v3108 = vsub.f32 %v200, %v3107
        %3109 = vmatmul.f32.gmra.mxu0 %v3108
        %v3110 = vpop.f32.mrf.mxu0
        %v3111 = vadd.f32 %v2989, %v3110
        %v3112 = vand.u32 %v202, 4294901760
        %v3113 = vsub.f32 %v202, %v3112
        %3114 = vmatmul.f32.gmra.mxu0 %v3113
        %v3115 = vpop.f32.mrf.mxu0
        %v3116 = vadd.f32 %v2993, %v3115
        %v3117 = vand.u32 %v204, 4294901760
        %v3118 = vsub.f32 %v204, %v3117
        %3119 = vmatmul.f32.gmra.mxu0 %v3118
        %v3120 = vpop.f32.mrf.mxu0
        %v3121 = vadd.f32 %v2997, %v3120
        %v3122 = vand.u32 %v206, 4294901760
        %v3123 = vsub.f32 %v206, %v3122
        %3124 = vmatmul.f32.gmra.mxu0 %v3123
        %v3125 = vpop.f32.mrf.mxu0
        %v3126 = vadd.f32 %v3001, %v3125
        %v3127 = vand.u32 %v208, 4294901760
        %v3128 = vsub.f32 %v208, %v3127
        %3129 = vmatmul.f32.gmra.mxu0 %v3128
        %v3130 = vpop.f32.mrf.mxu0
        %v3131 = vadd.f32 %v3005, %v3130
        %v3132 = vand.u32 %v210, 4294901760
        %v3133 = vsub.f32 %v210, %v3132
        %3134 = vmatmul.f32.gmra.mxu0 %v3133
        %v3135 = vpop.f32.mrf.mxu0
        %v3136 = vadd.f32 %v3009, %v3135
        %v3137 = vand.u32 %v212, 4294901760
        %v3138 = vsub.f32 %v212, %v3137
        %3139 = vmatmul.f32.gmra.mxu0 %v3138
        %v3140 = vpop.f32.mrf.mxu0
        %v3141 = vadd.f32 %v3013, %v3140
        %v3142 = vand.u32 %v214, 4294901760
        %v3143 = vsub.f32 %v214, %v3142
        %3144 = vmatmul.f32.gmra.mxu0 %v3143
        %v3145 = vpop.f32.mrf.mxu0
        %v3146 = vadd.f32 %v3017, %v3145
        %3147 = vdwg.mxu0
        %v3148 = vand.u32 %v278, 4294901760
        %3149 = vmatpush.msra.mxu0 %v3148
        %v3150 = vand.u32 %v276, 4294901760
        %3151 = vmatpush.msra.mxu0 %v3150
        %v3152 = vand.u32 %v274, 4294901760
        %3153 = vmatpush.msra.mxu0 %v3152
        %v3154 = vand.u32 %v272, 4294901760
        %3155 = vmatpush.msra.mxu0 %v3154
        %v3156 = vand.u32 %v270, 4294901760
        %3157 = vmatpush.msra.mxu0 %v3156
        %v3158 = vand.u32 %v268, 4294901760
        %3159 = vmatpush.msra.mxu0 %v3158
        %v3160 = vand.u32 %v266, 4294901760
        %3161 = vmatpush.msra.mxu0 %v3160
        %v3162 = vand.u32 %v264, 4294901760
        %3163 = vmatpush.msra.mxu0 %v3162
        %v3164 = vand.u32 %v262, 4294901760
        %3165 = vmatpush.msra.mxu0 %v3164
        %v3166 = vand.u32 %v260, 4294901760
        %3167 = vmatpush.msra.mxu0 %v3166
        %v3168 = vand.u32 %v258, 4294901760
        %3169 = vmatpush.msra.mxu0 %v3168
        %v3170 = vand.u32 %v256, 4294901760
        %3171 = vmatpush.msra.mxu0 %v3170
        %v3172 = vand.u32 %v254, 4294901760
        %3173 = vmatpush.msra.mxu0 %v3172
        %v3174 = vand.u32 %v252, 4294901760
        %3175 = vmatpush.msra.mxu0 %v3174
        %v3176 = vand.u32 %v250, 4294901760
        %3177 = vmatpush.msra.mxu0 %v3176
        %v3178 = vand.u32 %v248, 4294901760
        %3179 = vmatpush.msra.mxu0 %v3178
        %v3180 = vand.u32 %v184, 4294901760
        %v3181 = vsub.f32 %v184, %v3180
        %v3182 = vand.u32 %v3181, 4294901760
        %3183 = vmatmul.f32.gmra.mxu0 %v3182
        %v3184 = vpop.f32.mrf.mxu0
        %v3185 = vadd.f32 %v3071, %v3184
        %v3186 = vand.u32 %v186, 4294901760
        %v3187 = vsub.f32 %v186, %v3186
        %v3188 = vand.u32 %v3187, 4294901760
        %3189 = vmatmul.f32.gmra.mxu0 %v3188
        %v3190 = vpop.f32.mrf.mxu0
        %v3191 = vadd.f32 %v3076, %v3190
        %v3192 = vand.u32 %v188, 4294901760
        %v3193 = vsub.f32 %v188, %v3192
        %v3194 = vand.u32 %v3193, 4294901760
        %3195 = vmatmul.f32.gmra.mxu0 %v3194
        %v3196 = vpop.f32.mrf.mxu0
        %v3197 = vadd.f32 %v3081, %v3196
        %v3198 = vand.u32 %v190, 4294901760
        %v3199 = vsub.f32 %v190, %v3198
        %v3200 = vand.u32 %v3199, 4294901760
        %3201 = vmatmul.f32.gmra.mxu0 %v3200
        %v3202 = vpop.f32.mrf.mxu0
        %v3203 = vadd.f32 %v3086, %v3202
        %v3204 = vand.u32 %v192, 4294901760
        %v3205 = vsub.f32 %v192, %v3204
        %v3206 = vand.u32 %v3205, 4294901760
        %3207 = vmatmul.f32.gmra.mxu0 %v3206
        %v3208 = vpop.f32.mrf.mxu0
        %v3209 = vadd.f32 %v3091, %v3208
        %v3210 = vand.u32 %v194, 4294901760
        %v3211 = vsub.f32 %v194, %v3210
        %v3212 = vand.u32 %v3211, 4294901760
        %3213 = vmatmul.f32.gmra.mxu0 %v3212
        %v3214 = vpop.f32.mrf.mxu0
        %v3215 = vadd.f32 %v3096, %v3214
        %v3216 = vand.u32 %v196, 4294901760
        %v3217 = vsub.f32 %v196, %v3216
        %v3218 = vand.u32 %v3217, 4294901760
        %3219 = vmatmul.f32.gmra.mxu0 %v3218
        %v3220 = vpop.f32.mrf.mxu0
        %v3221 = vadd.f32 %v3101, %v3220
        %v3222 = vand.u32 %v198, 4294901760
        %v3223 = vsub.f32 %v198, %v3222
        %v3224 = vand.u32 %v3223, 4294901760
        %3225 = vmatmul.f32.gmra.mxu0 %v3224
        %v3226 = vpop.f32.mrf.mxu0
        %v3227 = vadd.f32 %v3106, %v3226
        %v3228 = vand.u32 %v200, 4294901760
        %v3229 = vsub.f32 %v200, %v3228
        %v3230 = vand.u32 %v3229, 4294901760
        %3231 = vmatmul.f32.gmra.mxu0 %v3230
        %v3232 = vpop.f32.mrf.mxu0
        %v3233 = vadd.f32 %v3111, %v3232
        %v3234 = vand.u32 %v202, 4294901760
        %v3235 = vsub.f32 %v202, %v3234
        %v3236 = vand.u32 %v3235, 4294901760
        %3237 = vmatmul.f32.gmra.mxu0 %v3236
        %v3238 = vpop.f32.mrf.mxu0
        %v3239 = vadd.f32 %v3116, %v3238
        %v3240 = vand.u32 %v204, 4294901760
        %v3241 = vsub.f32 %v204, %v3240
        %v3242 = vand.u32 %v3241, 4294901760
        %3243 = vmatmul.f32.gmra.mxu0 %v3242
        %v3244 = vpop.f32.mrf.mxu0
        %v3245 = vadd.f32 %v3121, %v3244
        %v3246 = vand.u32 %v206, 4294901760
        %v3247 = vsub.f32 %v206, %v3246
        %v3248 = vand.u32 %v3247, 4294901760
        %3249 = vmatmul.f32.gmra.mxu0 %v3248
        %v3250 = vpop.f32.mrf.mxu0
        %v3251 = vadd.f32 %v3126, %v3250
        %v3252 = vand.u32 %v208, 4294901760
        %v3253 = vsub.f32 %v208, %v3252
        %v3254 = vand.u32 %v3253, 4294901760
        %3255 = vmatmul.f32.gmra.mxu0 %v3254
        %v3256 = vpop.f32.mrf.mxu0
        %v3257 = vadd.f32 %v3131, %v3256
        %v3258 = vand.u32 %v210, 4294901760
        %v3259 = vsub.f32 %v210, %v3258
        %v3260 = vand.u32 %v3259, 4294901760
        %3261 = vmatmul.f32.gmra.mxu0 %v3260
        %v3262 = vpop.f32.mrf.mxu0
        %v3263 = vadd.f32 %v3136, %v3262
        %v3264 = vand.u32 %v212, 4294901760
        %v3265 = vsub.f32 %v212, %v3264
        %v3266 = vand.u32 %v3265, 4294901760
        %3267 = vmatmul.f32.gmra.mxu0 %v3266
        %v3268 = vpop.f32.mrf.mxu0
        %v3269 = vadd.f32 %v3141, %v3268
        %v3270 = vand.u32 %v214, 4294901760
        %v3271 = vsub.f32 %v214, %v3270
        %v3272 = vand.u32 %v3271, 4294901760
        %3273 = vmatmul.f32.gmra.mxu0 %v3272
        %v3274 = vpop.f32.mrf.mxu0
        %v3275 = vadd.f32 %v3146, %v3274
        %3276 = vdwg.mxu0
        %v3277 = vand.u32 %v278, 4294901760
        %v3278 = vsub.f32 %v278, %v3277
        %v3279 = vand.u32 %v3278, 4294901760
        %3280 = vmatpush.msra.mxu0 %v3279
        %v3281 = vand.u32 %v276, 4294901760
        %v3282 = vsub.f32 %v276, %v3281
        %v3283 = vand.u32 %v3282, 4294901760
        %3284 = vmatpush.msra.mxu0 %v3283
        %v3285 = vand.u32 %v274, 4294901760
        %v3286 = vsub.f32 %v274, %v3285
        %v3287 = vand.u32 %v3286, 4294901760
        %3288 = vmatpush.msra.mxu0 %v3287
        %v3289 = vand.u32 %v272, 4294901760
        %v3290 = vsub.f32 %v272, %v3289
        %v3291 = vand.u32 %v3290, 4294901760
        %3292 = vmatpush.msra.mxu0 %v3291
        %v3293 = vand.u32 %v270, 4294901760
        %v3294 = vsub.f32 %v270, %v3293
        %v3295 = vand.u32 %v3294, 4294901760
        %3296 = vmatpush.msra.mxu0 %v3295
        %v3297 = vand.u32 %v268, 4294901760
        %v3298 = vsub.f32 %v268, %v3297
        %v3299 = vand.u32 %v3298, 4294901760
        %3300 = vmatpush.msra.mxu0 %v3299
        %v3301 = vand.u32 %v266, 4294901760
        %v3302 = vsub.f32 %v266, %v3301
        %v3303 = vand.u32 %v3302, 4294901760
        %3304 = vmatpush.msra.mxu0 %v3303
        %v3305 = vand.u32 %v264, 4294901760
        %v3306 = vsub.f32 %v264, %v3305
        %v3307 = vand.u32 %v3306, 4294901760
        %3308 = vmatpush.msra.mxu0 %v3307
        %v3309 = vand.u32 %v262, 4294901760
        %v3310 = vsub.f32 %v262, %v3309
        %v3311 = vand.u32 %v3310, 4294901760
        %3312 = vmatpush.msra.mxu0 %v3311
        %v3313 = vand.u32 %v260, 4294901760
        %v3314 = vsub.f32 %v260, %v3313
        %v3315 = vand.u32 %v3314, 4294901760
        %3316 = vmatpush.msra.mxu0 %v3315
        %v3317 = vand.u32 %v258, 4294901760
        %v3318 = vsub.f32 %v258, %v3317
        %v3319 = vand.u32 %v3318, 4294901760
        %3320 = vmatpush.msra.mxu0 %v3319
        %v3321 = vand.u32 %v256, 4294901760
        %v3322 = vsub.f32 %v256, %v3321
        %v3323 = vand.u32 %v3322, 4294901760
        %3324 = vmatpush.msra.mxu0 %v3323
        %v3325 = vand.u32 %v254, 4294901760
        %v3326 = vsub.f32 %v254, %v3325
        %v3327 = vand.u32 %v3326, 4294901760
        %3328 = vmatpush.msra.mxu0 %v3327
        %v3329 = vand.u32 %v252, 4294901760
        %v3330 = vsub.f32 %v252, %v3329
        %v3331 = vand.u32 %v3330, 4294901760
        %3332 = vmatpush.msra.mxu0 %v3331
        %v3333 = vand.u32 %v250, 4294901760
        %v3334 = vsub.f32 %v250, %v3333
        %v3335 = vand.u32 %v3334, 4294901760
        %3336 = vmatpush.msra.mxu0 %v3335
        %v3337 = vand.u32 %v248, 4294901760
        %v3338 = vsub.f32 %v248, %v3337
        %v3339 = vand.u32 %v3338, 4294901760
        %3340 = vmatpush.msra.mxu0 %v3339
        %v3341 = vand.u32 %v184, 4294901760
        %3342 = vmatmul.f32.gmra.mxu0 %v3341
        %v3343 = vpop.f32.mrf.mxu0
        %v3344 = vadd.f32 %v3185, %v3343
        %v3345 = vand.u32 %v186, 4294901760
        %3346 = vmatmul.f32.gmra.mxu0 %v3345
        %v3347 = vpop.f32.mrf.mxu0
        %v3348 = vadd.f32 %v3191, %v3347
        %v3349 = vand.u32 %v188, 4294901760
        %3350 = vmatmul.f32.gmra.mxu0 %v3349
        %v3351 = vpop.f32.mrf.mxu0
        %v3352 = vadd.f32 %v3197, %v3351
        %v3353 = vand.u32 %v190, 4294901760
        %3354 = vmatmul.f32.gmra.mxu0 %v3353
        %v3355 = vpop.f32.mrf.mxu0
        %v3356 = vadd.f32 %v3203, %v3355
        %v3357 = vand.u32 %v192, 4294901760
        %3358 = vmatmul.f32.gmra.mxu0 %v3357
        %v3359 = vpop.f32.mrf.mxu0
        %v3360 = vadd.f32 %v3209, %v3359
        %v3361 = vand.u32 %v194, 4294901760
        %3362 = vmatmul.f32.gmra.mxu0 %v3361
        %v3363 = vpop.f32.mrf.mxu0
        %v3364 = vadd.f32 %v3215, %v3363
        %v3365 = vand.u32 %v196, 4294901760
        %3366 = vmatmul.f32.gmra.mxu0 %v3365
        %v3367 = vpop.f32.mrf.mxu0
        %v3368 = vadd.f32 %v3221, %v3367
        %v3369 = vand.u32 %v198, 4294901760
        %3370 = vmatmul.f32.gmra.mxu0 %v3369
        %v3371 = vpop.f32.mrf.mxu0
        %v3372 = vadd.f32 %v3227, %v3371
        %v3373 = vand.u32 %v200, 4294901760
        %3374 = vmatmul.f32.gmra.mxu0 %v3373
        %v3375 = vpop.f32.mrf.mxu0
        %v3376 = vadd.f32 %v3233, %v3375
        %v3377 = vand.u32 %v202, 4294901760
        %3378 = vmatmul.f32.gmra.mxu0 %v3377
        %v3379 = vpop.f32.mrf.mxu0
        %v3380 = vadd.f32 %v3239, %v3379
        %v3381 = vand.u32 %v204, 4294901760
        %3382 = vmatmul.f32.gmra.mxu0 %v3381
        %v3383 = vpop.f32.mrf.mxu0
        %v3384 = vadd.f32 %v3245, %v3383
        %v3385 = vand.u32 %v206, 4294901760
        %3386 = vmatmul.f32.gmra.mxu0 %v3385
        %v3387 = vpop.f32.mrf.mxu0
        %v3388 = vadd.f32 %v3251, %v3387
        %v3389 = vand.u32 %v208, 4294901760
        %3390 = vmatmul.f32.gmra.mxu0 %v3389
        %v3391 = vpop.f32.mrf.mxu0
        %v3392 = vadd.f32 %v3257, %v3391
        %v3393 = vand.u32 %v210, 4294901760
        %3394 = vmatmul.f32.gmra.mxu0 %v3393
        %v3395 = vpop.f32.mrf.mxu0
        %v3396 = vadd.f32 %v3263, %v3395
        %v3397 = vand.u32 %v212, 4294901760
        %3398 = vmatmul.f32.gmra.mxu0 %v3397
        %v3399 = vpop.f32.mrf.mxu0
        %v3400 = vadd.f32 %v3269, %v3399
        %v3401 = vand.u32 %v214, 4294901760
        %3402 = vmatmul.f32.gmra.mxu0 %v3401
        %v3403 = vpop.f32.mrf.mxu0
        %v3404 = vadd.f32 %v3275, %v3403
        %3405 = vdwg.mxu0
        %v3406 = vand.u32 %v278, 4294901760
        %3407 = vmatpush.msra.mxu0 %v3406
        %v3408 = vand.u32 %v276, 4294901760
        %3409 = vmatpush.msra.mxu0 %v3408
        %v3410 = vand.u32 %v274, 4294901760
        %3411 = vmatpush.msra.mxu0 %v3410
        %v3412 = vand.u32 %v272, 4294901760
        %3413 = vmatpush.msra.mxu0 %v3412
        %v3414 = vand.u32 %v270, 4294901760
        %3415 = vmatpush.msra.mxu0 %v3414
        %v3416 = vand.u32 %v268, 4294901760
        %3417 = vmatpush.msra.mxu0 %v3416
        %v3418 = vand.u32 %v266, 4294901760
        %3419 = vmatpush.msra.mxu0 %v3418
        %v3420 = vand.u32 %v264, 4294901760
        %3421 = vmatpush.msra.mxu0 %v3420
        %v3422 = vand.u32 %v262, 4294901760
        %3423 = vmatpush.msra.mxu0 %v3422
        %v3424 = vand.u32 %v260, 4294901760
        %3425 = vmatpush.msra.mxu0 %v3424
        %v3426 = vand.u32 %v258, 4294901760
        %3427 = vmatpush.msra.mxu0 %v3426
        %v3428 = vand.u32 %v256, 4294901760
        %3429 = vmatpush.msra.mxu0 %v3428
        %v3430 = vand.u32 %v254, 4294901760
        %3431 = vmatpush.msra.mxu0 %v3430
        %v3432 = vand.u32 %v252, 4294901760
        %3433 = vmatpush.msra.mxu0 %v3432
        %v3434 = vand.u32 %v250, 4294901760
        %3435 = vmatpush.msra.mxu0 %v3434
        %v3436 = vand.u32 %v248, 4294901760
        %3437 = vmatpush.msra.mxu0 %v3436
        %v3438 = vand.u32 %v184, 4294901760
        %3439 = vmatmul.f32.gmra.mxu0 %v3438
        %v3440 = vpop.f32.mrf.mxu0
        %v3441 = vadd.f32 %v3344, %v3440
        %v3442 = vand.u32 %v186, 4294901760
        %3443 = vmatmul.f32.gmra.mxu0 %v3442
        %v3444 = vpop.f32.mrf.mxu0
        %v3445 = vadd.f32 %v3348, %v3444
        %v3446 = vand.u32 %v188, 4294901760
        %3447 = vmatmul.f32.gmra.mxu0 %v3446
        %v3448 = vpop.f32.mrf.mxu0
        %v3449 = vadd.f32 %v3352, %v3448
        %v3450 = vand.u32 %v190, 4294901760
        %3451 = vmatmul.f32.gmra.mxu0 %v3450
        %v3452 = vpop.f32.mrf.mxu0
        %v3453 = vadd.f32 %v3356, %v3452
        %v3454 = vand.u32 %v192, 4294901760
        %3455 = vmatmul.f32.gmra.mxu0 %v3454
        %v3456 = vpop.f32.mrf.mxu0
        %v3457 = vadd.f32 %v3360, %v3456
        %v3458 = vand.u32 %v194, 4294901760
        %3459 = vmatmul.f32.gmra.mxu0 %v3458
        %v3460 = vpop.f32.mrf.mxu0
        %v3461 = vadd.f32 %v3364, %v3460
        %v3462 = vand.u32 %v196, 4294901760
        %3463 = vmatmul.f32.gmra.mxu0 %v3462
        %v3464 = vpop.f32.mrf.mxu0
        %v3465 = vadd.f32 %v3368, %v3464
        %v3466 = vand.u32 %v198, 4294901760
        %3467 = vmatmul.f32.gmra.mxu0 %v3466
        %v3468 = vpop.f32.mrf.mxu0
        %v3469 = vadd.f32 %v3372, %v3468
        %v3470 = vand.u32 %v200, 4294901760
        %3471 = vmatmul.f32.gmra.mxu0 %v3470
        %v3472 = vpop.f32.mrf.mxu0
        %v3473 = vadd.f32 %v3376, %v3472
        %v3474 = vand.u32 %v202, 4294901760
        %3475 = vmatmul.f32.gmra.mxu0 %v3474
        %v3476 = vpop.f32.mrf.mxu0
        %v3477 = vadd.f32 %v3380, %v3476
        %v3478 = vand.u32 %v204, 4294901760
        %3479 = vmatmul.f32.gmra.mxu0 %v3478
        %v3480 = vpop.f32.mrf.mxu0
        %v3481 = vadd.f32 %v3384, %v3480
        %v3482 = vand.u32 %v206, 4294901760
        %3483 = vmatmul.f32.gmra.mxu0 %v3482
        %v3484 = vpop.f32.mrf.mxu0
        %v3485 = vadd.f32 %v3388, %v3484
        %v3486 = vand.u32 %v208, 4294901760
        %3487 = vmatmul.f32.gmra.mxu0 %v3486
        %v3488 = vpop.f32.mrf.mxu0
        %v3489 = vadd.f32 %v3392, %v3488
        %v3490 = vand.u32 %v210, 4294901760
        %3491 = vmatmul.f32.gmra.mxu0 %v3490
        %v3492 = vpop.f32.mrf.mxu0
        %v3493 = vadd.f32 %v3396, %v3492
        %v3494 = vand.u32 %v212, 4294901760
        %3495 = vmatmul.f32.gmra.mxu0 %v3494
        %v3496 = vpop.f32.mrf.mxu0
        %v3497 = vadd.f32 %v3400, %v3496
        %v3498 = vand.u32 %v214, 4294901760
        %3499 = vmatmul.f32.gmra.mxu0 %v3498
        %v3500 = vpop.f32.mrf.mxu0
        %v3501 = vadd.f32 %v3404, %v3500
        %3502 = vdwg.mxu0
        %v3503 = vcvt.f32.s32.to.zero.pseudo %v1829
        %v3504 = vcvt.f32.s32.to.zero.pseudo %v3441
        %v3505 = vcvt.f32.s32.to.zero.pseudo %v1833
        %v3506 = vcvt.f32.s32.to.zero.pseudo %v3445
        %v3507 = vcvt.f32.s32.to.zero.pseudo %v1837
        %v3508 = vcvt.f32.s32.to.zero.pseudo %v3449
        %v3509 = vcvt.f32.s32.to.zero.pseudo %v1841
        %v3510 = vcvt.f32.s32.to.zero.pseudo %v3453
        %v3511 = vcvt.f32.s32.to.zero.pseudo %v1845
        %v3512 = vcvt.f32.s32.to.zero.pseudo %v3457
        %v3513 = vcvt.f32.s32.to.zero.pseudo %v1849
        %v3514 = vcvt.f32.s32.to.zero.pseudo %v3461
        %v3515 = vcvt.f32.s32.to.zero.pseudo %v1853
        %v3516 = vcvt.f32.s32.to.zero.pseudo %v3465
        %v3517 = vcvt.f32.s32.to.zero.pseudo %v1857
        %v3518 = vcvt.f32.s32.to.zero.pseudo %v3469
        %v3519 = vcvt.f32.s32.to.zero.pseudo %v1861
        %v3520 = vcvt.f32.s32.to.zero.pseudo %v3473
        %v3521 = vcvt.f32.s32.to.zero.pseudo %v1865
        %v3522 = vcvt.f32.s32.to.zero.pseudo %v3477
        %v3523 = vcvt.f32.s32.to.zero.pseudo %v1869
        %v3524 = vcvt.f32.s32.to.zero.pseudo %v3481
        %v3525 = vcvt.f32.s32.to.zero.pseudo %v1873
        %v3526 = vcvt.f32.s32.to.zero.pseudo %v3485
        %v3527 = vcvt.f32.s32.to.zero.pseudo %v1877
        %v3528 = vcvt.f32.s32.to.zero.pseudo %v3489
        %v3529 = vcvt.f32.s32.to.zero.pseudo %v1881
        %v3530 = vcvt.f32.s32.to.zero.pseudo %v3493
        %v3531 = vcvt.f32.s32.to.zero.pseudo %v1885
        %v3532 = vcvt.f32.s32.to.zero.pseudo %v3497
        %v3533 = vcvt.f32.s32.to.zero.pseudo %v1889
        %v3534 = vcvt.f32.s32.to.zero.pseudo %v3501
        %v3535 = vadd.s32 %v3503, %v3507
        %v3536 = vadd.s32 %v3505, %v3509
        %v3537 = vadd.s32 %v3535, %v3511
        %v3538 = vadd.s32 %v3536, %v3513
        %v3539 = vadd.s32 %v3537, %v3515
        %v3540 = vadd.s32 %v3538, %v3517
        %v3541 = vadd.s32 %v3539, %v3519
        %v3542 = vadd.s32 %v3540, %v3521
        %v3543 = vadd.s32 %v3541, %v3523
        %v3544 = vadd.s32 %v3542, %v3525
        %v3545 = vadd.s32 %v3543, %v3527
        %v3546 = vadd.s32 %v3544, %v3529
        %v3547 = vadd.s32 %v3545, %v3531
        %v3548 = vadd.s32 %v3546, %v3533
        %v3549 = vadd.s32 %v3547, %v3548
        %v3550 = vrot.slane %v3549, 4
        %v3551 = vadd.s32 %v3549, %v3550
        %v3552 = vrot.slane %v3551, 2
        %v3553 = vadd.s32 %v3551, %v3552
        %v3554 = vrot.slane %v3553, 1
        %v3555 = vadd.s32 %v3553, %v3554
        %v3556 = vadd.s32 %v3504, %v3508
        %v3557 = vadd.s32 %v3506, %v3510
        %v3558 = vadd.s32 %v3556, %v3512
        %v3559 = vadd.s32 %v3557, %v3514
        %v3560 = vadd.s32 %v3558, %v3516
        %v3561 = vadd.s32 %v3559, %v3518
        %v3562 = vadd.s32 %v3560, %v3520
        %v3563 = vadd.s32 %v3561, %v3522
        %v3564 = vadd.s32 %v3562, %v3524
        %v3565 = vadd.s32 %v3563, %v3526
        %v3566 = vadd.s32 %v3564, %v3528
        %v3567 = vadd.s32 %v3565, %v3530
        %v3568 = vadd.s32 %v3566, %v3532
        %v3569 = vadd.s32 %v3567, %v3534
        %v3570 = vadd.s32 %v3568, %v3569
        %v3571 = vrot.slane %v3570, 4
        %v3572 = vadd.s32 %v3570, %v3571
        %v3573 = vrot.slane %v3572, 2
        %v3574 = vadd.s32 %v3572, %v3573
        %v3575 = vrot.slane %v3574, 1
        %v3576 = vadd.s32 %v3574, %v3575
        %v3577 = vadd.s32 %v3555, %v3576
        %v3578 = vand.u32 %v3577, 65535
        %v3579 = vshrl.u32 %v3577, 16
        %v3580 = vcvt.s32.f32 %v3578
        %v3581 = vcvt.s32.f32 %v3579
        %3582 = vadd.xlane.f32.xlu0 %v3580
        %v3583 = vpop.xlane.xlu0 %3582
        %3584 = vadd.xlane.f32.xlu0 %v3581
        %v3585 = vpop.xlane.xlu0 %3584
        %v3586 = vcvt.f32.s32 %v3583
        %v3587 = vcvt.f32.s32 %v3585
        %v3588 = vshll.u32 %v3587, 16
        %v3589 = vadd.s32 %v3588, %v3586
        %s3590 = vtos %v3589
        %v3591 = vstv %s3590
        %3592 = vst [vmem:[%s181] sm:$0xff] %v3591
        %s3593 = sand.u32 %s75, 1
        %s3594 = scalar_lea.sflag [#allocation4], %s3593
        %s3595 = sand.u32 %s75, 1
        %s3596 = smul.addr %s3595, 8
        %s3597 = scalar_lea.vmem [#allocation7], %s3596
        // Predicated region
        $region37: #{tpu_custom_call.1} parent=27 // pred_check
          %p3598 = pneg %p85
        $region38: #{tpu_custom_call.1} parent=27 // pred_check_branch
          %3600 = sbr.rel (%p3598) target = $region40
        $region39: #{tpu_custom_call.1} parent=27 // pred_region
          %3602 = vsyncadd %s3594, 0
          %s3603 = smul.addr %s20, 8
          %s3604 = scalar_lea.hbm %s2, %s3603
          %s3606 = sshll.u32 %s3597, 4
          %s3607 = int_to_ptr.vmem [resolvable:$true] %s3606
          %s3608 = sshll.u32 %s3604, 4
          %s3609 = int_to_ptr.hbm [resolvable:$true] %s3608
          %3611 = dma.vmem_to_hbm [thread:$0]  %s3607, 128, %s3609, %s3594
        $region40: #{tpu_custom_call.1} parent=27 // pred_fallthru
          _
      $region28: #{tpu_custom_call.1} parent=5 // pred_fallthru
        _
      %p3612 = scmp.le.s32.totalorder 2, %s15
      // Predicated region
      $region41: #{tpu_custom_call.1} parent=5 // pred_check
        %p3613 = pneg %p3612
      $region42: #{tpu_custom_call.1} parent=5 // pred_check_branch
        %3615 = sbr.rel (%p3613) target = $region44
      $region43: #{tpu_custom_call.1} parent=5 // pred_region
        %s3616 = ssub.s32 %s15, 2
        // Predicated region
        $region45: #{tpu_custom_call.1} parent=43 // pred_check
          %p3617 = pneg %p91
        $region46: #{tpu_custom_call.1} parent=43 // pred_check_branch
          %3619 = sbr.rel (%p3617) target = $region48
        $region47: #{tpu_custom_call.1} parent=43 // pred_region
          %s3620 = sand.u32 %s76, 1
          %s3621 = scalar_lea.sflag [#allocation4], %s3620
          %s3622 = sand.u32 %s76, 1
          %s3623 = smul.addr %s3622, 8
          %s3624 = scalar_lea.vmem [#allocation7], %s3623
          %3626 = dma.done %s3621, 128
        $region48: #{tpu_custom_call.1} parent=43 // pred_fallthru
          _
      $region44: #{tpu_custom_call.1} parent=5 // pred_fallthru
        _
    $region6: #{tpu_custom_call.1} parent=1 // loop_footer
      %s19 = sadd.s32 1, %s15
    $region7: #{tpu_custom_call.1} parent=1 // loop_footer_branch
      %14 = sbr.rel target = $region3
    $region8: #{tpu_custom_call.1} parent=1 // loop_exit
      _
    %3627 = vsyncpa [#allocation3], 1
    %s3628 = scalar_lea.sflag [#allocation3], 1
    %3629 = vsyncpa %s3628, 1
    %3630 = vsyncpa [#allocation6], 1
    %3631 = vsyncpa [#allocation4], 1
    %s3632 = scalar_lea.sflag [#allocation4], 1
    %3633 = vsyncpa %s3632, 1

</llo_original>
